<compile_context>
chip_gen: v7x
topology: tpu7x:2x2x1
jax: 0.10.0
libtpu: 0.0.40
codegen_flags: <defaults>
</compile_context>

<pallas_src>
import jax
import jax.numpy as jnp
import numpy as np
from jax import lax
from jax.experimental import pallas as pl
from jax.experimental.pallas import tpu as pltpu

EPS = 1e-5
LANE = 128


def _round_up(x, m):
    return (x + m - 1) // m * m


def bottleneck_kernel(x_up_ref, x_cur_ref, x_dn_ref,
                      w1_ref, s1_ref, b1_ref,
                      w2_ref, s2_ref, b2_ref,
                      w3_ref, s3_ref, b3_ref,
                      o_ref):
    TH = x_cur_ref.shape[1]
    W = x_cur_ref.shape[2]
    Cin = x_cur_ref.shape[3]
    Cw = w1_ref.shape[1]
    Cout = o_ref.shape[3]
    THp = TH + 2
    cdt = w1_ref.dtype                       # MXU operand dtype (bf16 or f32)

    i = pl.program_id(1)
    last = pl.num_programs(1) - 1

    # ---- haloed input stripe (TH+2 rows), kept in the stored dtype ---------
    xh = jnp.concatenate([x_up_ref[0], x_cur_ref[0], x_dn_ref[0]], axis=0)
    xm = xh.reshape(THp * W, Cin).astype(cdt)

    # ---- conv1 (1x1) + bn1 + relu on all TH+2 rows (halo rows recomputed) ---
    h1 = jnp.dot(xm, w1_ref[...], preferred_element_type=jnp.float32)
    h1 = jnp.maximum(h1 * s1_ref[...] + b1_ref[...], 0.0)    # (THp*W, Cw) f32

    # Zero the halo rows that fall outside the image: conv2's zero padding
    # applies to h1 (its input), not to x.
    ridx = lax.broadcasted_iota(jnp.int32, (THp * W, 1), 0)
    inside = jnp.logical_and(jnp.logical_or(i > 0, ridx >= W),
                             jnp.logical_or(i < last, ridx < (THp - 1) * W))
    h1 = jnp.where(inside, h1, 0.0)

    # ---- conv2 (3x3), K-stacked: dx = -1/0/+1 taps concatenated on lanes ----
    # Shifts built from 8-aligned slices + a single zero row; image borders are
    # masked per column index.
    col = ridx % W
    zrow = jnp.zeros((1, Cw), jnp.float32)
    left = jnp.where(col > 0,
                     jnp.concatenate([zrow, h1[:THp * W - 1]], axis=0), 0.0)
    right = jnp.where(col < W - 1,
                      jnp.concatenate([h1[1:], zrow], axis=0), 0.0)
    stack = jnp.concatenate([left, h1, right], axis=-1).astype(cdt)

    acc = jnp.dot(stack[:TH * W], w2_ref[0], preferred_element_type=jnp.float32)
    for dy in (1, 2):                          # 3 matmuls, each with K = 3*Cw
        acc = acc + jnp.dot(stack[dy * W:(dy + TH) * W], w2_ref[dy],
                            preferred_element_type=jnp.float32)
    h2 = jnp.maximum(acc * s2_ref[...] + b2_ref[...], 0.0)

    # ---- conv3 (1x1) + bn3 --------------------------------------------------
    h3 = jnp.dot(h2.astype(cdt), w3_ref[...], preferred_element_type=jnp.float32)
    h3 = h3 * s3_ref[...] + b3_ref[...]

    # ---- residual add (f32) + relu ------------------------------------------
    res = x_cur_ref[0].reshape(TH * W, Cout).astype(jnp.float32)
    out = jnp.maximum(h3 + res, 0.0)
    o_ref[0] = out.reshape(TH, W, Cout).astype(o_ref.dtype)


def bottleneck_pallas(x_nhwc, params, *, compute_dtype=jnp.bfloat16,
                      row_tile=None, vmem_limit_bytes=48 * 1024 * 1024):
    """Bottleneck forward on NHWC input. Returns NHWC output (input dtype)."""
    N, H, W, Cin = x_nhwc.shape
    w1, w2, w3 = params["w1"], params["w2"], params["w3"]
    width = w1.shape[1]
    Cout = w3.shape[1]
    assert Cin == Cout, "residual path requires inplanes == planes * expansion"
    # TODO(synk): stride!=1 / dilation!=1 / groups!=1 / downsample branch are
    # not implemented (this HRNet Bottleneck configuration uses none of them).

    # ---- pick a row tile that divides H -------------------------------------
    if row_tile is None:
        row_tile = next((t for t in (32, 16, 8) if H % t == 0), H)
    TH = row_tile
    assert H % TH == 0, "row_tile must divide H"
    n_row = H // TH

    # ---- pad all channel dims to multiples of 128 (lane-dense) --------------
    Cin_p = _round_up(Cin, LANE)
    Cw_p = _round_up(width, LANE)
    Cout_p = _round_up(Cout, LANE)

    def pad_to(a, axis, target):
        pad = [(0, 0)] * a.ndim
        pad[axis] = (0, target - a.shape[axis])
        return jnp.pad(a, pad)

    xp = pad_to(x_nhwc, 3, Cin_p)

    w1p = pad_to(pad_to(w1, 0, Cin_p), 1, Cw_p).astype(compute_dtype)
    w2p = pad_to(pad_to(w2, 2, Cw_p), 3, Cw_p)              # (3, 3, Cw_p, Cw_p)
    w2p = w2p.reshape(3, 3 * Cw_p, Cw_p).astype(compute_dtype)   # K-stacked
    w3p = pad_to(pad_to(w3, 0, Cw_p), 1, Cout_p).astype(compute_dtype)

    f32 = jnp.float32
    s1 = pad_to(params["s1"].astype(f32), 1, Cw_p)
    b1 = pad_to(params["b1"].astype(f32), 1, Cw_p)
    s2 = pad_to(params["s2"].astype(f32), 1, Cw_p)
    b2 = pad_to(params["b2"].astype(f32), 1, Cw_p)
    s3 = pad_to(params["s3"].astype(f32), 1, Cout_p)
    b3 = pad_to(params["b3"].astype(f32), 1, Cout_p)

    def const_spec(shape):
        return pl.BlockSpec(shape, lambda n, i, _nd=len(shape): (0,) * _nd)

    in_specs = [
        # one-row top halo (row index clamped at the image border)
        pl.BlockSpec((1, 1, W, Cin_p),
                     lambda n, i: (n, jnp.maximum(i * TH - 1, 0), 0, 0)),
        # current TH-row stripe
        pl.BlockSpec((1, TH, W, Cin_p), lambda n, i: (n, i, 0, 0)),
        # one-row bottom halo (clamped)
        pl.BlockSpec((1, 1, W, Cin_p),
                     lambda n, i: (n, jnp.minimum(i * TH + TH, H - 1), 0, 0)),
        const_spec((Cin_p, Cw_p)),
        const_spec((1, Cw_p)), const_spec((1, Cw_p)),
        const_spec((3, 3 * Cw_p, Cw_p)),
        const_spec((1, Cw_p)), const_spec((1, Cw_p)),
        const_spec((Cw_p, Cout_p)),
        const_spec((1, Cout_p)), const_spec((1, Cout_p)),
    ]
    out_spec = pl.BlockSpec((1, TH, W, Cout_p), lambda n, i: (n, i, 0, 0))

    out = pl.pallas_call(
        bottleneck_kernel,
        out_shape=jax.ShapeDtypeStruct((N, H, W, Cout_p), x_nhwc.dtype),
        grid=(N, n_row),
        in_specs=in_specs,
        out_specs=out_spec,
        compiler_params=pltpu.CompilerParams(
            dimension_semantics=("parallel", "parallel"),
            vmem_limit_bytes=vmem_limit_bytes),
    )(xp, xp, xp, w1p, s1, b1, w2p, s2, b2, w3p, s3, b3)
    return out[..., :Cout]


# ---------------- pure-JAX reference (mirrors PyTorch NCHW convs) ------------
def ref_forward(x, w1, w2, w3, bn1, bn2, bn3):
    dn = ("NCHW", "OIHW", "NCHW")

    def bn(y, g, b, m, v):
        g, b, m, v = (t[None, :, None, None] for t in (g, b, m, v))
        return g * (y - m) / jnp.sqrt(v + EPS) + b

    out = lax.conv_general_dilated(x, w1, (1, 1), "VALID", dimension_numbers=dn)
    out = jnp.maximum(bn(out, *bn1), 0.0)
    out = lax.conv_general_dilated(out, w2, (1, 1), ((1, 1), (1, 1)),
                                   dimension_numbers=dn)
    out = jnp.maximum(bn(out, *bn2), 0.0)
    out = lax.conv_general_dilated(out, w3, (1, 1), "VALID", dimension_numbers=dn)
    out = bn(out, *bn3)
    return jnp.maximum(out + x, 0.0)


if __name__ == "__main__":
    key = jax.random.PRNGKey(0)
    N, planes, H, W = 2, 4, 16, 16
    inplanes = planes * 4          # residual path needs inplanes == 4*planes
    width = planes                 # base_width=64, groups=1
    Cout = planes * 4

    ks = jax.random.split(key, 8)
    w1_oihw = jax.random.normal(ks[0], (width, inplanes, 1, 1), jnp.float32) * 0.1
    w2_oihw = jax.random.normal(ks[1], (width, width, 3, 3), jnp.float32) * 0.1
    w3_oihw = jax.random.normal(ks[2], (Cout, width, 1, 1), jnp.float32) * 0.1

    def bn_params(k, c):
        k1, k2, k3, k4 = jax.random.split(k, 4)
        gamma = 1.0 + 0.1 * jax.random.normal(k1, (c,), jnp.float32)
        beta = 0.1 * jax.random.normal(k2, (c,), jnp.float32)
        mean = 0.1 * jax.random.normal(k3, (c,), jnp.float32)
        var = jax.random.uniform(k4, (c,), jnp.float32, minval=0.5, maxval=1.5)
        return gamma, beta, mean, var

    bn1 = bn_params(ks[3], width)
    bn2 = bn_params(ks[4], width)
    bn3 = bn_params(ks[5], Cout)

    x_nchw = jax.random.normal(ks[6], (N, inplanes, H, W), jnp.float32)

    # Fold inference-mode BatchNorm into per-channel scale/bias.
    def fold(g, b, m, v):
        s = g / jnp.sqrt(v + EPS)
        return s, b - m * s

    s1, b1 = fold(*bn1)
    s2, b2 = fold(*bn2)
    s3, b3 = fold(*bn3)

    params = dict(
        w1=jnp.transpose(w1_oihw[:, :, 0, 0]),              # (Cin, width)
        w2=jnp.transpose(w2_oihw, (2, 3, 1, 0)),             # (kh, kw, in, out)
        w3=jnp.transpose(w3_oihw[:, :, 0, 0]),               # (width, Cout)
        s1=s1.reshape(1, -1), b1=b1.reshape(1, -1),
        s2=s2.reshape(1, -1), b2=b2.reshape(1, -1),
        s3=s3.reshape(1, -1), b3=b3.reshape(1, -1),
    )

    x_nhwc = jnp.transpose(x_nchw, (0, 2, 3, 1))
    ref = np.asarray(ref_forward(x_nchw, w1_oihw, w2_oihw, w3_oihw,
                                 bn1, bn2, bn3))

    # f32 MXU path with explicit 8-row tiles (exercises the inter-tile halo).
    out_f32 = bottleneck_pallas(x_nhwc, params, compute_dtype=jnp.float32,
                                row_tile=8)
    jax.block_until_ready(out_f32)
    out_f32 = np.asarray(jnp.transpose(out_f32, (0, 3, 1, 2)))
    assert np.allclose(out_f32, ref, atol=1e-4, rtol=1e-4), \
        "f32 mismatch vs reference"

    # bf16 MXU path (f32 accumulation / BN / residual): relaxed tolerance.
    out_bf16 = bottleneck_pallas(x_nhwc, params, compute_dtype=jnp.bfloat16)
    jax.block_until_ready(out_bf16)
    out_bf16 = np.asarray(jnp.transpose(out_bf16, (0, 3, 1, 2)))
    assert np.allclose(out_bf16, ref, atol=5e-2, rtol=5e-2), \
        "bf16 mismatch vs reference"

    print("KERNEL_OK")
</pallas_src>

<mosaic_0001>
module attributes {stable_mosaic.version = 11 : i64} {
  func.func @bottleneck_kernel(%arg0: i32, %arg1: i32, %arg2: memref<1x1x16x128xf32, #tpu.memory_space<vmem>>, %arg3: memref<1x8x16x128xf32, #tpu.memory_space<vmem>>, %arg4: memref<1x1x16x128xf32, #tpu.memory_space<vmem>>, %arg5: memref<128x128xf32, #tpu.memory_space<vmem>>, %arg6: memref<1x128xf32, #tpu.memory_space<vmem>>, %arg7: memref<1x128xf32, #tpu.memory_space<vmem>>, %arg8: memref<3x384x128xf32, #tpu.memory_space<vmem>>, %arg9: memref<1x128xf32, #tpu.memory_space<vmem>>, %arg10: memref<1x128xf32, #tpu.memory_space<vmem>>, %arg11: memref<128x128xf32, #tpu.memory_space<vmem>>, %arg12: memref<1x128xf32, #tpu.memory_space<vmem>>, %arg13: memref<1x128xf32, #tpu.memory_space<vmem>>, %arg14: memref<1x8x16x128xf32, #tpu.memory_space<vmem>>) attributes {dimension_semantics = [#tpu.dimension_semantics<parallel>, #tpu.dimension_semantics<parallel>], iteration_bounds = array<i64: 2, 2>, scalar_prefetch = 0 : i64, scratch_operands = 0 : i64, tpu.core_type = #tpu.core_type<tc>, window_params = [{transform_indices = @transform_0, window_bounds = array<i64: 1, 1, 16, 128>}, {transform_indices = @transform_1, window_bounds = array<i64: 1, 8, 16, 128>}, {transform_indices = @transform_2, window_bounds = array<i64: 1, 1, 16, 128>}, {pipeline_mode = #tpu.pipeline_mode<synchronous>, transform_indices = @transform_3, window_bounds = array<i64: 128, 128>}, {pipeline_mode = #tpu.pipeline_mode<synchronous>, transform_indices = @transform_4, window_bounds = array<i64: 1, 128>}, {pipeline_mode = #tpu.pipeline_mode<synchronous>, transform_indices = @transform_5, window_bounds = array<i64: 1, 128>}, {pipeline_mode = #tpu.pipeline_mode<synchronous>, transform_indices = @transform_6, window_bounds = array<i64: 3, 384, 128>}, {pipeline_mode = #tpu.pipeline_mode<synchronous>, transform_indices = @transform_7, window_bounds = array<i64: 1, 128>}, {pipeline_mode = #tpu.pipeline_mode<synchronous>, transform_indices = @transform_8, window_bounds = array<i64: 1, 128>}, {pipeline_mode = #tpu.pipeline_mode<synchronous>, transform_indices = @transform_9, window_bounds = array<i64: 128, 128>}, {pipeline_mode = #tpu.pipeline_mode<synchronous>, transform_indices = @transform_10, window_bounds = array<i64: 1, 128>}, {pipeline_mode = #tpu.pipeline_mode<synchronous>, transform_indices = @transform_11, window_bounds = array<i64: 1, 128>}, {transform_indices = @transform_12, window_bounds = array<i64: 1, 8, 16, 128>}]} {
    %c0 = arith.constant 0 : index
    %c0_0 = arith.constant 0 : index
    %c0_1 = arith.constant 0 : index
    %c0_2 = arith.constant 0 : index
    %0 = vector.load %arg2[%c0, %c0_0, %c0_1, %c0_2] : memref<1x1x16x128xf32, #tpu.memory_space<vmem>>, vector<1x1x16x128xf32>
    %1 = vector.shape_cast %0 : vector<1x1x16x128xf32> to vector<1x16x128xf32>
    %c0_3 = arith.constant 0 : index
    %c0_4 = arith.constant 0 : index
    %c0_5 = arith.constant 0 : index
    %c0_6 = arith.constant 0 : index
    %2 = vector.load %arg3[%c0_3, %c0_4, %c0_5, %c0_6] : memref<1x8x16x128xf32, #tpu.memory_space<vmem>>, vector<1x8x16x128xf32>
    %3 = vector.shape_cast %2 : vector<1x8x16x128xf32> to vector<8x16x128xf32>
    %c0_7 = arith.constant 0 : index
    %c0_8 = arith.constant 0 : index
    %c0_9 = arith.constant 0 : index
    %c0_10 = arith.constant 0 : index
    %4 = vector.load %arg4[%c0_7, %c0_8, %c0_9, %c0_10] : memref<1x1x16x128xf32, #tpu.memory_space<vmem>>, vector<1x1x16x128xf32>
    %5 = vector.shape_cast %4 : vector<1x1x16x128xf32> to vector<1x16x128xf32>
    %6 = tpu.concatenate %1, %3, %5 in 0 : vector<1x16x128xf32>, vector<8x16x128xf32>, vector<1x16x128xf32> -> vector<10x16x128xf32>
    %7 = vector.shape_cast %6 : vector<10x16x128xf32> to vector<160x128xf32>
    %c0_11 = arith.constant 0 : index
    %c0_12 = arith.constant 0 : index
    %8 = vector.load %arg5[%c0_11, %c0_12] : memref<128x128xf32, #tpu.memory_space<vmem>>, vector<128x128xf32>
    %cst = arith.constant dense<0.000000e+00> : vector<160x128xf32>
    %9 = tpu.matmul %7, %8, %cst {dimension_numbers = #tpu.dot_dimension_numbers<[1], [0], [0], [1], [0, 0, 1, 1], [], []>} : vector<160x128xf32>, vector<128x128xf32>, vector<160x128xf32> -> vector<160x128xf32>
    %c0_13 = arith.constant 0 : index
    %c0_14 = arith.constant 0 : index
    %10 = vector.load %arg6[%c0_13, %c0_14] : memref<1x128xf32, #tpu.memory_space<vmem>>, vector<1x128xf32>
    %11 = vector.broadcast %10 : vector<1x128xf32> to vector<160x128xf32>
    %12 = arith.mulf %9, %11 : vector<160x128xf32>
    %c0_15 = arith.constant 0 : index
    %c0_16 = arith.constant 0 : index
    %13 = vector.load %arg7[%c0_15, %c0_16] : memref<1x128xf32, #tpu.memory_space<vmem>>, vector<1x128xf32>
    %14 = vector.broadcast %13 : vector<1x128xf32> to vector<160x128xf32>
    %15 = arith.addf %12, %14 : vector<160x128xf32>
    %cst_17 = arith.constant 0.000000e+00 : f32
    %16 = vector.broadcast %cst_17 : f32 to vector<160x128xf32>
    %17 = arith.maximumf %15, %16 : vector<160x128xf32>
    %18 = tpu.iota {dimensions = array<i32: 0>} : vector<160x1xi32>
    %c0_i32 = arith.constant 0 : i32
    %19 = arith.cmpi sgt, %arg1, %c0_i32 : i32
    %c16_i32 = arith.constant 16 : i32
    %20 = vector.broadcast %c16_i32 : i32 to vector<160x1xi32>
    %21 = arith.cmpi sge, %18, %20 : vector<160x1xi32>
    %22 = vector.broadcast %19 : i1 to vector<160x1xi1>
    %23 = arith.ori %22, %21 : vector<160x1xi1>
    %c1_i32 = arith.constant 1 : i32
    %24 = arith.cmpi slt, %arg1, %c1_i32 : i32
    %c144_i32 = arith.constant 144 : i32
    %25 = vector.broadcast %c144_i32 : i32 to vector<160x1xi32>
    %26 = arith.cmpi slt, %18, %25 : vector<160x1xi32>
    %27 = vector.broadcast %24 : i1 to vector<160x1xi1>
    %28 = arith.ori %27, %26 : vector<160x1xi1>
    %29 = arith.andi %23, %28 : vector<160x1xi1>
    %cst_18 = arith.constant 0.000000e+00 : f32
    %30 = vector.shape_cast %29 : vector<160x1xi1> to vector<160x1xi1>
    %31 = vector.broadcast %30 : vector<160x1xi1> to vector<160x128xi1>
    %32 = vector.broadcast %cst_18 : f32 to vector<160x128xf32>
    %33 = arith.select %31, %17, %32 : vector<160x128xi1>, vector<160x128xf32>
    %c16_i32_19 = arith.constant 16 : i32
    %c0_i32_20 = arith.constant 0 : i32
    %34 = arith.cmpi eq, %c16_i32_19, %c0_i32_20 : i32
    %c1_i32_21 = arith.constant 1 : i32
    %35 = arith.select %34, %c1_i32_21, %c16_i32_19 : i32
    %36 = vector.broadcast %35 : i32 to vector<160x1xi32>
    %37 = arith.remsi %18, %36 : vector<160x1xi32>
    %c0_i32_22 = arith.constant 0 : i32
    %38 = vector.broadcast %c0_i32_22 : i32 to vector<160x1xi32>
    %39 = arith.cmpi ne, %37, %38 : vector<160x1xi32>
    %c0_i32_23 = arith.constant 0 : i32
    %40 = vector.broadcast %c0_i32_23 : i32 to vector<160x1xi32>
    %41 = arith.cmpi slt, %37, %40 : vector<160x1xi32>
    %c0_i32_24 = arith.constant 0 : i32
    %42 = arith.cmpi slt, %35, %c0_i32_24 : i32
    %43 = vector.broadcast %42 : i1 to vector<160x1xi1>
    %44 = vector.broadcast %43 : vector<160x1xi1> to vector<160x1xi1>
    %45 = arith.xori %41, %44 : vector<160x1xi1>
    %46 = arith.andi %45, %39 : vector<160x1xi1>
    %47 = vector.broadcast %35 : i32 to vector<160x1xi32>
    %48 = arith.addi %37, %47 : vector<160x1xi32>
    %49 = arith.select %46, %48, %37 : vector<160x1xi1>, vector<160x1xi32>
    %cst_25 = arith.constant 0.000000e+00 : f32
    %50 = vector.broadcast %cst_25 : f32 to vector<1x128xf32>
    %c0_i32_26 = arith.constant 0 : i32
    %51 = vector.broadcast %c0_i32_26 : i32 to vector<160x1xi32>
    %52 = arith.cmpi sgt, %49, %51 : vector<160x1xi32>
    %53 = vector.extract_strided_slice %33 {offsets = [0, 0], sizes = [159, 128], strides = [1, 1]} : vector<160x128xf32> to vector<159x128xf32>
    %54 = tpu.concatenate %50, %53 in 0 : vector<1x128xf32>, vector<159x128xf32> -> vector<160x128xf32>
    %cst_27 = arith.constant 0.000000e+00 : f32
    %55 = vector.shape_cast %52 : vector<160x1xi1> to vector<160x1xi1>
    %56 = vector.broadcast %55 : vector<160x1xi1> to vector<160x128xi1>
    %57 = vector.broadcast %cst_27 : f32 to vector<160x128xf32>
    %58 = arith.select %56, %54, %57 : vector<160x128xi1>, vector<160x128xf32>
    %c15_i32 = arith.constant 15 : i32
    %59 = vector.broadcast %c15_i32 : i32 to vector<160x1xi32>
    %60 = arith.cmpi slt, %49, %59 : vector<160x1xi32>
    %61 = vector.extract_strided_slice %33 {offsets = [1, 0], sizes = [159, 128], strides = [1, 1]} : vector<160x128xf32> to vector<159x128xf32>
    %62 = tpu.concatenate %61, %50 in 0 : vector<159x128xf32>, vector<1x128xf32> -> vector<160x128xf32>
    %cst_28 = arith.constant 0.000000e+00 : f32
    %63 = vector.shape_cast %60 : vector<160x1xi1> to vector<160x1xi1>
    %64 = vector.broadcast %63 : vector<160x1xi1> to vector<160x128xi1>
    %65 = vector.broadcast %cst_28 : f32 to vector<160x128xf32>
    %66 = arith.select %64, %62, %65 : vector<160x128xi1>, vector<160x128xf32>
    %67 = tpu.concatenate %58, %33, %66 in 1 : vector<160x128xf32>, vector<160x128xf32>, vector<160x128xf32> -> vector<160x384xf32>
    %68 = vector.extract_strided_slice %67 {offsets = [0, 0], sizes = [128, 384], strides = [1, 1]} : vector<160x384xf32> to vector<128x384xf32>
    %c0_29 = arith.constant 0 : index
    %c0_30 = arith.constant 0 : index
    %c0_31 = arith.constant 0 : index
    %69 = vector.load %arg8[%c0_29, %c0_30, %c0_31] : memref<3x384x128xf32, #tpu.memory_space<vmem>>, vector<1x384x128xf32>
    %70 = vector.shape_cast %69 : vector<1x384x128xf32> to vector<384x128xf32>
    %cst_32 = arith.constant dense<0.000000e+00> : vector<128x128xf32>
    %71 = tpu.matmul %68, %70, %cst_32 {dimension_numbers = #tpu.dot_dimension_numbers<[1], [0], [0], [1], [0, 0, 1, 1], [], []>} : vector<128x384xf32>, vector<384x128xf32>, vector<128x128xf32> -> vector<128x128xf32>
    %72 = vector.extract_strided_slice %67 {offsets = [16, 0], sizes = [128, 384], strides = [1, 1]} : vector<160x384xf32> to vector<128x384xf32>
    %c1 = arith.constant 1 : index
    %c0_33 = arith.constant 0 : index
    %c0_34 = arith.constant 0 : index
    %73 = vector.load %arg8[%c1, %c0_33, %c0_34] : memref<3x384x128xf32, #tpu.memory_space<vmem>>, vector<1x384x128xf32>
    %74 = vector.shape_cast %73 : vector<1x384x128xf32> to vector<384x128xf32>
    %cst_35 = arith.constant dense<0.000000e+00> : vector<128x128xf32>
    %75 = tpu.matmul %72, %74, %cst_35 {dimension_numbers = #tpu.dot_dimension_numbers<[1], [0], [0], [1], [0, 0, 1, 1], [], []>} : vector<128x384xf32>, vector<384x128xf32>, vector<128x128xf32> -> vector<128x128xf32>
    %76 = arith.addf %71, %75 : vector<128x128xf32>
    %77 = vector.extract_strided_slice %67 {offsets = [32, 0], sizes = [128, 384], strides = [1, 1]} : vector<160x384xf32> to vector<128x384xf32>
    %c2 = arith.constant 2 : index
    %c0_36 = arith.constant 0 : index
    %c0_37 = arith.constant 0 : index
    %78 = vector.load %arg8[%c2, %c0_36, %c0_37] : memref<3x384x128xf32, #tpu.memory_space<vmem>>, vector<1x384x128xf32>
    %79 = vector.shape_cast %78 : vector<1x384x128xf32> to vector<384x128xf32>
    %cst_38 = arith.constant dense<0.000000e+00> : vector<128x128xf32>
    %80 = tpu.matmul %77, %79, %cst_38 {dimension_numbers = #tpu.dot_dimension_numbers<[1], [0], [0], [1], [0, 0, 1, 1], [], []>} : vector<128x384xf32>, vector<384x128xf32>, vector<128x128xf32> -> vector<128x128xf32>
    %81 = arith.addf %76, %80 : vector<128x128xf32>
    %c0_39 = arith.constant 0 : index
    %c0_40 = arith.constant 0 : index
    %82 = vector.load %arg9[%c0_39, %c0_40] : memref<1x128xf32, #tpu.memory_space<vmem>>, vector<1x128xf32>
    %83 = vector.broadcast %82 : vector<1x128xf32> to vector<128x128xf32>
    %84 = arith.mulf %81, %83 : vector<128x128xf32>
    %c0_41 = arith.constant 0 : index
    %c0_42 = arith.constant 0 : index
    %85 = vector.load %arg10[%c0_41, %c0_42] : memref<1x128xf32, #tpu.memory_space<vmem>>, vector<1x128xf32>
    %86 = vector.broadcast %85 : vector<1x128xf32> to vector<128x128xf32>
    %87 = arith.addf %84, %86 : vector<128x128xf32>
    %cst_43 = arith.constant 0.000000e+00 : f32
    %88 = vector.broadcast %cst_43 : f32 to vector<128x128xf32>
    %89 = arith.maximumf %87, %88 : vector<128x128xf32>
    %c0_44 = arith.constant 0 : index
    %c0_45 = arith.constant 0 : index
    %90 = vector.load %arg11[%c0_44, %c0_45] : memref<128x128xf32, #tpu.memory_space<vmem>>, vector<128x128xf32>
    %cst_46 = arith.constant dense<0.000000e+00> : vector<128x128xf32>
    %91 = tpu.matmul %89, %90, %cst_46 {dimension_numbers = #tpu.dot_dimension_numbers<[1], [0], [0], [1], [0, 0, 1, 1], [], []>} : vector<128x128xf32>, vector<128x128xf32>, vector<128x128xf32> -> vector<128x128xf32>
    %c0_47 = arith.constant 0 : index
    %c0_48 = arith.constant 0 : index
    %92 = vector.load %arg12[%c0_47, %c0_48] : memref<1x128xf32, #tpu.memory_space<vmem>>, vector<1x128xf32>
    %93 = vector.broadcast %92 : vector<1x128xf32> to vector<128x128xf32>
    %94 = arith.mulf %91, %93 : vector<128x128xf32>
    %c0_49 = arith.constant 0 : index
    %c0_50 = arith.constant 0 : index
    %95 = vector.load %arg13[%c0_49, %c0_50] : memref<1x128xf32, #tpu.memory_space<vmem>>, vector<1x128xf32>
    %96 = vector.broadcast %95 : vector<1x128xf32> to vector<128x128xf32>
    %97 = arith.addf %94, %96 : vector<128x128xf32>
    %c0_51 = arith.constant 0 : index
    %c0_52 = arith.constant 0 : index
    %c0_53 = arith.constant 0 : index
    %c0_54 = arith.constant 0 : index
    %98 = vector.load %arg3[%c0_51, %c0_52, %c0_53, %c0_54] : memref<1x8x16x128xf32, #tpu.memory_space<vmem>>, vector<1x8x16x128xf32>
    %99 = vector.shape_cast %98 : vector<1x8x16x128xf32> to vector<8x16x128xf32>
    %100 = vector.shape_cast %99 : vector<8x16x128xf32> to vector<128x128xf32>
    %101 = arith.addf %97, %100 : vector<128x128xf32>
    %cst_55 = arith.constant 0.000000e+00 : f32
    %102 = vector.broadcast %cst_55 : f32 to vector<128x128xf32>
    %103 = arith.maximumf %101, %102 : vector<128x128xf32>
    %104 = vector.shape_cast %103 : vector<128x128xf32> to vector<8x16x128xf32>
    %c0_56 = arith.constant 0 : index
    %c0_57 = arith.constant 0 : index
    %c0_58 = arith.constant 0 : index
    %c0_59 = arith.constant 0 : index
    %105 = vector.load %arg14[%c0_56, %c0_57, %c0_58, %c0_59] : memref<1x8x16x128xf32, #tpu.memory_space<vmem>>, vector<1x8x16x128xf32>
    %106 = vector.shape_cast %105 : vector<1x8x16x128xf32> to vector<8x16x128xf32>
    %107 = vector.shape_cast %104 : vector<8x16x128xf32> to vector<1x8x16x128xf32>
    tpu.vector_store %arg14[%c0_56, %c0_57, %c0_58, %c0_59], %107 {strides = array<i32>} : memref<1x8x16x128xf32, #tpu.memory_space<vmem>>, vector<1x8x16x128xf32>,
    return
  }
  func.func @transform_0(%arg0: i32, %arg1: i32) -> (i32, i32, i32, i32) {
    %c8_i32 = arith.constant 8 : i32
    %0 = arith.muli %arg1, %c8_i32 : i32
    %c1_i32 = arith.constant 1 : i32
    %1 = arith.subi %0, %c1_i32 : i32
    %c0_i32 = arith.constant 0 : i32
    %2 = arith.maxsi %1, %c0_i32 : i32
    %c0_i32_0 = arith.constant 0 : i32
    %c0_i32_1 = arith.constant 0 : i32
    %c0_i32_2 = arith.constant 0 : i32
    return %arg0, %2, %c0_i32_0, %c0_i32_1 : i32, i32, i32, i32
  }
  func.func @transform_1(%arg0: i32, %arg1: i32) -> (i32, i32, i32, i32) {
    %c0_i32 = arith.constant 0 : i32
    %c0_i32_0 = arith.constant 0 : i32
    %c0_i32_1 = arith.constant 0 : i32
    return %arg0, %arg1, %c0_i32, %c0_i32_0 : i32, i32, i32, i32
  }
  func.func @transform_2(%arg0: i32, %arg1: i32) -> (i32, i32, i32, i32) {
    %c8_i32 = arith.constant 8 : i32
    %0 = arith.muli %arg1, %c8_i32 : i32
    %c8_i32_0 = arith.constant 8 : i32
    %1 = arith.addi %0, %c8_i32_0 : i32
    %c15_i32 = arith.constant 15 : i32
    %2 = arith.minsi %1, %c15_i32 : i32
    %c0_i32 = arith.constant 0 : i32
    %c0_i32_1 = arith.constant 0 : i32
    %c0_i32_2 = arith.constant 0 : i32
    return %arg0, %2, %c0_i32, %c0_i32_1 : i32, i32, i32, i32
  }
  func.func @transform_3(%arg0: i32, %arg1: i32) -> (i32, i32) {
    %c0_i32 = arith.constant 0 : i32
    %c0_i32_0 = arith.constant 0 : i32
    %c0_i32_1 = arith.constant 0 : i32
    return %c0_i32, %c0_i32_0 : i32, i32
  }
  func.func @transform_4(%arg0: i32, %arg1: i32) -> (i32, i32) {
    %c0_i32 = arith.constant 0 : i32
    %c0_i32_0 = arith.constant 0 : i32
    %c0_i32_1 = arith.constant 0 : i32
    return %c0_i32, %c0_i32_0 : i32, i32
  }
  func.func @transform_5(%arg0: i32, %arg1: i32) -> (i32, i32) {
    %c0_i32 = arith.constant 0 : i32
    %c0_i32_0 = arith.constant 0 : i32
    %c0_i32_1 = arith.constant 0 : i32
    return %c0_i32, %c0_i32_0 : i32, i32
  }
  func.func @transform_6(%arg0: i32, %arg1: i32) -> (i32, i32, i32) {
    %c0_i32 = arith.constant 0 : i32
    %c0_i32_0 = arith.constant 0 : i32
    %c0_i32_1 = arith.constant 0 : i32
    %c0_i32_2 = arith.constant 0 : i32
    return %c0_i32, %c0_i32_0, %c0_i32_1 : i32, i32, i32
  }
  func.func @transform_7(%arg0: i32, %arg1: i32) -> (i32, i32) {
    %c0_i32 = arith.constant 0 : i32
    %c0_i32_0 = arith.constant 0 : i32
    %c0_i32_1 = arith.constant 0 : i32
    return %c0_i32, %c0_i32_0 : i32, i32
  }
  func.func @transform_8(%arg0: i32, %arg1: i32) -> (i32, i32) {
    %c0_i32 = arith.constant 0 : i32
    %c0_i32_0 = arith.constant 0 : i32
    %c0_i32_1 = arith.constant 0 : i32
    return %c0_i32, %c0_i32_0 : i32, i32
  }
  func.func @transform_9(%arg0: i32, %arg1: i32) -> (i32, i32) {
    %c0_i32 = arith.constant 0 : i32
    %c0_i32_0 = arith.constant 0 : i32
    %c0_i32_1 = arith.constant 0 : i32
    return %c0_i32, %c0_i32_0 : i32, i32
  }
  func.func @transform_10(%arg0: i32, %arg1: i32) -> (i32, i32) {
    %c0_i32 = arith.constant 0 : i32
    %c0_i32_0 = arith.constant 0 : i32
    %c0_i32_1 = arith.constant 0 : i32
    return %c0_i32, %c0_i32_0 : i32, i32
  }
  func.func @transform_11(%arg0: i32, %arg1: i32) -> (i32, i32) {
    %c0_i32 = arith.constant 0 : i32
    %c0_i32_0 = arith.constant 0 : i32
    %c0_i32_1 = arith.constant 0 : i32
    return %c0_i32, %c0_i32_0 : i32, i32
  }
  func.func @transform_12(%arg0: i32, %arg1: i32) -> (i32, i32, i32, i32) {
    %c0_i32 = arith.constant 0 : i32
    %c0_i32_0 = arith.constant 0 : i32
    %c0_i32_1 = arith.constant 0 : i32
    return %arg0, %arg1, %c0_i32, %c0_i32_0 : i32, i32, i32, i32
  }
}

</mosaic_0001>

<llo_original>
// kernel: tpu_custom_call.1
$region0: #{tpu_custom_call.1}
  #allocation0 [shape = 'u32[]', space=smem, size = 0x4, offset = 0x4, fixed_abs, tag = 'smem constant byte address 0x4 - core index']
  #allocation1 [shape = 'u32[144,128]{1,0:T(1,128)}', space=vmem, size = 0x12000, scoped, tag = 'internal scratch']
  %s0 = inlined_call_operand.hbm [shape: f32[2,16,16,128], index: 0, kind: input, shape index: {}]
  %s1 = inlined_call_operand.hbm [shape: f32[2,16,16,128], index: 1, kind: input, shape index: {}]
  %s2 = inlined_call_operand.hbm [shape: f32[2,16,16,128], index: 2, kind: input, shape index: {}]
  %s3 = inlined_call_operand.hbm [shape: f32[128,128], index: 3, kind: input, shape index: {}]
  %s4 = inlined_call_operand.vmem [shape: f32[1,128], index: 4, kind: input, shape index: {}]
  %s5 = inlined_call_operand.vmem [shape: f32[1,128], index: 5, kind: input, shape index: {}]
  %s6 = inlined_call_operand.hbm [shape: f32[3,384,128], index: 6, kind: input, shape index: {}]
  %s7 = inlined_call_operand.vmem [shape: f32[1,128], index: 7, kind: input, shape index: {}]
  %s8 = inlined_call_operand.vmem [shape: f32[1,128], index: 8, kind: input, shape index: {}]
  %s9 = inlined_call_operand.hbm [shape: f32[128,128], index: 9, kind: input, shape index: {}]
  %s10 = inlined_call_operand.vmem [shape: f32[1,128], index: 10, kind: input, shape index: {}]
  %s11 = inlined_call_operand.vmem [shape: f32[1,128], index: 11, kind: input, shape index: {}]
  %s12 = inlined_call_operand.hbm [shape: f32[2,16,16,128], index: 12, kind: output, shape index: {}]
  %s13 = sld [smem:[#allocation0]]
  $region105: #{tpu_custom_call.1} parent=0
    _
  %s15 = ssub.s32 1, %s13
  %s16 = scalar_select 0, %s15, %s13
  $region1: #{tpu_custom_call.1} parent=0
    #allocation2 [shape = 'u8[16384]{0}', space=vmem, size = 0x4000, scoped, tag = 'input window, operand 0']
    #allocation3 [shape = 's32[2]{0}', space=sflag, size = 0x8, scoped, tag = 'scoped memory for tpu_custom_call.1']
    #allocation4 [shape = 's32[2]{0}', space=sflag, size = 0x8, scoped, tag = 'scoped memory for tpu_custom_call.1']
    #allocation5 [shape = 'u8[131072]{0}', space=vmem, size = 0x20000, scoped, tag = 'input window, operand 1']
    #allocation6 [shape = 's32[2]{0}', space=sflag, size = 0x8, scoped, tag = 'scoped memory for tpu_custom_call.1']
    #allocation7 [shape = 'u8[16384]{0}', space=vmem, size = 0x4000, scoped, tag = 'input window, operand 2']
    #allocation8 [shape = 'u8[65536]{0}', space=vmem, size = 0x10000, scoped, tag = 'input window, operand 3, single buffered']
    #allocation9 [shape = 's32[1]{0}', space=sflag, size = 0x4, scoped, tag = 'scoped memory for tpu_custom_call.1']
    #allocation10 [shape = 'u8[589824]{0}', space=vmem, size = 0x90000, scoped, tag = 'input window, operand 6, single buffered']
    #allocation11 [shape = 'u8[65536]{0}', space=vmem, size = 0x10000, scoped, tag = 'input window, operand 9, single buffered']
    #allocation12 [shape = 's32[1]{0}', space=sflag, size = 0x4, scoped, tag = 'scoped memory for tpu_custom_call.1']
    #allocation13 [shape = 'u8[131072]{0}', space=vmem, size = 0x20000, scoped, tag = 'output window, operand 0']
    %17 = vsyncpa [#allocation3], 0
    %s18 = scalar_lea.sflag [#allocation3], 1
    %19 = vsyncpa %s18, 0
    %20 = vsyncpa [#allocation6], 0
    %s21 = scalar_lea.sflag [#allocation6], 1
    %22 = vsyncpa %s21, 0
    %23 = vsyncpa [#allocation9], 0
    %24 = vsyncpa [#allocation12], 0
    %25 = vsyncpa [#allocation4], 0
    %s26 = scalar_lea.sflag [#allocation4], 1
    %27 = vsyncpa %s26, 0
    loop: start=0, step=1, limit=6
    $region2: #{tpu_custom_call.1} parent=1 // loop_pre_header
      _
    $region3: #{tpu_custom_call.1} parent=1 // loop_header
      %s29 = sphi 0, %s33
      %p30 = scmp.ge.s32.totalorder %s29, 6
      %s36 = sphi 0, %s48
      %s37 = sphi 0, %s44
      %s38 = sphi 0, %s36
      %s39 = sphi 0, %s37
      %s40 = sphi 0, %s38
      %s41 = sphi 0, %s39
      %s61 = sphi 0, %s63
      %s64 = sphi 0, %s61
      %s65 = sphi 0, %s64
      %s81 = sphi 0, %s65
      %s89 = sphi 0, %s91
      %s92 = sphi 0, %s89
      %s93 = sphi 0, %s92
      %s109 = sphi 0, %s93
      %s125 = sphi 0, %s127
      %s128 = sphi 0, %s125
      %s129 = sphi 0, %s128
      %s145 = sphi 0, %s129
      %s149 = sphi 0, %s149
      %s151 = sphi 0, %s149
      %s152 = sphi 0, %s151
      %s166 = sphi 0, %s152
      %s170 = sphi 0, %s170
      %s172 = sphi 0, %s170
      %s173 = sphi 0, %s172
      %s187 = sphi 0, %s173
      %s191 = sphi 0, %s191
      %s193 = sphi 0, %s191
      %s194 = sphi 0, %s193
      %s208 = sphi 0, %s194
      %s212 = sphi 0, %s212
      %s214 = sphi 0, %s212
      %s215 = sphi 0, %s214
      %s229 = sphi 0, %s215
      %s233 = sphi 0, %s233
      %s235 = sphi 0, %s233
      %s236 = sphi 0, %s235
      %s250 = sphi 0, %s236
      %s254 = sphi 0, %s254
      %s256 = sphi 0, %s254
      %s257 = sphi 0, %s256
      %s271 = sphi 0, %s257
      %s275 = sphi 0, %s275
      %s277 = sphi 0, %s275
      %s278 = sphi 0, %s277
      %s292 = sphi 0, %s278
      %s296 = sphi 0, %s296
      %s298 = sphi 0, %s296
      %s299 = sphi 0, %s298
      %s313 = sphi 0, %s299
      %s317 = sphi 0, %s317
      %s319 = sphi 0, %s317
      %s320 = sphi 0, %s319
      %s334 = sphi 0, %s320
      %s342 = sphi 0, %s344
      %s345 = sphi 0, %s342
      %s346 = sphi 0, %s345
      %s362 = sphi 0, %s346
    $region4: #{tpu_custom_call.1} parent=1 // loop_header_branch
      %32 = sbr.rel (%p30) target = $region8
    $region5: #{tpu_custom_call.1} parent=1 // loop_body
      %s34 = ssub.s32 %s29, 1
      %s35 = ssub.s32 %s29, 2
      %s42 = sadd.s32 1, %s37
      %p43 = scmp.ge.s32.totalorder %s42, 2
      %s44 = scalar_select %p43, 0, %s42
      %s45 = sadd.s32 1, %s36
      %s46 = scalar_select %p43, %s45, %s36
      %p47 = scmp.ge.s32.totalorder %s46, 2
      %s48 = scalar_select %p47, 0, %s46
      %s49 = smul.u32 %s37, 8
      %s50 = ssub.s32 %s49, 1
      %p51 = scmp.gt.s32.totalorder %s50, 0
      %s52 = scalar_select %p51, %s50, 0
      %s53 = smul.u32 %s44, 8
      %s54 = ssub.s32 %s53, 1
      %p55 = scmp.gt.s32.totalorder %s54, 0
      %s56 = scalar_select %p55, %s54, 0
      %s57 = ssub.s32 %s36, %s48
      %s58 = ssub.s32 %s52, %s56
      %s59 = sor.u32 %s57, %s58
      %p60 = scmp.eq.s32.totalorder %s59, 0
      %s62 = sadd.s32 %s61, 1
      %s63 = scalar_select %p60, %s61, %s62
      %p66 = pneg %p60
      %p67 = scmp.eq.s32.totalorder %s29, 3
      %p68 = por %p66, %p67
      %p69 = scmp.ne.s32.totalorder %s61, %s64
      %p70 = scmp.eq.s32.totalorder %s29, 0
      %p71 = por %p69, %p70
      %p72 = scmp.ne.s32.totalorder %s61, %s64
      %p73 = scmp.eq.s32.totalorder %s34, 3
      %p74 = por %p72, %p73
      %p75 = scmp.ne.s32.totalorder %s64, %s65
      %p76 = scmp.eq.s32.totalorder %s34, 0
      %p77 = por %p75, %p76
      %p78 = scmp.ne.s32.totalorder %s64, %s65
      %p79 = scmp.eq.s32.totalorder %s35, 3
      %p80 = por %p78, %p79
      %p82 = scmp.ne.s32.totalorder %s65, %s81
      %p83 = scmp.eq.s32.totalorder %s35, 0
      %p84 = por %p82, %p83
      %s85 = ssub.s32 %s36, %s48
      %s86 = ssub.s32 %s37, %s44
      %s87 = sor.u32 %s85, %s86
      %p88 = scmp.eq.s32.totalorder %s87, 0
      %s90 = sadd.s32 %s89, 1
      %s91 = scalar_select %p88, %s89, %s90
      %p94 = pneg %p88
      %p95 = scmp.eq.s32.totalorder %s29, 3
      %p96 = por %p94, %p95
      %p97 = scmp.ne.s32.totalorder %s89, %s92
      %p98 = scmp.eq.s32.totalorder %s29, 0
      %p99 = por %p97, %p98
      %p100 = scmp.ne.s32.totalorder %s89, %s92
      %p101 = scmp.eq.s32.totalorder %s34, 3
      %p102 = por %p100, %p101
      %p103 = scmp.ne.s32.totalorder %s92, %s93
      %p104 = scmp.eq.s32.totalorder %s34, 0
      %p105 = por %p103, %p104
      %p106 = scmp.ne.s32.totalorder %s92, %s93
      %p107 = scmp.eq.s32.totalorder %s35, 3
      %p108 = por %p106, %p107
      %p110 = scmp.ne.s32.totalorder %s93, %s109
      %p111 = scmp.eq.s32.totalorder %s35, 0
      %p112 = por %p110, %p111
      %s113 = smul.u32 %s37, 8
      %s114 = sadd.s32 %s113, 8
      %p115 = scmp.lt.s32.totalorder %s114, 15
      %s116 = scalar_select %p115, %s114, 15
      %s117 = smul.u32 %s44, 8
      %s118 = sadd.s32 %s117, 8
      %p119 = scmp.lt.s32.totalorder %s118, 15
      %s120 = scalar_select %p119, %s118, 15
      %s121 = ssub.s32 %s36, %s48
      %s122 = ssub.s32 %s116, %s120
      %s123 = sor.u32 %s121, %s122
      %p124 = scmp.eq.s32.totalorder %s123, 0
      %s126 = sadd.s32 %s125, 1
      %s127 = scalar_select %p124, %s125, %s126
      %p130 = pneg %p124
      %p131 = scmp.eq.s32.totalorder %s29, 3
      %p132 = por %p130, %p131
      %p133 = scmp.ne.s32.totalorder %s125, %s128
      %p134 = scmp.eq.s32.totalorder %s29, 0
      %p135 = por %p133, %p134
      %p136 = scmp.ne.s32.totalorder %s125, %s128
      %p137 = scmp.eq.s32.totalorder %s34, 3
      %p138 = por %p136, %p137
      %p139 = scmp.ne.s32.totalorder %s128, %s129
      %p140 = scmp.eq.s32.totalorder %s34, 0
      %p141 = por %p139, %p140
      %p142 = scmp.ne.s32.totalorder %s128, %s129
      %p143 = scmp.eq.s32.totalorder %s35, 3
      %p144 = por %p142, %p143
      %p146 = scmp.ne.s32.totalorder %s129, %s145
      %p147 = scmp.eq.s32.totalorder %s35, 0
      %p148 = por %p146, %p147
      %s150 = sadd.s32 %s149, 1
      %p153 = scmp.eq.s32.totalorder %s29, 3
      %p154 = scmp.ne.s32.totalorder %s149, %s151
      %p155 = scmp.eq.s32.totalorder %s29, 0
      %p156 = por %p154, %p155
      %p157 = scmp.ne.s32.totalorder %s149, %s151
      %p158 = scmp.eq.s32.totalorder %s34, 3
      %p159 = por %p157, %p158
      %p160 = scmp.ne.s32.totalorder %s151, %s152
      %p161 = scmp.eq.s32.totalorder %s34, 0
      %p162 = por %p160, %p161
      %p163 = scmp.ne.s32.totalorder %s151, %s152
      %p164 = scmp.eq.s32.totalorder %s35, 3
      %p165 = por %p163, %p164
      %p167 = scmp.ne.s32.totalorder %s152, %s166
      %p168 = scmp.eq.s32.totalorder %s35, 0
      %p169 = por %p167, %p168
      %s171 = sadd.s32 %s170, 1
      %p174 = scmp.eq.s32.totalorder %s29, 3
      %p175 = scmp.ne.s32.totalorder %s170, %s172
      %p176 = scmp.eq.s32.totalorder %s29, 0
      %p177 = por %p175, %p176
      %p178 = scmp.ne.s32.totalorder %s170, %s172
      %p179 = scmp.eq.s32.totalorder %s34, 3
      %p180 = por %p178, %p179
      %p181 = scmp.ne.s32.totalorder %s172, %s173
      %p182 = scmp.eq.s32.totalorder %s34, 0
      %p183 = por %p181, %p182
      %p184 = scmp.ne.s32.totalorder %s172, %s173
      %p185 = scmp.eq.s32.totalorder %s35, 3
      %p186 = por %p184, %p185
      %p188 = scmp.ne.s32.totalorder %s173, %s187
      %p189 = scmp.eq.s32.totalorder %s35, 0
      %p190 = por %p188, %p189
      %s192 = sadd.s32 %s191, 1
      %p195 = scmp.eq.s32.totalorder %s29, 3
      %p196 = scmp.ne.s32.totalorder %s191, %s193
      %p197 = scmp.eq.s32.totalorder %s29, 0
      %p198 = por %p196, %p197
      %p199 = scmp.ne.s32.totalorder %s191, %s193
      %p200 = scmp.eq.s32.totalorder %s34, 3
      %p201 = por %p199, %p200
      %p202 = scmp.ne.s32.totalorder %s193, %s194
      %p203 = scmp.eq.s32.totalorder %s34, 0
      %p204 = por %p202, %p203
      %p205 = scmp.ne.s32.totalorder %s193, %s194
      %p206 = scmp.eq.s32.totalorder %s35, 3
      %p207 = por %p205, %p206
      %p209 = scmp.ne.s32.totalorder %s194, %s208
      %p210 = scmp.eq.s32.totalorder %s35, 0
      %p211 = por %p209, %p210
      %s213 = sadd.s32 %s212, 1
      %p216 = scmp.eq.s32.totalorder %s29, 3
      %p217 = scmp.ne.s32.totalorder %s212, %s214
      %p218 = scmp.eq.s32.totalorder %s29, 0
      %p219 = por %p217, %p218
      %p220 = scmp.ne.s32.totalorder %s212, %s214
      %p221 = scmp.eq.s32.totalorder %s34, 3
      %p222 = por %p220, %p221
      %p223 = scmp.ne.s32.totalorder %s214, %s215
      %p224 = scmp.eq.s32.totalorder %s34, 0
      %p225 = por %p223, %p224
      %p226 = scmp.ne.s32.totalorder %s214, %s215
      %p227 = scmp.eq.s32.totalorder %s35, 3
      %p228 = por %p226, %p227
      %p230 = scmp.ne.s32.totalorder %s215, %s229
      %p231 = scmp.eq.s32.totalorder %s35, 0
      %p232 = por %p230, %p231
      %s234 = sadd.s32 %s233, 1
      %p237 = scmp.eq.s32.totalorder %s29, 3
      %p238 = scmp.ne.s32.totalorder %s233, %s235
      %p239 = scmp.eq.s32.totalorder %s29, 0
      %p240 = por %p238, %p239
      %p241 = scmp.ne.s32.totalorder %s233, %s235
      %p242 = scmp.eq.s32.totalorder %s34, 3
      %p243 = por %p241, %p242
      %p244 = scmp.ne.s32.totalorder %s235, %s236
      %p245 = scmp.eq.s32.totalorder %s34, 0
      %p246 = por %p244, %p245
      %p247 = scmp.ne.s32.totalorder %s235, %s236
      %p248 = scmp.eq.s32.totalorder %s35, 3
      %p249 = por %p247, %p248
      %p251 = scmp.ne.s32.totalorder %s236, %s250
      %p252 = scmp.eq.s32.totalorder %s35, 0
      %p253 = por %p251, %p252
      %s255 = sadd.s32 %s254, 1
      %p258 = scmp.eq.s32.totalorder %s29, 3
      %p259 = scmp.ne.s32.totalorder %s254, %s256
      %p260 = scmp.eq.s32.totalorder %s29, 0
      %p261 = por %p259, %p260
      %p262 = scmp.ne.s32.totalorder %s254, %s256
      %p263 = scmp.eq.s32.totalorder %s34, 3
      %p264 = por %p262, %p263
      %p265 = scmp.ne.s32.totalorder %s256, %s257
      %p266 = scmp.eq.s32.totalorder %s34, 0
      %p267 = por %p265, %p266
      %p268 = scmp.ne.s32.totalorder %s256, %s257
      %p269 = scmp.eq.s32.totalorder %s35, 3
      %p270 = por %p268, %p269
      %p272 = scmp.ne.s32.totalorder %s257, %s271
      %p273 = scmp.eq.s32.totalorder %s35, 0
      %p274 = por %p272, %p273
      %s276 = sadd.s32 %s275, 1
      %p279 = scmp.eq.s32.totalorder %s29, 3
      %p280 = scmp.ne.s32.totalorder %s275, %s277
      %p281 = scmp.eq.s32.totalorder %s29, 0
      %p282 = por %p280, %p281
      %p283 = scmp.ne.s32.totalorder %s275, %s277
      %p284 = scmp.eq.s32.totalorder %s34, 3
      %p285 = por %p283, %p284
      %p286 = scmp.ne.s32.totalorder %s277, %s278
      %p287 = scmp.eq.s32.totalorder %s34, 0
      %p288 = por %p286, %p287
      %p289 = scmp.ne.s32.totalorder %s277, %s278
      %p290 = scmp.eq.s32.totalorder %s35, 3
      %p291 = por %p289, %p290
      %p293 = scmp.ne.s32.totalorder %s278, %s292
      %p294 = scmp.eq.s32.totalorder %s35, 0
      %p295 = por %p293, %p294
      %s297 = sadd.s32 %s296, 1
      %p300 = scmp.eq.s32.totalorder %s29, 3
      %p301 = scmp.ne.s32.totalorder %s296, %s298
      %p302 = scmp.eq.s32.totalorder %s29, 0
      %p303 = por %p301, %p302
      %p304 = scmp.ne.s32.totalorder %s296, %s298
      %p305 = scmp.eq.s32.totalorder %s34, 3
      %p306 = por %p304, %p305
      %p307 = scmp.ne.s32.totalorder %s298, %s299
      %p308 = scmp.eq.s32.totalorder %s34, 0
      %p309 = por %p307, %p308
      %p310 = scmp.ne.s32.totalorder %s298, %s299
      %p311 = scmp.eq.s32.totalorder %s35, 3
      %p312 = por %p310, %p311
      %p314 = scmp.ne.s32.totalorder %s299, %s313
      %p315 = scmp.eq.s32.totalorder %s35, 0
      %p316 = por %p314, %p315
      %s318 = sadd.s32 %s317, 1
      %p321 = scmp.eq.s32.totalorder %s29, 3
      %p322 = scmp.ne.s32.totalorder %s317, %s319
      %p323 = scmp.eq.s32.totalorder %s29, 0
      %p324 = por %p322, %p323
      %p325 = scmp.ne.s32.totalorder %s317, %s319
      %p326 = scmp.eq.s32.totalorder %s34, 3
      %p327 = por %p325, %p326
      %p328 = scmp.ne.s32.totalorder %s319, %s320
      %p329 = scmp.eq.s32.totalorder %s34, 0
      %p330 = por %p328, %p329
      %p331 = scmp.ne.s32.totalorder %s319, %s320
      %p332 = scmp.eq.s32.totalorder %s35, 3
      %p333 = por %p331, %p332
      %p335 = scmp.ne.s32.totalorder %s320, %s334
      %p336 = scmp.eq.s32.totalorder %s35, 0
      %p337 = por %p335, %p336
      %s338 = ssub.s32 %s36, %s48
      %s339 = ssub.s32 %s37, %s44
      %s340 = sor.u32 %s338, %s339
      %p341 = scmp.eq.s32.totalorder %s340, 0
      %s343 = sadd.s32 %s342, 1
      %s344 = scalar_select %p341, %s342, %s343
      %p347 = pneg %p341
      %p348 = scmp.eq.s32.totalorder %s29, 3
      %p349 = por %p347, %p348
      %p350 = scmp.ne.s32.totalorder %s342, %s345
      %p351 = scmp.eq.s32.totalorder %s29, 0
      %p352 = por %p350, %p351
      %p353 = scmp.ne.s32.totalorder %s342, %s345
      %p354 = scmp.eq.s32.totalorder %s34, 3
      %p355 = por %p353, %p354
      %p356 = scmp.ne.s32.totalorder %s345, %s346
      %p357 = scmp.eq.s32.totalorder %s34, 0
      %p358 = por %p356, %p357
      %p359 = scmp.ne.s32.totalorder %s345, %s346
      %p360 = scmp.eq.s32.totalorder %s35, 3
      %p361 = por %p359, %p360
      %p363 = scmp.ne.s32.totalorder %s346, %s362
      %p364 = scmp.eq.s32.totalorder %s35, 0
      %p365 = por %p363, %p364
      %p366 = scmp.le.s32.totalorder 1, %s29
      %p367 = scmp.lt.s32.totalorder %s29, 5
      %p368 = pnand %p366, %p367
      %p369 = pneg %p368
      // Predicated region
      $region9: #{tpu_custom_call.1} parent=5 // pred_check
        _
      $region10: #{tpu_custom_call.1} parent=5 // pred_check_branch
        %371 = sbr.rel (%p368) target = $region12
      $region11: #{tpu_custom_call.1} parent=5 // pred_region
        %s372 = ssub.s32 %s29, 1
        // Predicated region
        $region13: #{tpu_custom_call.1} parent=11 // pred_check
          %p373 = pneg %p162
        $region14: #{tpu_custom_call.1} parent=11 // pred_check_branch
          %375 = sbr.rel (%p373) target = $region16
        $region15: #{tpu_custom_call.1} parent=11 // pred_region
          %s377 = ssub.s32 2048, 2048
          %378 = vsyncadd [#allocation9], %s377
          %s379 = sshll.u32 [#allocation8], 4
          %s380 = int_to_ptr.vmem [resolvable:$true] %s379
          %385 = dma.hbm_to_vmem [thread:$0]  %s3, 2048, %s380, [#allocation9], 128, 128, 8
        $region16: #{tpu_custom_call.1} parent=11 // pred_fallthru
          _
        // Predicated region
        $region17: #{tpu_custom_call.1} parent=11 // pred_check
          %p386 = pneg %p183
        $region18: #{tpu_custom_call.1} parent=11 // pred_check_branch
          %388 = sbr.rel (%p386) target = $region20
        $region19: #{tpu_custom_call.1} parent=11 // pred_region
          _
        $region20: #{tpu_custom_call.1} parent=11 // pred_fallthru
          _
        // Predicated region
        $region21: #{tpu_custom_call.1} parent=11 // pred_check
          %p389 = pneg %p204
        $region22: #{tpu_custom_call.1} parent=11 // pred_check_branch
          %391 = sbr.rel (%p389) target = $region24
        $region23: #{tpu_custom_call.1} parent=11 // pred_region
          _
        $region24: #{tpu_custom_call.1} parent=11 // pred_fallthru
          _
        // Predicated region
        $region25: #{tpu_custom_call.1} parent=11 // pred_check
          %p392 = pneg %p225
        $region26: #{tpu_custom_call.1} parent=11 // pred_check_branch
          %394 = sbr.rel (%p392) target = $region28
        $region27: #{tpu_custom_call.1} parent=11 // pred_region
          %s396 = ssub.s32 18432, 18432
          %397 = vsyncadd [#allocation9], %s396
          %s398 = sshll.u32 [#allocation10], 4
          %s399 = int_to_ptr.vmem [resolvable:$true] %s398
          %404 = dma.hbm_to_vmem [thread:$0]  %s6, 18432, %s399, [#allocation9], 128, 128, 8
        $region28: #{tpu_custom_call.1} parent=11 // pred_fallthru
          _
        // Predicated region
        $region29: #{tpu_custom_call.1} parent=11 // pred_check
          %p405 = pneg %p246
        $region30: #{tpu_custom_call.1} parent=11 // pred_check_branch
          %407 = sbr.rel (%p405) target = $region32
        $region31: #{tpu_custom_call.1} parent=11 // pred_region
          _
        $region32: #{tpu_custom_call.1} parent=11 // pred_fallthru
          _
        // Predicated region
        $region33: #{tpu_custom_call.1} parent=11 // pred_check
          %p408 = pneg %p267
        $region34: #{tpu_custom_call.1} parent=11 // pred_check_branch
          %410 = sbr.rel (%p408) target = $region36
        $region35: #{tpu_custom_call.1} parent=11 // pred_region
          _
        $region36: #{tpu_custom_call.1} parent=11 // pred_fallthru
          _
        // Predicated region
        $region37: #{tpu_custom_call.1} parent=11 // pred_check
          %p411 = pneg %p288
        $region38: #{tpu_custom_call.1} parent=11 // pred_check_branch
          %413 = sbr.rel (%p411) target = $region40
        $region39: #{tpu_custom_call.1} parent=11 // pred_region
          %s415 = ssub.s32 2048, 2048
          %416 = vsyncadd [#allocation12], %s415
          %s417 = sshll.u32 [#allocation11], 4
          %s418 = int_to_ptr.vmem [resolvable:$true] %s417
          %423 = dma.hbm_to_vmem [thread:$0]  %s9, 2048, %s418, [#allocation12], 128, 128, 8
        $region40: #{tpu_custom_call.1} parent=11 // pred_fallthru
          _
        // Predicated region
        $region41: #{tpu_custom_call.1} parent=11 // pred_check
          %p424 = pneg %p309
        $region42: #{tpu_custom_call.1} parent=11 // pred_check_branch
          %426 = sbr.rel (%p424) target = $region44
        $region43: #{tpu_custom_call.1} parent=11 // pred_region
          _
        $region44: #{tpu_custom_call.1} parent=11 // pred_fallthru
          _
        // Predicated region
        $region45: #{tpu_custom_call.1} parent=11 // pred_check
          %p427 = pneg %p330
        $region46: #{tpu_custom_call.1} parent=11 // pred_check_branch
          %429 = sbr.rel (%p427) target = $region48
        $region47: #{tpu_custom_call.1} parent=11 // pred_region
          _
        $region48: #{tpu_custom_call.1} parent=11 // pred_fallthru
          _
      $region12: #{tpu_custom_call.1} parent=5 // pred_fallthru
        _
      %p430 = scmp.lt.s32.totalorder %s29, 4
      // Predicated region
      $region49: #{tpu_custom_call.1} parent=5 // pred_check
        %p431 = pneg %p430
      $region50: #{tpu_custom_call.1} parent=5 // pred_check_branch
        %433 = sbr.rel (%p431) target = $region52
      $region51: #{tpu_custom_call.1} parent=5 // pred_region
        // Predicated region
        $region53: #{tpu_custom_call.1} parent=51 // pred_check
          %p434 = pneg %p71
        $region54: #{tpu_custom_call.1} parent=51 // pred_check_branch
          %436 = sbr.rel (%p434) target = $region56
        $region55: #{tpu_custom_call.1} parent=51 // pred_region
          %s437 = sand.u32 %s61, 1
          %s438 = scalar_lea.sflag [#allocation3], %s437
          %s439 = sand.u32 %s61, 1
          %s440 = smul.addr %s439, 16
          %s441 = scalar_lea.vmem [#allocation2], %s440
          %s442 = smul.u32 %s37, 8
          %s443 = ssub.s32 %s442, 1
          %p444 = scmp.gt.s32.totalorder %s443, 0
          %s445 = scalar_select %p444, %s443, 0
          %s447 = ssub.s32 256, 256
          %448 = vsyncadd %s438, %s447
          %s449 = smul.addr %s445, 2
          %s450 = smul.addr %s36, 32
          %s451 = sadd.s32 %s449, %s450
          %s452 = smul.addr %s451, 128
          %s453 = scalar_lea.hbm %s0, %s452
          %s454 = sshll.u32 %s441, 4
          %s455 = int_to_ptr.vmem [resolvable:$true] %s454
          %460 = dma.hbm_to_vmem [thread:$0]  %s453, 256, %s455, %s438, 128, 128, 8
        $region56: #{tpu_custom_call.1} parent=51 // pred_fallthru
          _
        // Predicated region
        $region57: #{tpu_custom_call.1} parent=51 // pred_check
          %p461 = pneg %p99
        $region58: #{tpu_custom_call.1} parent=51 // pred_check_branch
          %463 = sbr.rel (%p461) target = $region60
        $region59: #{tpu_custom_call.1} parent=51 // pred_region
          %s464 = sand.u32 %s29, 1
          %s465 = scalar_lea.sflag [#allocation6], %s464
          %s466 = sand.u32 %s89, 1
          %s467 = smul.addr %s466, 128
          %s468 = scalar_lea.vmem [#allocation5], %s467
          %s469 = smul.u32 8, %s37
          %s471 = ssub.s32 2048, 2048
          %472 = vsyncadd %s465, %s471
          %s473 = smul.addr %s469, 2
          %s474 = smul.addr %s36, 32
          %s475 = sadd.s32 %s473, %s474
          %s476 = smul.addr %s475, 128
          %s477 = scalar_lea.hbm %s1, %s476
          %s478 = sshll.u32 %s468, 4
          %s479 = int_to_ptr.vmem [resolvable:$true] %s478
          %484 = dma.hbm_to_vmem [thread:$0]  %s477, 2048, %s479, %s465, 128, 128, 8
        $region60: #{tpu_custom_call.1} parent=51 // pred_fallthru
          _
        // Predicated region
        $region61: #{tpu_custom_call.1} parent=51 // pred_check
          %p485 = pneg %p135
        $region62: #{tpu_custom_call.1} parent=51 // pred_check_branch
          %487 = sbr.rel (%p485) target = $region64
        $region63: #{tpu_custom_call.1} parent=51 // pred_region
          %s488 = sand.u32 %s29, 1
          %s489 = scalar_lea.sflag [#allocation6], %s488
          %s490 = sand.u32 %s125, 1
          %s491 = smul.addr %s490, 16
          %s492 = scalar_lea.vmem [#allocation7], %s491
          %s493 = smul.u32 %s37, 8
          %s494 = sadd.s32 %s493, 8
          %p495 = scmp.lt.s32.totalorder %s494, 15
          %s496 = scalar_select %p495, %s494, 15
          %s498 = ssub.s32 256, 256
          %499 = vsyncadd %s489, %s498
          %s500 = smul.addr %s496, 2
          %s501 = smul.addr %s36, 32
          %s502 = sadd.s32 %s500, %s501
          %s503 = smul.addr %s502, 128
          %s504 = scalar_lea.hbm %s2, %s503
          %s505 = sshll.u32 %s492, 4
          %s506 = int_to_ptr.vmem [resolvable:$true] %s505
          %511 = dma.hbm_to_vmem [thread:$0]  %s504, 256, %s506, %s489, 128, 128, 8
        $region64: #{tpu_custom_call.1} parent=51 // pred_fallthru
          _
      $region52: #{tpu_custom_call.1} parent=5 // pred_fallthru
        _
      %p512 = scmp.le.s32.totalorder 1, %s29
      %p513 = scmp.lt.s32.totalorder %s29, 5
      %p514 = pnand %p512, %p513
      %p515 = pneg %p514
      // Predicated region
      $region65: #{tpu_custom_call.1} parent=5 // pred_check
        _
      $region66: #{tpu_custom_call.1} parent=5 // pred_check_branch
        %517 = sbr.rel (%p514) target = $region68
      $region67: #{tpu_custom_call.1} parent=5 // pred_region
        %s518 = ssub.s32 %s29, 1
        %s519 = sand.u32 %s64, 1
        %s520 = scalar_lea.sflag [#allocation3], %s519
        %s521 = sand.u32 %s64, 1
        %s522 = smul.addr %s521, 16
        %s523 = scalar_lea.vmem [#allocation2], %s522
        // Predicated region
        $region69: #{tpu_custom_call.1} parent=67 // pred_check
          %p524 = pneg %p77
        $region70: #{tpu_custom_call.1} parent=67 // pred_check_branch
          %526 = sbr.rel (%p524) target = $region72
        $region71: #{tpu_custom_call.1} parent=67 // pred_region
          %527 = dma.done %s520, 256
        $region72: #{tpu_custom_call.1} parent=67 // pred_fallthru
          _
        %s528 = sand.u32 %s34, 1
        %s529 = scalar_lea.sflag [#allocation6], %s528
        %s530 = sand.u32 %s92, 1
        %s531 = smul.addr %s530, 128
        %s532 = scalar_lea.vmem [#allocation5], %s531
        // Predicated region
        $region73: #{tpu_custom_call.1} parent=67 // pred_check
          %p533 = pneg %p105
        $region74: #{tpu_custom_call.1} parent=67 // pred_check_branch
          %535 = sbr.rel (%p533) target = $region76
        $region75: #{tpu_custom_call.1} parent=67 // pred_region
          %536 = dma.done %s529, 2048
        $region76: #{tpu_custom_call.1} parent=67 // pred_fallthru
          _
        %s537 = sand.u32 %s34, 1
        %s538 = scalar_lea.sflag [#allocation6], %s537
        %s539 = sand.u32 %s128, 1
        %s540 = smul.addr %s539, 16
        %s541 = scalar_lea.vmem [#allocation7], %s540
        // Predicated region
        $region77: #{tpu_custom_call.1} parent=67 // pred_check
          %p542 = pneg %p141
        $region78: #{tpu_custom_call.1} parent=67 // pred_check_branch
          %544 = sbr.rel (%p542) target = $region80
        $region79: #{tpu_custom_call.1} parent=67 // pred_region
          %545 = dma.done %s538, 256
        $region80: #{tpu_custom_call.1} parent=67 // pred_fallthru
          _
        // Predicated region
        $region81: #{tpu_custom_call.1} parent=67 // pred_check
          %p546 = pneg %p162
        $region82: #{tpu_custom_call.1} parent=67 // pred_check_branch
          %548 = sbr.rel (%p546) target = $region84
        $region83: #{tpu_custom_call.1} parent=67 // pred_region
          %549 = dma.done [#allocation9], 2048
        $region84: #{tpu_custom_call.1} parent=67 // pred_fallthru
          _
        // Predicated region
        $region85: #{tpu_custom_call.1} parent=67 // pred_check
          %p550 = pneg %p225
        $region86: #{tpu_custom_call.1} parent=67 // pred_check_branch
          %552 = sbr.rel (%p550) target = $region88
        $region87: #{tpu_custom_call.1} parent=67 // pred_region
          %553 = dma.done [#allocation9], 18432
        $region88: #{tpu_custom_call.1} parent=67 // pred_fallthru
          _
        // Predicated region
        $region89: #{tpu_custom_call.1} parent=67 // pred_check
          %p554 = pneg %p288
        $region90: #{tpu_custom_call.1} parent=67 // pred_check_branch
          %556 = sbr.rel (%p554) target = $region92
        $region91: #{tpu_custom_call.1} parent=67 // pred_region
          %557 = dma.done [#allocation12], 2048
        $region92: #{tpu_custom_call.1} parent=67 // pred_fallthru
          _
        %s558 = sand.u32 %s64, 1
        %s559 = scalar_lea.sflag [#allocation3], %s558
        %s560 = sand.u32 %s64, 1
        %s561 = smul.addr %s560, 16
        %s562 = scalar_lea.vmem [#allocation2], %s561
        %p563 = pneg %p77
        %p564 = pneg %p74
        %s565 = sand.u32 %s34, 1
        %s566 = scalar_lea.sflag [#allocation6], %s565
        %s567 = sand.u32 %s92, 1
        %s568 = smul.addr %s567, 128
        %s569 = scalar_lea.vmem [#allocation5], %s568
        %p570 = pneg %p105
        %p571 = pneg %p102
        %s572 = sand.u32 %s34, 1
        %s573 = scalar_lea.sflag [#allocation6], %s572
        %s574 = sand.u32 %s128, 1
        %s575 = smul.addr %s574, 16
        %s576 = scalar_lea.vmem [#allocation7], %s575
        %p577 = pneg %p141
        %p578 = pneg %p138
        %p579 = pneg %p162
        %p580 = pneg %p159
        %p581 = pneg %p183
        %p582 = pneg %p180
        %p583 = pneg %p204
        %p584 = pneg %p201
        %p585 = pneg %p225
        %p586 = pneg %p222
        %p587 = pneg %p246
        %p588 = pneg %p243
        %p589 = pneg %p267
        %p590 = pneg %p264
        %p591 = pneg %p288
        %p592 = pneg %p285
        %p593 = pneg %p309
        %p594 = pneg %p306
        %p595 = pneg %p330
        %p596 = pneg %p327
        %p597 = pneg %p358
        %p598 = pneg %p355
        %s599 = sand.u32 %s345, 1
        %s600 = scalar_lea.sflag [#allocation4], %s599
        %s601 = sand.u32 %s345, 1
        %s602 = smul.addr %s601, 128
        %s603 = scalar_lea.vmem [#allocation13], %s602
        %s604 = smul.u32 %s39, 8
        %s605 = ssub.s32 %s604, 1
        %p606 = scmp.gt.s32.totalorder %s605, 0
        %s607 = scalar_select %p606, %s605, 0
        %s608 = smul.u32 8, %s39
        %s609 = smul.u32 %s39, 8
        %s610 = sadd.s32 %s609, 8
        %p611 = scmp.lt.s32.totalorder %s610, 15
        %s612 = scalar_select %p611, %s610, 15
        %s613 = smul.u32 8, %s39
        %v614 = vld [vmem:[%s523] sm:$0xff]
        %v615 = vld [vmem:[%s523 + $0x8] sm:$0xff]
        %v616 = vld [vmem:[%s532] sm:$0xff]
        %v617 = vld [vmem:[%s532 + $0x8] sm:$0xff]
        %v618 = vld [vmem:[%s532 + $0x10] sm:$0xff]
        %v619 = vld [vmem:[%s532 + $0x18] sm:$0xff]
        %v620 = vld [vmem:[%s532 + $0x20] sm:$0xff]
        %v621 = vld [vmem:[%s532 + $0x28] sm:$0xff]
        %v622 = vld [vmem:[%s532 + $0x30] sm:$0xff]
        %v623 = vld [vmem:[%s532 + $0x38] sm:$0xff]
        %v624 = vld [vmem:[%s532 + $0x40] sm:$0xff]
        %v625 = vld [vmem:[%s532 + $0x48] sm:$0xff]
        %v626 = vld [vmem:[%s532 + $0x50] sm:$0xff]
        %v627 = vld [vmem:[%s532 + $0x58] sm:$0xff]
        %v628 = vld [vmem:[%s532 + $0x60] sm:$0xff]
        %v629 = vld [vmem:[%s532 + $0x68] sm:$0xff]
        %v630 = vld [vmem:[%s532 + $0x70] sm:$0xff]
        %v631 = vld [vmem:[%s532 + $0x78] sm:$0xff]
        %v632 = vld [vmem:[%s541] sm:$0xff]
        %v633 = vld [vmem:[%s541 + $0x8] sm:$0xff]
        %v634 = vld [vmem:[#allocation8] sm:$0xff]
        %v635 = vld [vmem:[#allocation8 + $0x8] sm:$0xff]
        %v636 = vld [vmem:[#allocation8 + $0x10] sm:$0xff]
        %v637 = vld [vmem:[#allocation8 + $0x18] sm:$0xff]
        %v638 = vld [vmem:[#allocation8 + $0x20] sm:$0xff]
        %v639 = vld [vmem:[#allocation8 + $0x28] sm:$0xff]
        %v640 = vld [vmem:[#allocation8 + $0x30] sm:$0xff]
        %v641 = vld [vmem:[#allocation8 + $0x38] sm:$0xff]
        %v642 = vld [vmem:[#allocation8 + $0x40] sm:$0xff]
        %v643 = vld [vmem:[#allocation8 + $0x48] sm:$0xff]
        %v644 = vld [vmem:[#allocation8 + $0x50] sm:$0xff]
        %v645 = vld [vmem:[#allocation8 + $0x58] sm:$0xff]
        %v646 = vld [vmem:[#allocation8 + $0x60] sm:$0xff]
        %v647 = vld [vmem:[#allocation8 + $0x68] sm:$0xff]
        %v648 = vld [vmem:[#allocation8 + $0x70] sm:$0xff]
        %v649 = vld [vmem:[#allocation8 + $0x78] sm:$0xff]
        %650 = vmatprep.subr.mxu0 0.0
        %651 = vmatpush1.msra.mxu0 %v634
        %652 = vmatprep.subr.mxu0 0.0
        %653 = vmatpush1.msra.mxu0 %v635
        %654 = vmatprep.subr.mxu0 0.0
        %655 = vmatpush1.msra.mxu0 %v636
        %656 = vmatprep.subr.mxu0 0.0
        %657 = vmatpush1.msra.mxu0 %v637
        %658 = vmatprep.subr.mxu0 0.0
        %659 = vmatpush1.msra.mxu0 %v638
        %660 = vmatprep.subr.mxu0 0.0
        %661 = vmatpush1.msra.mxu0 %v639
        %662 = vmatprep.subr.mxu0 0.0
        %663 = vmatpush1.msra.mxu0 %v640
        %664 = vmatprep.subr.mxu0 0.0
        %665 = vmatpush1.msra.mxu0 %v641
        %666 = vmatprep.subr.mxu0 0.0
        %667 = vmatpush1.msra.mxu0 %v642
        %668 = vmatprep.subr.mxu0 0.0
        %669 = vmatpush1.msra.mxu0 %v643
        %670 = vmatprep.subr.mxu0 0.0
        %671 = vmatpush1.msra.mxu0 %v644
        %672 = vmatprep.subr.mxu0 0.0
        %673 = vmatpush1.msra.mxu0 %v645
        %674 = vmatprep.subr.mxu0 0.0
        %675 = vmatpush1.msra.mxu0 %v646
        %676 = vmatprep.subr.mxu0 0.0
        %677 = vmatpush1.msra.mxu0 %v647
        %678 = vmatprep.subr.mxu0 0.0
        %679 = vmatpush1.msra.mxu0 %v648
        %680 = vmatprep.subr.mxu0 0.0
        %681 = vmatpush1.msra.mxu0 %v649
        %682 = vmatprep.subr.mxu0 0.0
        %683 = vmatpush1.msra.mxu0 0.0
        %684 = vmatprep.subr.mxu0 0.0
        %685 = vmatpush1.msra.mxu0 0.0
        %686 = vmatprep.subr.mxu0 0.0
        %687 = vmatpush1.msra.mxu0 0.0
        %688 = vmatprep.subr.mxu0 0.0
        %689 = vmatpush1.msra.mxu0 0.0
        %690 = vmatprep.subr.mxu0 0.0
        %691 = vmatpush1.msra.mxu0 0.0
        %692 = vmatprep.subr.mxu0 0.0
        %693 = vmatpush1.msra.mxu0 0.0
        %694 = vmatprep.subr.mxu0 0.0
        %695 = vmatpush1.msra.mxu0 0.0
        %696 = vmatprep.subr.mxu0 0.0
        %697 = vmatpush1.msra.mxu0 0.0
        %698 = vmatprep.subr.mxu0 0.0
        %699 = vmatpush1.msra.mxu0 0.0
        %700 = vmatprep.subr.mxu0 0.0
        %701 = vmatpush1.msra.mxu0 0.0
        %702 = vmatprep.subr.mxu0 0.0
        %703 = vmatpush1.msra.mxu0 0.0
        %704 = vmatprep.subr.mxu0 0.0
        %705 = vmatpush1.msra.mxu0 0.0
        %706 = vmatprep.subr.mxu0 0.0
        %707 = vmatpush1.msra.mxu0 0.0
        %708 = vmatprep.subr.mxu0 0.0
        %709 = vmatpush1.msra.mxu0 0.0
        %710 = vmatprep.subr.mxu0 0.0
        %711 = vmatpush1.msra.mxu0 0.0
        %712 = vmatprep.subr.mxu0 0.0
        %713 = vmatpush1.msra.mxu0 0.0
        %714 = vmatprep.mubr.f32.mxu0 0.0
        %715 = vmatmul.mubr.f32.gmra.mrb[0].mxu0 %v614
        %v716 = vpop.f32.mrb[0].mxu0
        %v717 = vadd.f32 0.0, %v716
        %v718 = vpop.f32.mrb[0].mxu0
        %719 = vmatprep.mubr.f32.mxu0 0.0
        %720 = vmatmul.mubr.f32.gmra.mrb[0].mxu0 %v615
        %v721 = vpop.f32.mrb[0].mxu0
        %v722 = vadd.f32 0.0, %v721
        %v723 = vpop.f32.mrb[0].mxu0
        %724 = vmatprep.mubr.f32.mxu0 0.0
        %725 = vmatmul.mubr.f32.gmra.mrb[0].mxu0 %v616
        %v726 = vpop.f32.mrb[0].mxu0
        %v727 = vadd.f32 0.0, %v726
        %v728 = vpop.f32.mrb[0].mxu0
        %729 = vmatprep.mubr.f32.mxu0 0.0
        %730 = vmatmul.mubr.f32.gmra.mrb[0].mxu0 %v617
        %v731 = vpop.f32.mrb[0].mxu0
        %v732 = vadd.f32 0.0, %v731
        %v733 = vpop.f32.mrb[0].mxu0
        %734 = vmatprep.mubr.f32.mxu0 0.0
        %735 = vmatmul.mubr.f32.gmra.mrb[0].mxu0 %v618
        %v736 = vpop.f32.mrb[0].mxu0
        %v737 = vadd.f32 0.0, %v736
        %v738 = vpop.f32.mrb[0].mxu0
        %739 = vmatprep.mubr.f32.mxu0 0.0
        %740 = vmatmul.mubr.f32.gmra.mrb[0].mxu0 %v619
        %v741 = vpop.f32.mrb[0].mxu0
        %v742 = vadd.f32 0.0, %v741
        %v743 = vpop.f32.mrb[0].mxu0
        %744 = vmatprep.mubr.f32.mxu0 0.0
        %745 = vmatmul.mubr.f32.gmra.mrb[0].mxu0 %v620
        %v746 = vpop.f32.mrb[0].mxu0
        %v747 = vadd.f32 0.0, %v746
        %v748 = vpop.f32.mrb[0].mxu0
        %749 = vmatprep.mubr.f32.mxu0 0.0
        %750 = vmatmul.mubr.f32.gmra.mrb[0].mxu0 %v621
        %v751 = vpop.f32.mrb[0].mxu0
        %v752 = vadd.f32 0.0, %v751
        %v753 = vpop.f32.mrb[0].mxu0
        %754 = vmatprep.mubr.f32.mxu0 0.0
        %755 = vmatmul.mubr.f32.gmra.mrb[0].mxu0 %v622
        %v756 = vpop.f32.mrb[0].mxu0
        %v757 = vadd.f32 0.0, %v756
        %v758 = vpop.f32.mrb[0].mxu0
        %759 = vmatprep.mubr.f32.mxu0 0.0
        %760 = vmatmul.mubr.f32.gmra.mrb[0].mxu0 %v623
        %v761 = vpop.f32.mrb[0].mxu0
        %v762 = vadd.f32 0.0, %v761
        %v763 = vpop.f32.mrb[0].mxu0
        %764 = vmatprep.mubr.f32.mxu0 0.0
        %765 = vmatmul.mubr.f32.gmra.mrb[0].mxu0 %v624
        %v766 = vpop.f32.mrb[0].mxu0
        %v767 = vadd.f32 0.0, %v766
        %v768 = vpop.f32.mrb[0].mxu0
        %769 = vmatprep.mubr.f32.mxu0 0.0
        %770 = vmatmul.mubr.f32.gmra.mrb[0].mxu0 %v625
        %v771 = vpop.f32.mrb[0].mxu0
        %v772 = vadd.f32 0.0, %v771
        %v773 = vpop.f32.mrb[0].mxu0
        %774 = vmatprep.mubr.f32.mxu0 0.0
        %775 = vmatmul.mubr.f32.gmra.mrb[0].mxu0 %v626
        %v776 = vpop.f32.mrb[0].mxu0
        %v777 = vadd.f32 0.0, %v776
        %v778 = vpop.f32.mrb[0].mxu0
        %779 = vmatprep.mubr.f32.mxu0 0.0
        %780 = vmatmul.mubr.f32.gmra.mrb[0].mxu0 %v627
        %v781 = vpop.f32.mrb[0].mxu0
        %v782 = vadd.f32 0.0, %v781
        %v783 = vpop.f32.mrb[0].mxu0
        %784 = vmatprep.mubr.f32.mxu0 0.0
        %785 = vmatmul.mubr.f32.gmra.mrb[0].mxu0 %v628
        %v786 = vpop.f32.mrb[0].mxu0
        %v787 = vadd.f32 0.0, %v786
        %v788 = vpop.f32.mrb[0].mxu0
        %789 = vmatprep.mubr.f32.mxu0 0.0
        %790 = vmatmul.mubr.f32.gmra.mrb[0].mxu0 %v629
        %v791 = vpop.f32.mrb[0].mxu0
        %v792 = vadd.f32 0.0, %v791
        %v793 = vpop.f32.mrb[0].mxu0
        %794 = vmatprep.mubr.f32.mxu0 0.0
        %795 = vmatmul.mubr.f32.gmra.mrb[0].mxu0 %v630
        %v796 = vpop.f32.mrb[0].mxu0
        %v797 = vadd.f32 0.0, %v796
        %v798 = vpop.f32.mrb[0].mxu0
        %799 = vmatprep.mubr.f32.mxu0 0.0
        %800 = vmatmul.mubr.f32.gmra.mrb[0].mxu0 %v631
        %v801 = vpop.f32.mrb[0].mxu0
        %v802 = vadd.f32 0.0, %v801
        %v803 = vpop.f32.mrb[0].mxu0
        %804 = vmatprep.mubr.f32.mxu0 0.0
        %805 = vmatmul.mubr.f32.gmra.mrb[0].mxu0 %v632
        %v806 = vpop.f32.mrb[0].mxu0
        %v807 = vadd.f32 0.0, %v806
        %v808 = vpop.f32.mrb[0].mxu0
        %809 = vmatprep.mubr.f32.mxu0 0.0
        %810 = vmatmul.mubr.f32.gmra.mrb[0].mxu0 %v633
        %v811 = vpop.f32.mrb[0].mxu0
        %v812 = vadd.f32 0.0, %v811
        %v813 = vpop.f32.mrb[0].mxu0
        %814 = vdwg.mxu0
        %v815 = vld [vmem:[%s4] sm:$0x1]
        %v817 = vlaneseq
        %v818 = vshrl.u32 %v817, 7
        %v819 = vsub.s32 0, %v818
        %v820 = vrot.slane %v815, %v819
        %v822 = vmul.f32 %v717, %v820
        %v823 = vmul.f32 %v722, %v820
        %v824 = vmul.f32 %v727, %v820
        %v825 = vmul.f32 %v732, %v820
        %v826 = vmul.f32 %v737, %v820
        %v827 = vmul.f32 %v742, %v820
        %v828 = vmul.f32 %v747, %v820
        %v829 = vmul.f32 %v752, %v820
        %v830 = vmul.f32 %v757, %v820
        %v831 = vmul.f32 %v762, %v820
        %v832 = vmul.f32 %v767, %v820
        %v833 = vmul.f32 %v772, %v820
        %v834 = vmul.f32 %v777, %v820
        %v835 = vmul.f32 %v782, %v820
        %v836 = vmul.f32 %v787, %v820
        %v837 = vmul.f32 %v792, %v820
        %v838 = vmul.f32 %v797, %v820
        %v839 = vmul.f32 %v802, %v820
        %v840 = vmul.f32 %v807, %v820
        %v841 = vmul.f32 %v812, %v820
        %v842 = vld [vmem:[%s5] sm:$0x1]
        %v844 = vlaneseq
        %v845 = vshrl.u32 %v844, 7
        %v846 = vsub.s32 0, %v845
        %v847 = vrot.slane %v842, %v846
        %v849 = vadd.f32 %v822, %v847
        %v850 = vadd.f32 %v823, %v847
        %v851 = vadd.f32 %v824, %v847
        %v852 = vadd.f32 %v825, %v847
        %v853 = vadd.f32 %v826, %v847
        %v854 = vadd.f32 %v827, %v847
        %v855 = vadd.f32 %v828, %v847
        %v856 = vadd.f32 %v829, %v847
        %v857 = vadd.f32 %v830, %v847
        %v858 = vadd.f32 %v831, %v847
        %v859 = vadd.f32 %v832, %v847
        %v860 = vadd.f32 %v833, %v847
        %v861 = vadd.f32 %v834, %v847
        %v862 = vadd.f32 %v835, %v847
        %v863 = vadd.f32 %v836, %v847
        %v864 = vadd.f32 %v837, %v847
        %v865 = vadd.f32 %v838, %v847
        %v866 = vadd.f32 %v839, %v847
        %v867 = vadd.f32 %v840, %v847
        %v868 = vadd.f32 %v841, %v847
        %v869 = vmax.f32 %v849, 0.0
        %v870 = vmax.f32 %v850, 0.0
        %v871 = vmax.f32 %v851, 0.0
        %v872 = vmax.f32 %v852, 0.0
        %v873 = vmax.f32 %v853, 0.0
        %v874 = vmax.f32 %v854, 0.0
        %v875 = vmax.f32 %v855, 0.0
        %v876 = vmax.f32 %v856, 0.0
        %v877 = vmax.f32 %v857, 0.0
        %v878 = vmax.f32 %v858, 0.0
        %v879 = vmax.f32 %v859, 0.0
        %v880 = vmax.f32 %v860, 0.0
        %v881 = vmax.f32 %v861, 0.0
        %v882 = vmax.f32 %v862, 0.0
        %v883 = vmax.f32 %v863, 0.0
        %v884 = vmax.f32 %v864, 0.0
        %v885 = vmax.f32 %v865, 0.0
        %v886 = vmax.f32 %v866, 0.0
        %v887 = vmax.f32 %v867, 0.0
        %v888 = vmax.f32 %v868, 0.0
        %v889 = vlaneseq
        %v890 = vshrl.u32 %v889, 7
        %v891 = vadd.s32 %v890, 8
        %v892 = vadd.s32 %v890, 16
        %v893 = vadd.s32 %v890, 24
        %v894 = vadd.s32 %v890, 32
        %v895 = vadd.s32 %v890, 40
        %v896 = vadd.s32 %v890, 48
        %v897 = vadd.s32 %v890, 56
        %v898 = vadd.s32 %v890, 64
        %v899 = vadd.s32 %v890, 72
        %v900 = vadd.s32 %v890, 80
        %v901 = vadd.s32 %v890, 88
        %v902 = vadd.s32 %v890, 96
        %v903 = vadd.s32 %v890, 104
        %v904 = vadd.s32 %v890, 112
        %v905 = vadd.s32 %v890, 120
        %v906 = vadd.s32 %v890, 128
        %v907 = vadd.s32 %v890, 136
        %v908 = vadd.s32 %v890, 144
        %v909 = vadd.s32 %v890, 152
        %p910 = scmp.gt.s32.totalorder %s39, 0
        %vm911 = vcmp.ge.s32.totalorder %v890, 16
        %vm912 = vcmp.ge.s32.totalorder %v891, 16
        %vm913 = vcmp.ge.s32.totalorder %v892, 16
        %vm914 = vcmp.ge.s32.totalorder %v893, 16
        %vm915 = vcmp.ge.s32.totalorder %v894, 16
        %vm916 = vcmp.ge.s32.totalorder %v895, 16
        %vm917 = vcmp.ge.s32.totalorder %v896, 16
        %vm918 = vcmp.ge.s32.totalorder %v897, 16
        %vm919 = vcmp.ge.s32.totalorder %v898, 16
        %vm920 = vcmp.ge.s32.totalorder %v899, 16
        %vm921 = vcmp.ge.s32.totalorder %v900, 16
        %vm922 = vcmp.ge.s32.totalorder %v901, 16
        %vm923 = vcmp.ge.s32.totalorder %v902, 16
        %vm924 = vcmp.ge.s32.totalorder %v903, 16
        %vm925 = vcmp.ge.s32.totalorder %v904, 16
        %vm926 = vcmp.ge.s32.totalorder %v905, 16
        %vm927 = vcmp.ge.s32.totalorder %v906, 16
        %vm928 = vcmp.ge.s32.totalorder %v907, 16
        %vm929 = vcmp.ge.s32.totalorder %v908, 16
        %vm930 = vcmp.ge.s32.totalorder %v909, 16
        %s931 = scalar_select %p910, 1, 0
        %v932 = vstv %s931
        %vm933 = vcmp.eq.s32.totalorder %v932, 1
        %vm934 = vmor %vm933, %vm911
        %vm935 = vmor %vm933, %vm912
        %vm936 = vmor %vm933, %vm913
        %vm937 = vmor %vm933, %vm914
        %vm938 = vmor %vm933, %vm915
        %vm939 = vmor %vm933, %vm916
        %vm940 = vmor %vm933, %vm917
        %vm941 = vmor %vm933, %vm918
        %vm942 = vmor %vm933, %vm919
        %vm943 = vmor %vm933, %vm920
        %vm944 = vmor %vm933, %vm921
        %vm945 = vmor %vm933, %vm922
        %vm946 = vmor %vm933, %vm923
        %vm947 = vmor %vm933, %vm924
        %vm948 = vmor %vm933, %vm925
        %vm949 = vmor %vm933, %vm926
        %vm950 = vmor %vm933, %vm927
        %vm951 = vmor %vm933, %vm928
        %vm952 = vmor %vm933, %vm929
        %vm953 = vmor %vm933, %vm930
        %p954 = scmp.lt.s32.totalorder %s39, 1
        %vm955 = vcmp.lt.s32.totalorder %v890, 144
        %vm956 = vcmp.lt.s32.totalorder %v891, 144
        %vm957 = vcmp.lt.s32.totalorder %v892, 144
        %vm958 = vcmp.lt.s32.totalorder %v893, 144
        %vm959 = vcmp.lt.s32.totalorder %v894, 144
        %vm960 = vcmp.lt.s32.totalorder %v895, 144
        %vm961 = vcmp.lt.s32.totalorder %v896, 144
        %vm962 = vcmp.lt.s32.totalorder %v897, 144
        %vm963 = vcmp.lt.s32.totalorder %v898, 144
        %vm964 = vcmp.lt.s32.totalorder %v899, 144
        %vm965 = vcmp.lt.s32.totalorder %v900, 144
        %vm966 = vcmp.lt.s32.totalorder %v901, 144
        %vm967 = vcmp.lt.s32.totalorder %v902, 144
        %vm968 = vcmp.lt.s32.totalorder %v903, 144
        %vm969 = vcmp.lt.s32.totalorder %v904, 144
        %vm970 = vcmp.lt.s32.totalorder %v905, 144
        %vm971 = vcmp.lt.s32.totalorder %v906, 144
        %vm972 = vcmp.lt.s32.totalorder %v907, 144
        %vm973 = vcmp.lt.s32.totalorder %v908, 144
        %vm974 = vcmp.lt.s32.totalorder %v909, 144
        %s975 = scalar_select %p954, 1, 0
        %v976 = vstv %s975
        %vm977 = vcmp.eq.s32.totalorder %v976, 1
        %vm978 = vmor %vm977, %vm955
        %vm979 = vmor %vm977, %vm956
        %vm980 = vmor %vm977, %vm957
        %vm981 = vmor %vm977, %vm958
        %vm982 = vmor %vm977, %vm959
        %vm983 = vmor %vm977, %vm960
        %vm984 = vmor %vm977, %vm961
        %vm985 = vmor %vm977, %vm962
        %vm986 = vmor %vm977, %vm963
        %vm987 = vmor %vm977, %vm964
        %vm988 = vmor %vm977, %vm965
        %vm989 = vmor %vm977, %vm966
        %vm990 = vmor %vm977, %vm967
        %vm991 = vmor %vm977, %vm968
        %vm992 = vmor %vm977, %vm969
        %vm993 = vmor %vm977, %vm970
        %vm994 = vmor %vm977, %vm971
        %vm995 = vmor %vm977, %vm972
        %vm996 = vmor %vm977, %vm973
        %vm997 = vmor %vm977, %vm974
        %vm998 = vmand %vm934, %vm978
        %vm999 = vmand %vm935, %vm979
        %vm1000 = vmand %vm936, %vm980
        %vm1001 = vmand %vm937, %vm981
        %vm1002 = vmand %vm938, %vm982
        %vm1003 = vmand %vm939, %vm983
        %vm1004 = vmand %vm940, %vm984
        %vm1005 = vmand %vm941, %vm985
        %vm1006 = vmand %vm942, %vm986
        %vm1007 = vmand %vm943, %vm987
        %vm1008 = vmand %vm944, %vm988
        %vm1009 = vmand %vm945, %vm989
        %vm1010 = vmand %vm946, %vm990
        %vm1011 = vmand %vm947, %vm991
        %vm1012 = vmand %vm948, %vm992
        %vm1013 = vmand %vm949, %vm993
        %vm1014 = vmand %vm950, %vm994
        %vm1015 = vmand %vm951, %vm995
        %vm1016 = vmand %vm952, %vm996
        %vm1017 = vmand %vm953, %vm997
        %v1018 = vsel %vm998, 1, 0
        %v1019 = vsel %vm999, 1, 0
        %v1020 = vsel %vm1000, 1, 0
        %v1021 = vsel %vm1001, 1, 0
        %v1022 = vsel %vm1002, 1, 0
        %v1023 = vsel %vm1003, 1, 0
        %v1024 = vsel %vm1004, 1, 0
        %v1025 = vsel %vm1005, 1, 0
        %v1026 = vsel %vm1006, 1, 0
        %v1027 = vsel %vm1007, 1, 0
        %v1028 = vsel %vm1008, 1, 0
        %v1029 = vsel %vm1009, 1, 0
        %v1030 = vsel %vm1010, 1, 0
        %v1031 = vsel %vm1011, 1, 0
        %v1032 = vsel %vm1012, 1, 0
        %v1033 = vsel %vm1013, 1, 0
        %v1034 = vsel %vm1014, 1, 0
        %v1035 = vsel %vm1015, 1, 0
        %v1036 = vsel %vm1016, 1, 0
        %v1037 = vsel %vm1017, 1, 0
        %vm1038 = vcmp.eq.s32.totalorder %v1018, 1
        %vm1039 = vcmp.eq.s32.totalorder %v1019, 1
        %vm1040 = vcmp.eq.s32.totalorder %v1020, 1
        %vm1041 = vcmp.eq.s32.totalorder %v1021, 1
        %vm1042 = vcmp.eq.s32.totalorder %v1022, 1
        %vm1043 = vcmp.eq.s32.totalorder %v1023, 1
        %vm1044 = vcmp.eq.s32.totalorder %v1024, 1
        %vm1045 = vcmp.eq.s32.totalorder %v1025, 1
        %vm1046 = vcmp.eq.s32.totalorder %v1026, 1
        %vm1047 = vcmp.eq.s32.totalorder %v1027, 1
        %vm1048 = vcmp.eq.s32.totalorder %v1028, 1
        %vm1049 = vcmp.eq.s32.totalorder %v1029, 1
        %vm1050 = vcmp.eq.s32.totalorder %v1030, 1
        %vm1051 = vcmp.eq.s32.totalorder %v1031, 1
        %vm1052 = vcmp.eq.s32.totalorder %v1032, 1
        %vm1053 = vcmp.eq.s32.totalorder %v1033, 1
        %vm1054 = vcmp.eq.s32.totalorder %v1034, 1
        %vm1055 = vcmp.eq.s32.totalorder %v1035, 1
        %vm1056 = vcmp.eq.s32.totalorder %v1036, 1
        %vm1057 = vcmp.eq.s32.totalorder %v1037, 1
        %v1058 = vsel %vm1038, %v869, 0.0
        %v1059 = vsel %vm1039, %v870, 0.0
        %v1060 = vsel %vm1040, %v871, 0.0
        %v1061 = vsel %vm1041, %v872, 0.0
        %v1062 = vsel %vm1042, %v873, 0.0
        %v1063 = vsel %vm1043, %v874, 0.0
        %v1064 = vsel %vm1044, %v875, 0.0
        %v1065 = vsel %vm1045, %v876, 0.0
        %v1066 = vsel %vm1046, %v877, 0.0
        %v1067 = vsel %vm1047, %v878, 0.0
        %v1068 = vsel %vm1048, %v879, 0.0
        %v1069 = vsel %vm1049, %v880, 0.0
        %v1070 = vsel %vm1050, %v881, 0.0
        %v1071 = vsel %vm1051, %v882, 0.0
        %v1072 = vsel %vm1052, %v883, 0.0
        %v1073 = vsel %vm1053, %v884, 0.0
        %v1074 = vsel %vm1054, %v885, 0.0
        %v1075 = vsel %vm1055, %v886, 0.0
        %v1076 = vsel %vm1056, %v887, 0.0
        %v1077 = vsel %vm1057, %v888, 0.0
        %vm1078 = vcmp.lt.s32.totalorder %v890, 0
        %v1079 = vsub.s32 0, %v890
        %v1080 = vsel %vm1078, %v1079, %v890
        %v1081 = vshrl.u32 %v1080, 4
        %v1082 = vand.u32 %v1080, 15
        %v1083 = vsub.s32 0, %v1082
        %v1084 = vsel %vm1078, %v1083, %v1082
        %vm1085 = vcmp.lt.s32.totalorder %v891, 0
        %v1086 = vsub.s32 0, %v891
        %v1087 = vsel %vm1085, %v1086, %v891
        %v1088 = vshrl.u32 %v1087, 4
        %v1089 = vand.u32 %v1087, 15
        %v1090 = vsub.s32 0, %v1089
        %v1091 = vsel %vm1085, %v1090, %v1089
        %vm1092 = vcmp.lt.s32.totalorder %v892, 0
        %v1093 = vsub.s32 0, %v892
        %v1094 = vsel %vm1092, %v1093, %v892
        %v1095 = vshrl.u32 %v1094, 4
        %v1096 = vand.u32 %v1094, 15
        %v1097 = vsub.s32 0, %v1096
        %v1098 = vsel %vm1092, %v1097, %v1096
        %vm1099 = vcmp.lt.s32.totalorder %v893, 0
        %v1100 = vsub.s32 0, %v893
        %v1101 = vsel %vm1099, %v1100, %v893
        %v1102 = vshrl.u32 %v1101, 4
        %v1103 = vand.u32 %v1101, 15
        %v1104 = vsub.s32 0, %v1103
        %v1105 = vsel %vm1099, %v1104, %v1103
        %vm1106 = vcmp.lt.s32.totalorder %v894, 0
        %v1107 = vsub.s32 0, %v894
        %v1108 = vsel %vm1106, %v1107, %v894
        %v1109 = vshrl.u32 %v1108, 4
        %v1110 = vand.u32 %v1108, 15
        %v1111 = vsub.s32 0, %v1110
        %v1112 = vsel %vm1106, %v1111, %v1110
        %vm1113 = vcmp.lt.s32.totalorder %v895, 0
        %v1114 = vsub.s32 0, %v895
        %v1115 = vsel %vm1113, %v1114, %v895
        %v1116 = vshrl.u32 %v1115, 4
        %v1117 = vand.u32 %v1115, 15
        %v1118 = vsub.s32 0, %v1117
        %v1119 = vsel %vm1113, %v1118, %v1117
        %vm1120 = vcmp.lt.s32.totalorder %v896, 0
        %v1121 = vsub.s32 0, %v896
        %v1122 = vsel %vm1120, %v1121, %v896
        %v1123 = vshrl.u32 %v1122, 4
        %v1124 = vand.u32 %v1122, 15
        %v1125 = vsub.s32 0, %v1124
        %v1126 = vsel %vm1120, %v1125, %v1124
        %vm1127 = vcmp.lt.s32.totalorder %v897, 0
        %v1128 = vsub.s32 0, %v897
        %v1129 = vsel %vm1127, %v1128, %v897
        %v1130 = vshrl.u32 %v1129, 4
        %v1131 = vand.u32 %v1129, 15
        %v1132 = vsub.s32 0, %v1131
        %v1133 = vsel %vm1127, %v1132, %v1131
        %vm1134 = vcmp.lt.s32.totalorder %v898, 0
        %v1135 = vsub.s32 0, %v898
        %v1136 = vsel %vm1134, %v1135, %v898
        %v1137 = vshrl.u32 %v1136, 4
        %v1138 = vand.u32 %v1136, 15
        %v1139 = vsub.s32 0, %v1138
        %v1140 = vsel %vm1134, %v1139, %v1138
        %vm1141 = vcmp.lt.s32.totalorder %v899, 0
        %v1142 = vsub.s32 0, %v899
        %v1143 = vsel %vm1141, %v1142, %v899
        %v1144 = vshrl.u32 %v1143, 4
        %v1145 = vand.u32 %v1143, 15
        %v1146 = vsub.s32 0, %v1145
        %v1147 = vsel %vm1141, %v1146, %v1145
        %vm1148 = vcmp.lt.s32.totalorder %v900, 0
        %v1149 = vsub.s32 0, %v900
        %v1150 = vsel %vm1148, %v1149, %v900
        %v1151 = vshrl.u32 %v1150, 4
        %v1152 = vand.u32 %v1150, 15
        %v1153 = vsub.s32 0, %v1152
        %v1154 = vsel %vm1148, %v1153, %v1152
        %vm1155 = vcmp.lt.s32.totalorder %v901, 0
        %v1156 = vsub.s32 0, %v901
        %v1157 = vsel %vm1155, %v1156, %v901
        %v1158 = vshrl.u32 %v1157, 4
        %v1159 = vand.u32 %v1157, 15
        %v1160 = vsub.s32 0, %v1159
        %v1161 = vsel %vm1155, %v1160, %v1159
        %vm1162 = vcmp.lt.s32.totalorder %v902, 0
        %v1163 = vsub.s32 0, %v902
        %v1164 = vsel %vm1162, %v1163, %v902
        %v1165 = vshrl.u32 %v1164, 4
        %v1166 = vand.u32 %v1164, 15
        %v1167 = vsub.s32 0, %v1166
        %v1168 = vsel %vm1162, %v1167, %v1166
        %vm1169 = vcmp.lt.s32.totalorder %v903, 0
        %v1170 = vsub.s32 0, %v903
        %v1171 = vsel %vm1169, %v1170, %v903
        %v1172 = vshrl.u32 %v1171, 4
        %v1173 = vand.u32 %v1171, 15
        %v1174 = vsub.s32 0, %v1173
        %v1175 = vsel %vm1169, %v1174, %v1173
        %vm1176 = vcmp.lt.s32.totalorder %v904, 0
        %v1177 = vsub.s32 0, %v904
        %v1178 = vsel %vm1176, %v1177, %v904
        %v1179 = vshrl.u32 %v1178, 4
        %v1180 = vand.u32 %v1178, 15
        %v1181 = vsub.s32 0, %v1180
        %v1182 = vsel %vm1176, %v1181, %v1180
        %vm1183 = vcmp.lt.s32.totalorder %v905, 0
        %v1184 = vsub.s32 0, %v905
        %v1185 = vsel %vm1183, %v1184, %v905
        %v1186 = vshrl.u32 %v1185, 4
        %v1187 = vand.u32 %v1185, 15
        %v1188 = vsub.s32 0, %v1187
        %v1189 = vsel %vm1183, %v1188, %v1187
        %vm1190 = vcmp.lt.s32.totalorder %v906, 0
        %v1191 = vsub.s32 0, %v906
        %v1192 = vsel %vm1190, %v1191, %v906
        %v1193 = vshrl.u32 %v1192, 4
        %v1194 = vand.u32 %v1192, 15
        %v1195 = vsub.s32 0, %v1194
        %v1196 = vsel %vm1190, %v1195, %v1194
        %vm1197 = vcmp.lt.s32.totalorder %v907, 0
        %v1198 = vsub.s32 0, %v907
        %v1199 = vsel %vm1197, %v1198, %v907
        %v1200 = vshrl.u32 %v1199, 4
        %v1201 = vand.u32 %v1199, 15
        %v1202 = vsub.s32 0, %v1201
        %v1203 = vsel %vm1197, %v1202, %v1201
        %vm1204 = vcmp.lt.s32.totalorder %v908, 0
        %v1205 = vsub.s32 0, %v908
        %v1206 = vsel %vm1204, %v1205, %v908
        %v1207 = vshrl.u32 %v1206, 4
        %v1208 = vand.u32 %v1206, 15
        %v1209 = vsub.s32 0, %v1208
        %v1210 = vsel %vm1204, %v1209, %v1208
        %vm1211 = vcmp.lt.s32.totalorder %v909, 0
        %v1212 = vsub.s32 0, %v909
        %v1213 = vsel %vm1211, %v1212, %v909
        %v1214 = vshrl.u32 %v1213, 4
        %v1215 = vand.u32 %v1213, 15
        %v1216 = vsub.s32 0, %v1215
        %v1217 = vsel %vm1211, %v1216, %v1215
        %vm1218 = vcmp.ne.s32.totalorder %v1084, 0
        %vm1219 = vcmp.ne.s32.totalorder %v1091, 0
        %vm1220 = vcmp.ne.s32.totalorder %v1098, 0
        %vm1221 = vcmp.ne.s32.totalorder %v1105, 0
        %vm1222 = vcmp.ne.s32.totalorder %v1112, 0
        %vm1223 = vcmp.ne.s32.totalorder %v1119, 0
        %vm1224 = vcmp.ne.s32.totalorder %v1126, 0
        %vm1225 = vcmp.ne.s32.totalorder %v1133, 0
        %vm1226 = vcmp.ne.s32.totalorder %v1140, 0
        %vm1227 = vcmp.ne.s32.totalorder %v1147, 0
        %vm1228 = vcmp.ne.s32.totalorder %v1154, 0
        %vm1229 = vcmp.ne.s32.totalorder %v1161, 0
        %vm1230 = vcmp.ne.s32.totalorder %v1168, 0
        %vm1231 = vcmp.ne.s32.totalorder %v1175, 0
        %vm1232 = vcmp.ne.s32.totalorder %v1182, 0
        %vm1233 = vcmp.ne.s32.totalorder %v1189, 0
        %vm1234 = vcmp.ne.s32.totalorder %v1196, 0
        %vm1235 = vcmp.ne.s32.totalorder %v1203, 0
        %vm1236 = vcmp.ne.s32.totalorder %v1210, 0
        %vm1237 = vcmp.ne.s32.totalorder %v1217, 0
        %vm1238 = vcmp.lt.s32.totalorder %v1084, 0
        %vm1239 = vcmp.lt.s32.totalorder %v1091, 0
        %vm1240 = vcmp.lt.s32.totalorder %v1098, 0
        %vm1241 = vcmp.lt.s32.totalorder %v1105, 0
        %vm1242 = vcmp.lt.s32.totalorder %v1112, 0
        %vm1243 = vcmp.lt.s32.totalorder %v1119, 0
        %vm1244 = vcmp.lt.s32.totalorder %v1126, 0
        %vm1245 = vcmp.lt.s32.totalorder %v1133, 0
        %vm1246 = vcmp.lt.s32.totalorder %v1140, 0
        %vm1247 = vcmp.lt.s32.totalorder %v1147, 0
        %vm1248 = vcmp.lt.s32.totalorder %v1154, 0
        %vm1249 = vcmp.lt.s32.totalorder %v1161, 0
        %vm1250 = vcmp.lt.s32.totalorder %v1168, 0
        %vm1251 = vcmp.lt.s32.totalorder %v1175, 0
        %vm1252 = vcmp.lt.s32.totalorder %v1182, 0
        %vm1253 = vcmp.lt.s32.totalorder %v1189, 0
        %vm1254 = vcmp.lt.s32.totalorder %v1196, 0
        %vm1255 = vcmp.lt.s32.totalorder %v1203, 0
        %vm1256 = vcmp.lt.s32.totalorder %v1210, 0
        %vm1257 = vcmp.lt.s32.totalorder %v1217, 0
        %vm1258 = vmand %vm1238, %vm1218
        %vm1259 = vmand %vm1239, %vm1219
        %vm1260 = vmand %vm1240, %vm1220
        %vm1261 = vmand %vm1241, %vm1221
        %vm1262 = vmand %vm1242, %vm1222
        %vm1263 = vmand %vm1243, %vm1223
        %vm1264 = vmand %vm1244, %vm1224
        %vm1265 = vmand %vm1245, %vm1225
        %vm1266 = vmand %vm1246, %vm1226
        %vm1267 = vmand %vm1247, %vm1227
        %vm1268 = vmand %vm1248, %vm1228
        %vm1269 = vmand %vm1249, %vm1229
        %vm1270 = vmand %vm1250, %vm1230
        %vm1271 = vmand %vm1251, %vm1231
        %vm1272 = vmand %vm1252, %vm1232
        %vm1273 = vmand %vm1253, %vm1233
        %vm1274 = vmand %vm1254, %vm1234
        %vm1275 = vmand %vm1255, %vm1235
        %vm1276 = vmand %vm1256, %vm1236
        %vm1277 = vmand %vm1257, %vm1237
        %v1278 = vadd.s32 %v1084, 16
        %v1279 = vadd.s32 %v1091, 16
        %v1280 = vadd.s32 %v1098, 16
        %v1281 = vadd.s32 %v1105, 16
        %v1282 = vadd.s32 %v1112, 16
        %v1283 = vadd.s32 %v1119, 16
        %v1284 = vadd.s32 %v1126, 16
        %v1285 = vadd.s32 %v1133, 16
        %v1286 = vadd.s32 %v1140, 16
        %v1287 = vadd.s32 %v1147, 16
        %v1288 = vadd.s32 %v1154, 16
        %v1289 = vadd.s32 %v1161, 16
        %v1290 = vadd.s32 %v1168, 16
        %v1291 = vadd.s32 %v1175, 16
        %v1292 = vadd.s32 %v1182, 16
        %v1293 = vadd.s32 %v1189, 16
        %v1294 = vadd.s32 %v1196, 16
        %v1295 = vadd.s32 %v1203, 16
        %v1296 = vadd.s32 %v1210, 16
        %v1297 = vadd.s32 %v1217, 16
        %v1298 = vsel %vm1258, %v1278, %v1084
        %v1299 = vsel %vm1259, %v1279, %v1091
        %v1300 = vsel %vm1260, %v1280, %v1098
        %v1301 = vsel %vm1261, %v1281, %v1105
        %v1302 = vsel %vm1262, %v1282, %v1112
        %v1303 = vsel %vm1263, %v1283, %v1119
        %v1304 = vsel %vm1264, %v1284, %v1126
        %v1305 = vsel %vm1265, %v1285, %v1133
        %v1306 = vsel %vm1266, %v1286, %v1140
        %v1307 = vsel %vm1267, %v1287, %v1147
        %v1308 = vsel %vm1268, %v1288, %v1154
        %v1309 = vsel %vm1269, %v1289, %v1161
        %v1310 = vsel %vm1270, %v1290, %v1168
        %v1311 = vsel %vm1271, %v1291, %v1175
        %v1312 = vsel %vm1272, %v1292, %v1182
        %v1313 = vsel %vm1273, %v1293, %v1189
        %v1314 = vsel %vm1274, %v1294, %v1196
        %v1315 = vsel %vm1275, %v1295, %v1203
        %v1316 = vsel %vm1276, %v1296, %v1210
        %v1317 = vsel %vm1277, %v1297, %v1217
        %vm1318 = vcmp.gt.s32.totalorder %v1298, 0
        %vm1319 = vcmp.gt.s32.totalorder %v1299, 0
        %vm1320 = vcmp.gt.s32.totalorder %v1300, 0
        %vm1321 = vcmp.gt.s32.totalorder %v1301, 0
        %vm1322 = vcmp.gt.s32.totalorder %v1302, 0
        %vm1323 = vcmp.gt.s32.totalorder %v1303, 0
        %vm1324 = vcmp.gt.s32.totalorder %v1304, 0
        %vm1325 = vcmp.gt.s32.totalorder %v1305, 0
        %vm1326 = vcmp.gt.s32.totalorder %v1306, 0
        %vm1327 = vcmp.gt.s32.totalorder %v1307, 0
        %vm1328 = vcmp.gt.s32.totalorder %v1308, 0
        %vm1329 = vcmp.gt.s32.totalorder %v1309, 0
        %vm1330 = vcmp.gt.s32.totalorder %v1310, 0
        %vm1331 = vcmp.gt.s32.totalorder %v1311, 0
        %vm1332 = vcmp.gt.s32.totalorder %v1312, 0
        %vm1333 = vcmp.gt.s32.totalorder %v1313, 0
        %vm1334 = vcmp.gt.s32.totalorder %v1314, 0
        %vm1335 = vcmp.gt.s32.totalorder %v1315, 0
        %vm1336 = vcmp.gt.s32.totalorder %v1316, 0
        %vm1337 = vcmp.gt.s32.totalorder %v1317, 0
        %vm1358 = vcmask 1040384
        %v1359 = vrot.slane %v1058, 7
        %v1360 = vrot.slane %v1059, 7
        %v1361 = vsel %vm1358, %v1359, %v1360
        %v1362 = vrot.slane %v1060, 7
        %v1363 = vsel %vm1358, %v1360, %v1362
        %v1364 = vrot.slane %v1061, 7
        %v1365 = vsel %vm1358, %v1362, %v1364
        %v1366 = vrot.slane %v1062, 7
        %v1367 = vsel %vm1358, %v1364, %v1366
        %v1368 = vrot.slane %v1063, 7
        %v1369 = vsel %vm1358, %v1366, %v1368
        %v1370 = vrot.slane %v1064, 7
        %v1371 = vsel %vm1358, %v1368, %v1370
        %v1372 = vrot.slane %v1065, 7
        %v1373 = vsel %vm1358, %v1370, %v1372
        %v1374 = vrot.slane %v1066, 7
        %v1375 = vsel %vm1358, %v1372, %v1374
        %v1376 = vrot.slane %v1067, 7
        %v1377 = vsel %vm1358, %v1374, %v1376
        %v1378 = vrot.slane %v1068, 7
        %v1379 = vsel %vm1358, %v1376, %v1378
        %v1380 = vrot.slane %v1069, 7
        %v1381 = vsel %vm1358, %v1378, %v1380
        %v1382 = vrot.slane %v1070, 7
        %v1383 = vsel %vm1358, %v1380, %v1382
        %v1384 = vrot.slane %v1071, 7
        %v1385 = vsel %vm1358, %v1382, %v1384
        %v1386 = vrot.slane %v1072, 7
        %v1387 = vsel %vm1358, %v1384, %v1386
        %v1388 = vrot.slane %v1073, 7
        %v1389 = vsel %vm1358, %v1386, %v1388
        %v1390 = vrot.slane %v1074, 7
        %v1391 = vsel %vm1358, %v1388, %v1390
        %v1392 = vrot.slane %v1075, 7
        %v1393 = vsel %vm1358, %v1390, %v1392
        %v1394 = vrot.slane %v1076, 7
        %v1395 = vsel %vm1358, %v1392, %v1394
        %v1396 = vrot.slane %v1077, 7
        %v1397 = vsel %vm1358, %v1394, %v1396
        %v1418 = vsel %vm1358, 0.0, %v1359
        %v1419 = vsel %vm1318, 1, 0
        %v1420 = vsel %vm1319, 1, 0
        %v1421 = vsel %vm1320, 1, 0
        %v1422 = vsel %vm1321, 1, 0
        %v1423 = vsel %vm1322, 1, 0
        %v1424 = vsel %vm1323, 1, 0
        %v1425 = vsel %vm1324, 1, 0
        %v1426 = vsel %vm1325, 1, 0
        %v1427 = vsel %vm1326, 1, 0
        %v1428 = vsel %vm1327, 1, 0
        %v1429 = vsel %vm1328, 1, 0
        %v1430 = vsel %vm1329, 1, 0
        %v1431 = vsel %vm1330, 1, 0
        %v1432 = vsel %vm1331, 1, 0
        %v1433 = vsel %vm1332, 1, 0
        %v1434 = vsel %vm1333, 1, 0
        %v1435 = vsel %vm1334, 1, 0
        %v1436 = vsel %vm1335, 1, 0
        %v1437 = vsel %vm1336, 1, 0
        %v1438 = vsel %vm1337, 1, 0
        %vm1439 = vcmp.eq.s32.totalorder %v1419, 1
        %vm1440 = vcmp.eq.s32.totalorder %v1420, 1
        %vm1441 = vcmp.eq.s32.totalorder %v1421, 1
        %vm1442 = vcmp.eq.s32.totalorder %v1422, 1
        %vm1443 = vcmp.eq.s32.totalorder %v1423, 1
        %vm1444 = vcmp.eq.s32.totalorder %v1424, 1
        %vm1445 = vcmp.eq.s32.totalorder %v1425, 1
        %vm1446 = vcmp.eq.s32.totalorder %v1426, 1
        %vm1447 = vcmp.eq.s32.totalorder %v1427, 1
        %vm1448 = vcmp.eq.s32.totalorder %v1428, 1
        %vm1449 = vcmp.eq.s32.totalorder %v1429, 1
        %vm1450 = vcmp.eq.s32.totalorder %v1430, 1
        %vm1451 = vcmp.eq.s32.totalorder %v1431, 1
        %vm1452 = vcmp.eq.s32.totalorder %v1432, 1
        %vm1453 = vcmp.eq.s32.totalorder %v1433, 1
        %vm1454 = vcmp.eq.s32.totalorder %v1434, 1
        %vm1455 = vcmp.eq.s32.totalorder %v1435, 1
        %vm1456 = vcmp.eq.s32.totalorder %v1436, 1
        %vm1457 = vcmp.eq.s32.totalorder %v1437, 1
        %vm1458 = vcmp.eq.s32.totalorder %v1438, 1
        %v1459 = vsel %vm1439, %v1418, 0.0
        %v1460 = vsel %vm1440, %v1361, 0.0
        %v1461 = vsel %vm1441, %v1363, 0.0
        %v1462 = vsel %vm1442, %v1365, 0.0
        %v1463 = vsel %vm1443, %v1367, 0.0
        %v1464 = vsel %vm1444, %v1369, 0.0
        %v1465 = vsel %vm1445, %v1371, 0.0
        %v1466 = vsel %vm1446, %v1373, 0.0
        %v1467 = vsel %vm1447, %v1375, 0.0
        %v1468 = vsel %vm1448, %v1377, 0.0
        %v1469 = vsel %vm1449, %v1379, 0.0
        %v1470 = vsel %vm1450, %v1381, 0.0
        %v1471 = vsel %vm1451, %v1383, 0.0
        %v1472 = vsel %vm1452, %v1385, 0.0
        %v1473 = vsel %vm1453, %v1387, 0.0
        %v1474 = vsel %vm1454, %v1389, 0.0
        %v1475 = vsel %vm1455, %v1391, 0.0
        %v1476 = vsel %vm1456, %v1393, 0.0
        %v1477 = vsel %vm1457, %v1395, 0.0
        %v1478 = vsel %vm1458, %v1397, 0.0
        %vm1479 = vcmp.lt.s32.totalorder %v1298, 15
        %vm1480 = vcmp.lt.s32.totalorder %v1299, 15
        %vm1481 = vcmp.lt.s32.totalorder %v1300, 15
        %vm1482 = vcmp.lt.s32.totalorder %v1301, 15
        %vm1483 = vcmp.lt.s32.totalorder %v1302, 15
        %vm1484 = vcmp.lt.s32.totalorder %v1303, 15
        %vm1485 = vcmp.lt.s32.totalorder %v1304, 15
        %vm1486 = vcmp.lt.s32.totalorder %v1305, 15
        %vm1487 = vcmp.lt.s32.totalorder %v1306, 15
        %vm1488 = vcmp.lt.s32.totalorder %v1307, 15
        %vm1489 = vcmp.lt.s32.totalorder %v1308, 15
        %vm1490 = vcmp.lt.s32.totalorder %v1309, 15
        %vm1491 = vcmp.lt.s32.totalorder %v1310, 15
        %vm1492 = vcmp.lt.s32.totalorder %v1311, 15
        %vm1493 = vcmp.lt.s32.totalorder %v1312, 15
        %vm1494 = vcmp.lt.s32.totalorder %v1313, 15
        %vm1495 = vcmp.lt.s32.totalorder %v1314, 15
        %vm1496 = vcmp.lt.s32.totalorder %v1315, 15
        %vm1497 = vcmp.lt.s32.totalorder %v1316, 15
        %vm1498 = vcmp.lt.s32.totalorder %v1317, 15
        %vm1499 = vcmask 1046528
        %v1500 = vrot.slane %v1058, 1
        %v1501 = vrot.slane %v1059, 1
        %v1502 = vsel %vm1499, %v1500, %v1501
        %v1503 = vrot.slane %v1060, 1
        %v1504 = vsel %vm1499, %v1501, %v1503
        %v1505 = vrot.slane %v1061, 1
        %v1506 = vsel %vm1499, %v1503, %v1505
        %v1507 = vrot.slane %v1062, 1
        %v1508 = vsel %vm1499, %v1505, %v1507
        %v1509 = vrot.slane %v1063, 1
        %v1510 = vsel %vm1499, %v1507, %v1509
        %v1511 = vrot.slane %v1064, 1
        %v1512 = vsel %vm1499, %v1509, %v1511
        %v1513 = vrot.slane %v1065, 1
        %v1514 = vsel %vm1499, %v1511, %v1513
        %v1515 = vrot.slane %v1066, 1
        %v1516 = vsel %vm1499, %v1513, %v1515
        %v1517 = vrot.slane %v1067, 1
        %v1518 = vsel %vm1499, %v1515, %v1517
        %v1519 = vrot.slane %v1068, 1
        %v1520 = vsel %vm1499, %v1517, %v1519
        %v1521 = vrot.slane %v1069, 1
        %v1522 = vsel %vm1499, %v1519, %v1521
        %v1523 = vrot.slane %v1070, 1
        %v1524 = vsel %vm1499, %v1521, %v1523
        %v1525 = vrot.slane %v1071, 1
        %v1526 = vsel %vm1499, %v1523, %v1525
        %v1527 = vrot.slane %v1072, 1
        %v1528 = vsel %vm1499, %v1525, %v1527
        %v1529 = vrot.slane %v1073, 1
        %v1530 = vsel %vm1499, %v1527, %v1529
        %v1531 = vrot.slane %v1074, 1
        %v1532 = vsel %vm1499, %v1529, %v1531
        %v1533 = vrot.slane %v1075, 1
        %v1534 = vsel %vm1499, %v1531, %v1533
        %v1535 = vrot.slane %v1076, 1
        %v1536 = vsel %vm1499, %v1533, %v1535
        %v1537 = vrot.slane %v1077, 1
        %v1538 = vsel %vm1499, %v1535, %v1537
        %v1559 = vsel %vm1499, %v1537, 0.0
        %v1560 = vsel %vm1479, 1, 0
        %v1561 = vsel %vm1480, 1, 0
        %v1562 = vsel %vm1481, 1, 0
        %v1563 = vsel %vm1482, 1, 0
        %v1564 = vsel %vm1483, 1, 0
        %v1565 = vsel %vm1484, 1, 0
        %v1566 = vsel %vm1485, 1, 0
        %v1567 = vsel %vm1486, 1, 0
        %v1568 = vsel %vm1487, 1, 0
        %v1569 = vsel %vm1488, 1, 0
        %v1570 = vsel %vm1489, 1, 0
        %v1571 = vsel %vm1490, 1, 0
        %v1572 = vsel %vm1491, 1, 0
        %v1573 = vsel %vm1492, 1, 0
        %v1574 = vsel %vm1493, 1, 0
        %v1575 = vsel %vm1494, 1, 0
        %v1576 = vsel %vm1495, 1, 0
        %v1577 = vsel %vm1496, 1, 0
        %v1578 = vsel %vm1497, 1, 0
        %v1579 = vsel %vm1498, 1, 0
        %vm1580 = vcmp.eq.s32.totalorder %v1560, 1
        %vm1581 = vcmp.eq.s32.totalorder %v1561, 1
        %vm1582 = vcmp.eq.s32.totalorder %v1562, 1
        %vm1583 = vcmp.eq.s32.totalorder %v1563, 1
        %vm1584 = vcmp.eq.s32.totalorder %v1564, 1
        %vm1585 = vcmp.eq.s32.totalorder %v1565, 1
        %vm1586 = vcmp.eq.s32.totalorder %v1566, 1
        %vm1587 = vcmp.eq.s32.totalorder %v1567, 1
        %vm1588 = vcmp.eq.s32.totalorder %v1568, 1
        %vm1589 = vcmp.eq.s32.totalorder %v1569, 1
        %vm1590 = vcmp.eq.s32.totalorder %v1570, 1
        %vm1591 = vcmp.eq.s32.totalorder %v1571, 1
        %vm1592 = vcmp.eq.s32.totalorder %v1572, 1
        %vm1593 = vcmp.eq.s32.totalorder %v1573, 1
        %vm1594 = vcmp.eq.s32.totalorder %v1574, 1
        %vm1595 = vcmp.eq.s32.totalorder %v1575, 1
        %vm1596 = vcmp.eq.s32.totalorder %v1576, 1
        %vm1597 = vcmp.eq.s32.totalorder %v1577, 1
        %vm1598 = vcmp.eq.s32.totalorder %v1578, 1
        %vm1599 = vcmp.eq.s32.totalorder %v1579, 1
        %v1600 = vsel %vm1580, %v1502, 0.0
        %v1601 = vsel %vm1581, %v1504, 0.0
        %v1602 = vsel %vm1582, %v1506, 0.0
        %v1603 = vsel %vm1583, %v1508, 0.0
        %v1604 = vsel %vm1584, %v1510, 0.0
        %v1605 = vsel %vm1585, %v1512, 0.0
        %v1606 = vsel %vm1586, %v1514, 0.0
        %v1607 = vsel %vm1587, %v1516, 0.0
        %v1608 = vsel %vm1588, %v1518, 0.0
        %v1609 = vsel %vm1589, %v1520, 0.0
        %v1610 = vsel %vm1590, %v1522, 0.0
        %v1611 = vsel %vm1591, %v1524, 0.0
        %v1612 = vsel %vm1592, %v1526, 0.0
        %v1613 = vsel %vm1593, %v1528, 0.0
        %v1614 = vsel %vm1594, %v1530, 0.0
        %v1615 = vsel %vm1595, %v1532, 0.0
        %v1616 = vsel %vm1596, %v1534, 0.0
        %v1617 = vsel %vm1597, %v1536, 0.0
        %v1618 = vsel %vm1598, %v1538, 0.0
        %v1619 = vsel %vm1599, %v1559, 0.0
        %v1620 = vld [vmem:[#allocation10] sm:$0xff]
        %v1621 = vld [vmem:[#allocation10 + $0x8] sm:$0xff]
        %v1622 = vld [vmem:[#allocation10 + $0x10] sm:$0xff]
        %v1623 = vld [vmem:[#allocation10 + $0x18] sm:$0xff]
        %v1624 = vld [vmem:[#allocation10 + $0x20] sm:$0xff]
        %v1625 = vld [vmem:[#allocation10 + $0x28] sm:$0xff]
        %v1626 = vld [vmem:[#allocation10 + $0x30] sm:$0xff]
        %v1627 = vld [vmem:[#allocation10 + $0x38] sm:$0xff]
        %v1628 = vld [vmem:[#allocation10 + $0x40] sm:$0xff]
        %v1629 = vld [vmem:[#allocation10 + $0x48] sm:$0xff]
        %v1630 = vld [vmem:[#allocation10 + $0x50] sm:$0xff]
        %v1631 = vld [vmem:[#allocation10 + $0x58] sm:$0xff]
        %v1632 = vld [vmem:[#allocation10 + $0x60] sm:$0xff]
        %v1633 = vld [vmem:[#allocation10 + $0x68] sm:$0xff]
        %v1634 = vld [vmem:[#allocation10 + $0x70] sm:$0xff]
        %v1635 = vld [vmem:[#allocation10 + $0x78] sm:$0xff]
        %v1636 = vld [vmem:[#allocation10 + $0x80] sm:$0xff]
        %v1637 = vld [vmem:[#allocation10 + $0x88] sm:$0xff]
        %v1638 = vld [vmem:[#allocation10 + $0x90] sm:$0xff]
        %v1639 = vld [vmem:[#allocation10 + $0x98] sm:$0xff]
        %v1640 = vld [vmem:[#allocation10 + $0xa0] sm:$0xff]
        %v1641 = vld [vmem:[#allocation10 + $0xa8] sm:$0xff]
        %v1642 = vld [vmem:[#allocation10 + $0xb0] sm:$0xff]
        %v1643 = vld [vmem:[#allocation10 + $0xb8] sm:$0xff]
        %v1644 = vld [vmem:[#allocation10 + $0xc0] sm:$0xff]
        %v1645 = vld [vmem:[#allocation10 + $0xc8] sm:$0xff]
        %v1646 = vld [vmem:[#allocation10 + $0xd0] sm:$0xff]
        %v1647 = vld [vmem:[#allocation10 + $0xd8] sm:$0xff]
        %v1648 = vld [vmem:[#allocation10 + $0xe0] sm:$0xff]
        %v1649 = vld [vmem:[#allocation10 + $0xe8] sm:$0xff]
        %v1650 = vld [vmem:[#allocation10 + $0xf0] sm:$0xff]
        %v1651 = vld [vmem:[#allocation10 + $0xf8] sm:$0xff]
        %v1652 = vld [vmem:[#allocation10 + $0x100] sm:$0xff]
        %v1653 = vld [vmem:[#allocation10 + $0x108] sm:$0xff]
        %v1654 = vld [vmem:[#allocation10 + $0x110] sm:$0xff]
        %v1655 = vld [vmem:[#allocation10 + $0x118] sm:$0xff]
        %v1656 = vld [vmem:[#allocation10 + $0x120] sm:$0xff]
        %v1657 = vld [vmem:[#allocation10 + $0x128] sm:$0xff]
        %v1658 = vld [vmem:[#allocation10 + $0x130] sm:$0xff]
        %v1659 = vld [vmem:[#allocation10 + $0x138] sm:$0xff]
        %v1660 = vld [vmem:[#allocation10 + $0x140] sm:$0xff]
        %v1661 = vld [vmem:[#allocation10 + $0x148] sm:$0xff]
        %v1662 = vld [vmem:[#allocation10 + $0x150] sm:$0xff]
        %v1663 = vld [vmem:[#allocation10 + $0x158] sm:$0xff]
        %v1664 = vld [vmem:[#allocation10 + $0x160] sm:$0xff]
        %v1665 = vld [vmem:[#allocation10 + $0x168] sm:$0xff]
        %v1666 = vld [vmem:[#allocation10 + $0x170] sm:$0xff]
        %v1667 = vld [vmem:[#allocation10 + $0x178] sm:$0xff]
        %s1668 = scalar_lea.vmem [#allocation10], 384
        %v1669 = vld [vmem:[%s1668] sm:$0xff]
        %v1670 = vld [vmem:[%s1668 + $0x8] sm:$0xff]
        %v1671 = vld [vmem:[%s1668 + $0x10] sm:$0xff]
        %v1672 = vld [vmem:[%s1668 + $0x18] sm:$0xff]
        %v1673 = vld [vmem:[%s1668 + $0x20] sm:$0xff]
        %v1674 = vld [vmem:[%s1668 + $0x28] sm:$0xff]
        %v1675 = vld [vmem:[%s1668 + $0x30] sm:$0xff]
        %v1676 = vld [vmem:[%s1668 + $0x38] sm:$0xff]
        %v1677 = vld [vmem:[%s1668 + $0x40] sm:$0xff]
        %v1678 = vld [vmem:[%s1668 + $0x48] sm:$0xff]
        %v1679 = vld [vmem:[%s1668 + $0x50] sm:$0xff]
        %v1680 = vld [vmem:[%s1668 + $0x58] sm:$0xff]
        %v1681 = vld [vmem:[%s1668 + $0x60] sm:$0xff]
        %v1682 = vld [vmem:[%s1668 + $0x68] sm:$0xff]
        %v1683 = vld [vmem:[%s1668 + $0x70] sm:$0xff]
        %v1684 = vld [vmem:[%s1668 + $0x78] sm:$0xff]
        %v1685 = vld [vmem:[%s1668 + $0x80] sm:$0xff]
        %v1686 = vld [vmem:[%s1668 + $0x88] sm:$0xff]
        %v1687 = vld [vmem:[%s1668 + $0x90] sm:$0xff]
        %v1688 = vld [vmem:[%s1668 + $0x98] sm:$0xff]
        %v1689 = vld [vmem:[%s1668 + $0xa0] sm:$0xff]
        %v1690 = vld [vmem:[%s1668 + $0xa8] sm:$0xff]
        %v1691 = vld [vmem:[%s1668 + $0xb0] sm:$0xff]
        %v1692 = vld [vmem:[%s1668 + $0xb8] sm:$0xff]
        %v1693 = vld [vmem:[%s1668 + $0xc0] sm:$0xff]
        %v1694 = vld [vmem:[%s1668 + $0xc8] sm:$0xff]
        %v1695 = vld [vmem:[%s1668 + $0xd0] sm:$0xff]
        %v1696 = vld [vmem:[%s1668 + $0xd8] sm:$0xff]
        %v1697 = vld [vmem:[%s1668 + $0xe0] sm:$0xff]
        %v1698 = vld [vmem:[%s1668 + $0xe8] sm:$0xff]
        %v1699 = vld [vmem:[%s1668 + $0xf0] sm:$0xff]
        %v1700 = vld [vmem:[%s1668 + $0xf8] sm:$0xff]
        %v1701 = vld [vmem:[%s1668 + $0x100] sm:$0xff]
        %v1702 = vld [vmem:[%s1668 + $0x108] sm:$0xff]
        %v1703 = vld [vmem:[%s1668 + $0x110] sm:$0xff]
        %v1704 = vld [vmem:[%s1668 + $0x118] sm:$0xff]
        %v1705 = vld [vmem:[%s1668 + $0x120] sm:$0xff]
        %v1706 = vld [vmem:[%s1668 + $0x128] sm:$0xff]
        %v1707 = vld [vmem:[%s1668 + $0x130] sm:$0xff]
        %v1708 = vld [vmem:[%s1668 + $0x138] sm:$0xff]
        %v1709 = vld [vmem:[%s1668 + $0x140] sm:$0xff]
        %v1710 = vld [vmem:[%s1668 + $0x148] sm:$0xff]
        %v1711 = vld [vmem:[%s1668 + $0x150] sm:$0xff]
        %v1712 = vld [vmem:[%s1668 + $0x158] sm:$0xff]
        %v1713 = vld [vmem:[%s1668 + $0x160] sm:$0xff]
        %v1714 = vld [vmem:[%s1668 + $0x168] sm:$0xff]
        %v1715 = vld [vmem:[%s1668 + $0x170] sm:$0xff]
        %v1716 = vld [vmem:[%s1668 + $0x178] sm:$0xff]
        %1717 = vmatprep.subr.mxu0 0.0
        %1718 = vmatpush1.msra.mxu0 %v1669
        %1719 = vmatprep.subr.mxu0 0.0
        %1720 = vmatpush1.msra.mxu0 %v1670
        %1721 = vmatprep.subr.mxu0 0.0
        %1722 = vmatpush1.msra.mxu0 %v1671
        %1723 = vmatprep.subr.mxu0 0.0
        %1724 = vmatpush1.msra.mxu0 %v1672
        %1725 = vmatprep.subr.mxu0 0.0
        %1726 = vmatpush1.msra.mxu0 %v1673
        %1727 = vmatprep.subr.mxu0 0.0
        %1728 = vmatpush1.msra.mxu0 %v1674
        %1729 = vmatprep.subr.mxu0 0.0
        %1730 = vmatpush1.msra.mxu0 %v1675
        %1731 = vmatprep.subr.mxu0 0.0
        %1732 = vmatpush1.msra.mxu0 %v1676
        %1733 = vmatprep.subr.mxu0 0.0
        %1734 = vmatpush1.msra.mxu0 %v1677
        %1735 = vmatprep.subr.mxu0 0.0
        %1736 = vmatpush1.msra.mxu0 %v1678
        %1737 = vmatprep.subr.mxu0 0.0
        %1738 = vmatpush1.msra.mxu0 %v1679
        %1739 = vmatprep.subr.mxu0 0.0
        %1740 = vmatpush1.msra.mxu0 %v1680
        %1741 = vmatprep.subr.mxu0 0.0
        %1742 = vmatpush1.msra.mxu0 %v1681
        %1743 = vmatprep.subr.mxu0 0.0
        %1744 = vmatpush1.msra.mxu0 %v1682
        %1745 = vmatprep.subr.mxu0 0.0
        %1746 = vmatpush1.msra.mxu0 %v1683
        %1747 = vmatprep.subr.mxu0 0.0
        %1748 = vmatpush1.msra.mxu0 %v1684
        %1749 = vmatprep.subr.mxu0 0.0
        %1750 = vmatpush1.msra.mxu0 %v1685
        %1751 = vmatprep.subr.mxu0 0.0
        %1752 = vmatpush1.msra.mxu0 %v1686
        %1753 = vmatprep.subr.mxu0 0.0
        %1754 = vmatpush1.msra.mxu0 %v1687
        %1755 = vmatprep.subr.mxu0 0.0
        %1756 = vmatpush1.msra.mxu0 %v1688
        %1757 = vmatprep.subr.mxu0 0.0
        %1758 = vmatpush1.msra.mxu0 %v1689
        %1759 = vmatprep.subr.mxu0 0.0
        %1760 = vmatpush1.msra.mxu0 %v1690
        %1761 = vmatprep.subr.mxu0 0.0
        %1762 = vmatpush1.msra.mxu0 %v1691
        %1763 = vmatprep.subr.mxu0 0.0
        %1764 = vmatpush1.msra.mxu0 %v1692
        %1765 = vmatprep.subr.mxu0 0.0
        %1766 = vmatpush1.msra.mxu0 %v1693
        %1767 = vmatprep.subr.mxu0 0.0
        %1768 = vmatpush1.msra.mxu0 %v1694
        %1769 = vmatprep.subr.mxu0 0.0
        %1770 = vmatpush1.msra.mxu0 %v1695
        %1771 = vmatprep.subr.mxu0 0.0
        %1772 = vmatpush1.msra.mxu0 %v1696
        %1773 = vmatprep.subr.mxu0 0.0
        %1774 = vmatpush1.msra.mxu0 %v1697
        %1775 = vmatprep.subr.mxu0 0.0
        %1776 = vmatpush1.msra.mxu0 %v1698
        %1777 = vmatprep.subr.mxu0 0.0
        %1778 = vmatpush1.msra.mxu0 %v1699
        %1779 = vmatprep.subr.mxu0 0.0
        %1780 = vmatpush1.msra.mxu0 %v1700
        %1781 = vmatprep.mubr.f32.mxu0 %v1060
        %1782 = vmatmul.mubr.f32.gmra.mrb[0].mxu0 %v1461
        %v1783 = vpop.f32.mrb[0].mxu0
        %v1784 = vadd.f32 0.0, %v1783
        %v1785 = vpop.f32.mrb[0].mxu0
        %1786 = vmatprep.mubr.f32.mxu0 %v1061
        %1787 = vmatmul.mubr.f32.gmra.mrb[0].mxu0 %v1462
        %v1788 = vpop.f32.mrb[0].mxu0
        %v1789 = vadd.f32 0.0, %v1788
        %v1790 = vpop.f32.mrb[0].mxu0
        %1791 = vmatprep.mubr.f32.mxu0 %v1062
        %1792 = vmatmul.mubr.f32.gmra.mrb[0].mxu0 %v1463
        %v1793 = vpop.f32.mrb[0].mxu0
        %v1794 = vadd.f32 0.0, %v1793
        %v1795 = vpop.f32.mrb[0].mxu0
        %1796 = vmatprep.mubr.f32.mxu0 %v1063
        %1797 = vmatmul.mubr.f32.gmra.mrb[0].mxu0 %v1464
        %v1798 = vpop.f32.mrb[0].mxu0
        %v1799 = vadd.f32 0.0, %v1798
        %v1800 = vpop.f32.mrb[0].mxu0
        %1801 = vmatprep.mubr.f32.mxu0 %v1064
        %1802 = vmatmul.mubr.f32.gmra.mrb[0].mxu0 %v1465
        %v1803 = vpop.f32.mrb[0].mxu0
        %v1804 = vadd.f32 0.0, %v1803
        %v1805 = vpop.f32.mrb[0].mxu0
        %1806 = vmatprep.mubr.f32.mxu0 %v1065
        %1807 = vmatmul.mubr.f32.gmra.mrb[0].mxu0 %v1466
        %v1808 = vpop.f32.mrb[0].mxu0
        %v1809 = vadd.f32 0.0, %v1808
        %v1810 = vpop.f32.mrb[0].mxu0
        %1811 = vmatprep.mubr.f32.mxu0 %v1066
        %1812 = vmatmul.mubr.f32.gmra.mrb[0].mxu0 %v1467
        %v1813 = vpop.f32.mrb[0].mxu0
        %v1814 = vadd.f32 0.0, %v1813
        %v1815 = vpop.f32.mrb[0].mxu0
        %1816 = vmatprep.mubr.f32.mxu0 %v1067
        %1817 = vmatmul.mubr.f32.gmra.mrb[0].mxu0 %v1468
        %v1818 = vpop.f32.mrb[0].mxu0
        %v1819 = vadd.f32 0.0, %v1818
        %v1820 = vpop.f32.mrb[0].mxu0
        %1821 = vmatprep.mubr.f32.mxu0 %v1068
        %1822 = vmatmul.mubr.f32.gmra.mrb[0].mxu0 %v1469
        %v1823 = vpop.f32.mrb[0].mxu0
        %v1824 = vadd.f32 0.0, %v1823
        %v1825 = vpop.f32.mrb[0].mxu0
        %1826 = vmatprep.mubr.f32.mxu0 %v1069
        %1827 = vmatmul.mubr.f32.gmra.mrb[0].mxu0 %v1470
        %v1828 = vpop.f32.mrb[0].mxu0
        %v1829 = vadd.f32 0.0, %v1828
        %v1830 = vpop.f32.mrb[0].mxu0
        %1831 = vmatprep.mubr.f32.mxu0 %v1070
        %1832 = vmatmul.mubr.f32.gmra.mrb[0].mxu0 %v1471
        %v1833 = vpop.f32.mrb[0].mxu0
        %v1834 = vadd.f32 0.0, %v1833
        %v1835 = vpop.f32.mrb[0].mxu0
        %1836 = vmatprep.mubr.f32.mxu0 %v1071
        %1837 = vmatmul.mubr.f32.gmra.mrb[0].mxu0 %v1472
        %v1838 = vpop.f32.mrb[0].mxu0
        %v1839 = vadd.f32 0.0, %v1838
        %v1840 = vpop.f32.mrb[0].mxu0
        %1841 = vmatprep.mubr.f32.mxu0 %v1072
        %1842 = vmatmul.mubr.f32.gmra.mrb[0].mxu0 %v1473
        %v1843 = vpop.f32.mrb[0].mxu0
        %v1844 = vadd.f32 0.0, %v1843
        %v1845 = vpop.f32.mrb[0].mxu0
        %1846 = vmatprep.mubr.f32.mxu0 %v1073
        %1847 = vmatmul.mubr.f32.gmra.mrb[0].mxu0 %v1474
        %v1848 = vpop.f32.mrb[0].mxu0
        %v1849 = vadd.f32 0.0, %v1848
        %v1850 = vpop.f32.mrb[0].mxu0
        %1851 = vmatprep.mubr.f32.mxu0 %v1074
        %1852 = vmatmul.mubr.f32.gmra.mrb[0].mxu0 %v1475
        %v1853 = vpop.f32.mrb[0].mxu0
        %v1854 = vadd.f32 0.0, %v1853
        %v1855 = vpop.f32.mrb[0].mxu0
        %1856 = vmatprep.mubr.f32.mxu0 %v1075
        %1857 = vmatmul.mubr.f32.gmra.mrb[0].mxu0 %v1476
        %v1858 = vpop.f32.mrb[0].mxu0
        %v1859 = vadd.f32 0.0, %v1858
        %v1860 = vpop.f32.mrb[0].mxu0
        %1861 = vdwg.mxu0
        %1862 = vmatprep.subr.mxu0 0.0
        %1863 = vmatpush1.msra.mxu0 %v1701
        %1864 = vmatprep.subr.mxu0 0.0
        %1865 = vmatpush1.msra.mxu0 %v1702
        %1866 = vmatprep.subr.mxu0 0.0
        %1867 = vmatpush1.msra.mxu0 %v1703
        %1868 = vmatprep.subr.mxu0 0.0
        %1869 = vmatpush1.msra.mxu0 %v1704
        %1870 = vmatprep.subr.mxu0 0.0
        %1871 = vmatpush1.msra.mxu0 %v1705
        %1872 = vmatprep.subr.mxu0 0.0
        %1873 = vmatpush1.msra.mxu0 %v1706
        %1874 = vmatprep.subr.mxu0 0.0
        %1875 = vmatpush1.msra.mxu0 %v1707
        %1876 = vmatprep.subr.mxu0 0.0
        %1877 = vmatpush1.msra.mxu0 %v1708
        %1878 = vmatprep.subr.mxu0 0.0
        %1879 = vmatpush1.msra.mxu0 %v1709
        %1880 = vmatprep.subr.mxu0 0.0
        %1881 = vmatpush1.msra.mxu0 %v1710
        %1882 = vmatprep.subr.mxu0 0.0
        %1883 = vmatpush1.msra.mxu0 %v1711
        %1884 = vmatprep.subr.mxu0 0.0
        %1885 = vmatpush1.msra.mxu0 %v1712
        %1886 = vmatprep.subr.mxu0 0.0
        %1887 = vmatpush1.msra.mxu0 %v1713
        %1888 = vmatprep.subr.mxu0 0.0
        %1889 = vmatpush1.msra.mxu0 %v1714
        %1890 = vmatprep.subr.mxu0 0.0
        %1891 = vmatpush1.msra.mxu0 %v1715
        %1892 = vmatprep.subr.mxu0 0.0
        %1893 = vmatpush1.msra.mxu0 %v1716
        %1894 = vmatprep.subr.mxu0 0.0
        %1895 = vmatpush1.msra.mxu0 0.0
        %1896 = vmatprep.subr.mxu0 0.0
        %1897 = vmatpush1.msra.mxu0 0.0
        %1898 = vmatprep.subr.mxu0 0.0
        %1899 = vmatpush1.msra.mxu0 0.0
        %1900 = vmatprep.subr.mxu0 0.0
        %1901 = vmatpush1.msra.mxu0 0.0
        %1902 = vmatprep.subr.mxu0 0.0
        %1903 = vmatpush1.msra.mxu0 0.0
        %1904 = vmatprep.subr.mxu0 0.0
        %1905 = vmatpush1.msra.mxu0 0.0
        %1906 = vmatprep.subr.mxu0 0.0
        %1907 = vmatpush1.msra.mxu0 0.0
        %1908 = vmatprep.subr.mxu0 0.0
        %1909 = vmatpush1.msra.mxu0 0.0
        %1910 = vmatprep.subr.mxu0 0.0
        %1911 = vmatpush1.msra.mxu0 0.0
        %1912 = vmatprep.subr.mxu0 0.0
        %1913 = vmatpush1.msra.mxu0 0.0
        %1914 = vmatprep.subr.mxu0 0.0
        %1915 = vmatpush1.msra.mxu0 0.0
        %1916 = vmatprep.subr.mxu0 0.0
        %1917 = vmatpush1.msra.mxu0 0.0
        %1918 = vmatprep.subr.mxu0 0.0
        %1919 = vmatpush1.msra.mxu0 0.0
        %1920 = vmatprep.subr.mxu0 0.0
        %1921 = vmatpush1.msra.mxu0 0.0
        %1922 = vmatprep.subr.mxu0 0.0
        %1923 = vmatpush1.msra.mxu0 0.0
        %1924 = vmatprep.subr.mxu0 0.0
        %1925 = vmatpush1.msra.mxu0 0.0
        %1926 = vmatprep.mubr.f32.mxu0 0.0
        %1927 = vmatmul.mubr.f32.gmra.mrb[0].mxu0 %v1602
        %v1928 = vpop.f32.mrb[0].mxu0
        %v1929 = vadd.f32 %v1784, %v1928
        %v1930 = vpop.f32.mrb[0].mxu0
        %1931 = vmatprep.mubr.f32.mxu0 0.0
        %1932 = vmatmul.mubr.f32.gmra.mrb[0].mxu0 %v1603
        %v1933 = vpop.f32.mrb[0].mxu0
        %v1934 = vadd.f32 %v1789, %v1933
        %v1935 = vpop.f32.mrb[0].mxu0
        %1936 = vmatprep.mubr.f32.mxu0 0.0
        %1937 = vmatmul.mubr.f32.gmra.mrb[0].mxu0 %v1604
        %v1938 = vpop.f32.mrb[0].mxu0
        %v1939 = vadd.f32 %v1794, %v1938
        %v1940 = vpop.f32.mrb[0].mxu0
        %1941 = vmatprep.mubr.f32.mxu0 0.0
        %1942 = vmatmul.mubr.f32.gmra.mrb[0].mxu0 %v1605
        %v1943 = vpop.f32.mrb[0].mxu0
        %v1944 = vadd.f32 %v1799, %v1943
        %v1945 = vpop.f32.mrb[0].mxu0
        %1946 = vmatprep.mubr.f32.mxu0 0.0
        %1947 = vmatmul.mubr.f32.gmra.mrb[0].mxu0 %v1606
        %v1948 = vpop.f32.mrb[0].mxu0
        %v1949 = vadd.f32 %v1804, %v1948
        %v1950 = vpop.f32.mrb[0].mxu0
        %1951 = vmatprep.mubr.f32.mxu0 0.0
        %1952 = vmatmul.mubr.f32.gmra.mrb[0].mxu0 %v1607
        %v1953 = vpop.f32.mrb[0].mxu0
        %v1954 = vadd.f32 %v1809, %v1953
        %v1955 = vpop.f32.mrb[0].mxu0
        %1956 = vmatprep.mubr.f32.mxu0 0.0
        %1957 = vmatmul.mubr.f32.gmra.mrb[0].mxu0 %v1608
        %v1958 = vpop.f32.mrb[0].mxu0
        %v1959 = vadd.f32 %v1814, %v1958
        %v1960 = vpop.f32.mrb[0].mxu0
        %1961 = vmatprep.mubr.f32.mxu0 0.0
        %1962 = vmatmul.mubr.f32.gmra.mrb[0].mxu0 %v1609
        %v1963 = vpop.f32.mrb[0].mxu0
        %v1964 = vadd.f32 %v1819, %v1963
        %v1965 = vpop.f32.mrb[0].mxu0
        %1966 = vmatprep.mubr.f32.mxu0 0.0
        %1967 = vmatmul.mubr.f32.gmra.mrb[0].mxu0 %v1610
        %v1968 = vpop.f32.mrb[0].mxu0
        %v1969 = vadd.f32 %v1824, %v1968
        %v1970 = vpop.f32.mrb[0].mxu0
        %1971 = vmatprep.mubr.f32.mxu0 0.0
        %1972 = vmatmul.mubr.f32.gmra.mrb[0].mxu0 %v1611
        %v1973 = vpop.f32.mrb[0].mxu0
        %v1974 = vadd.f32 %v1829, %v1973
        %v1975 = vpop.f32.mrb[0].mxu0
        %1976 = vmatprep.mubr.f32.mxu0 0.0
        %1977 = vmatmul.mubr.f32.gmra.mrb[0].mxu0 %v1612
        %v1978 = vpop.f32.mrb[0].mxu0
        %v1979 = vadd.f32 %v1834, %v1978
        %v1980 = vpop.f32.mrb[0].mxu0
        %1981 = vmatprep.mubr.f32.mxu0 0.0
        %1982 = vmatmul.mubr.f32.gmra.mrb[0].mxu0 %v1613
        %v1983 = vpop.f32.mrb[0].mxu0
        %v1984 = vadd.f32 %v1839, %v1983
        %v1985 = vpop.f32.mrb[0].mxu0
        %1986 = vmatprep.mubr.f32.mxu0 0.0
        %1987 = vmatmul.mubr.f32.gmra.mrb[0].mxu0 %v1614
        %v1988 = vpop.f32.mrb[0].mxu0
        %v1989 = vadd.f32 %v1844, %v1988
        %v1990 = vpop.f32.mrb[0].mxu0
        %1991 = vmatprep.mubr.f32.mxu0 0.0
        %1992 = vmatmul.mubr.f32.gmra.mrb[0].mxu0 %v1615
        %v1993 = vpop.f32.mrb[0].mxu0
        %v1994 = vadd.f32 %v1849, %v1993
        %v1995 = vpop.f32.mrb[0].mxu0
        %1996 = vmatprep.mubr.f32.mxu0 0.0
        %1997 = vmatmul.mubr.f32.gmra.mrb[0].mxu0 %v1616
        %v1998 = vpop.f32.mrb[0].mxu0
        %v1999 = vadd.f32 %v1854, %v1998
        %v2000 = vpop.f32.mrb[0].mxu0
        %2001 = vmatprep.mubr.f32.mxu0 0.0
        %2002 = vmatmul.mubr.f32.gmra.mrb[0].mxu0 %v1617
        %v2003 = vpop.f32.mrb[0].mxu0
        %v2004 = vadd.f32 %v1859, %v2003
        %v2005 = vpop.f32.mrb[0].mxu0
        %2006 = vdwg.mxu0
        %2007 = vmatprep.subr.mxu0 0.0
        %2008 = vmatpush1.msra.mxu0 %v1620
        %2009 = vmatprep.subr.mxu0 0.0
        %2010 = vmatpush1.msra.mxu0 %v1621
        %2011 = vmatprep.subr.mxu0 0.0
        %2012 = vmatpush1.msra.mxu0 %v1622
        %2013 = vmatprep.subr.mxu0 0.0
        %2014 = vmatpush1.msra.mxu0 %v1623
        %2015 = vmatprep.subr.mxu0 0.0
        %2016 = vmatpush1.msra.mxu0 %v1624
        %2017 = vmatprep.subr.mxu0 0.0
        %2018 = vmatpush1.msra.mxu0 %v1625
        %2019 = vmatprep.subr.mxu0 0.0
        %2020 = vmatpush1.msra.mxu0 %v1626
        %2021 = vmatprep.subr.mxu0 0.0
        %2022 = vmatpush1.msra.mxu0 %v1627
        %2023 = vmatprep.subr.mxu0 0.0
        %2024 = vmatpush1.msra.mxu0 %v1628
        %2025 = vmatprep.subr.mxu0 0.0
        %2026 = vmatpush1.msra.mxu0 %v1629
        %2027 = vmatprep.subr.mxu0 0.0
        %2028 = vmatpush1.msra.mxu0 %v1630
        %2029 = vmatprep.subr.mxu0 0.0
        %2030 = vmatpush1.msra.mxu0 %v1631
        %2031 = vmatprep.subr.mxu0 0.0
        %2032 = vmatpush1.msra.mxu0 %v1632
        %2033 = vmatprep.subr.mxu0 0.0
        %2034 = vmatpush1.msra.mxu0 %v1633
        %2035 = vmatprep.subr.mxu0 0.0
        %2036 = vmatpush1.msra.mxu0 %v1634
        %2037 = vmatprep.subr.mxu0 0.0
        %2038 = vmatpush1.msra.mxu0 %v1635
        %2039 = vmatprep.subr.mxu0 0.0
        %2040 = vmatpush1.msra.mxu0 %v1636
        %2041 = vmatprep.subr.mxu0 0.0
        %2042 = vmatpush1.msra.mxu0 %v1637
        %2043 = vmatprep.subr.mxu0 0.0
        %2044 = vmatpush1.msra.mxu0 %v1638
        %2045 = vmatprep.subr.mxu0 0.0
        %2046 = vmatpush1.msra.mxu0 %v1639
        %2047 = vmatprep.subr.mxu0 0.0
        %2048 = vmatpush1.msra.mxu0 %v1640
        %2049 = vmatprep.subr.mxu0 0.0
        %2050 = vmatpush1.msra.mxu0 %v1641
        %2051 = vmatprep.subr.mxu0 0.0
        %2052 = vmatpush1.msra.mxu0 %v1642
        %2053 = vmatprep.subr.mxu0 0.0
        %2054 = vmatpush1.msra.mxu0 %v1643
        %2055 = vmatprep.subr.mxu0 0.0
        %2056 = vmatpush1.msra.mxu0 %v1644
        %2057 = vmatprep.subr.mxu0 0.0
        %2058 = vmatpush1.msra.mxu0 %v1645
        %2059 = vmatprep.subr.mxu0 0.0
        %2060 = vmatpush1.msra.mxu0 %v1646
        %2061 = vmatprep.subr.mxu0 0.0
        %2062 = vmatpush1.msra.mxu0 %v1647
        %2063 = vmatprep.subr.mxu0 0.0
        %2064 = vmatpush1.msra.mxu0 %v1648
        %2065 = vmatprep.subr.mxu0 0.0
        %2066 = vmatpush1.msra.mxu0 %v1649
        %2067 = vmatprep.subr.mxu0 0.0
        %2068 = vmatpush1.msra.mxu0 %v1650
        %2069 = vmatprep.subr.mxu0 0.0
        %2070 = vmatpush1.msra.mxu0 %v1651
        %2071 = vmatprep.mubr.f32.mxu0 %v1058
        %2072 = vmatmul.mubr.f32.gmra.mrb[0].mxu0 %v1459
        %v2073 = vpop.f32.mrb[0].mxu0
        %v2074 = vadd.f32 %v1929, %v2073
        %v2075 = vpop.f32.mrb[0].mxu0
        %2076 = vmatprep.mubr.f32.mxu0 %v1059
        %2077 = vmatmul.mubr.f32.gmra.mrb[0].mxu0 %v1460
        %v2078 = vpop.f32.mrb[0].mxu0
        %v2079 = vadd.f32 %v1934, %v2078
        %v2080 = vpop.f32.mrb[0].mxu0
        %2081 = vmatprep.mubr.f32.mxu0 %v1060
        %2082 = vmatmul.mubr.f32.gmra.mrb[0].mxu0 %v1461
        %v2083 = vpop.f32.mrb[0].mxu0
        %v2084 = vadd.f32 %v1939, %v2083
        %v2085 = vpop.f32.mrb[0].mxu0
        %2086 = vmatprep.mubr.f32.mxu0 %v1061
        %2087 = vmatmul.mubr.f32.gmra.mrb[0].mxu0 %v1462
        %v2088 = vpop.f32.mrb[0].mxu0
        %v2089 = vadd.f32 %v1944, %v2088
        %v2090 = vpop.f32.mrb[0].mxu0
        %2091 = vmatprep.mubr.f32.mxu0 %v1062
        %2092 = vmatmul.mubr.f32.gmra.mrb[0].mxu0 %v1463
        %v2093 = vpop.f32.mrb[0].mxu0
        %v2094 = vadd.f32 %v1949, %v2093
        %v2095 = vpop.f32.mrb[0].mxu0
        %2096 = vmatprep.mubr.f32.mxu0 %v1063
        %2097 = vmatmul.mubr.f32.gmra.mrb[0].mxu0 %v1464
        %v2098 = vpop.f32.mrb[0].mxu0
        %v2099 = vadd.f32 %v1954, %v2098
        %v2100 = vpop.f32.mrb[0].mxu0
        %2101 = vmatprep.mubr.f32.mxu0 %v1064
        %2102 = vmatmul.mubr.f32.gmra.mrb[0].mxu0 %v1465
        %v2103 = vpop.f32.mrb[0].mxu0
        %v2104 = vadd.f32 %v1959, %v2103
        %v2105 = vpop.f32.mrb[0].mxu0
        %2106 = vmatprep.mubr.f32.mxu0 %v1065
        %2107 = vmatmul.mubr.f32.gmra.mrb[0].mxu0 %v1466
        %v2108 = vpop.f32.mrb[0].mxu0
        %v2109 = vadd.f32 %v1964, %v2108
        %v2110 = vpop.f32.mrb[0].mxu0
        %2111 = vmatprep.mubr.f32.mxu0 %v1066
        %2112 = vmatmul.mubr.f32.gmra.mrb[0].mxu0 %v1467
        %v2113 = vpop.f32.mrb[0].mxu0
        %v2114 = vadd.f32 %v1969, %v2113
        %v2115 = vpop.f32.mrb[0].mxu0
        %2116 = vmatprep.mubr.f32.mxu0 %v1067
        %2117 = vmatmul.mubr.f32.gmra.mrb[0].mxu0 %v1468
        %v2118 = vpop.f32.mrb[0].mxu0
        %v2119 = vadd.f32 %v1974, %v2118
        %v2120 = vpop.f32.mrb[0].mxu0
        %2121 = vmatprep.mubr.f32.mxu0 %v1068
        %2122 = vmatmul.mubr.f32.gmra.mrb[0].mxu0 %v1469
        %v2123 = vpop.f32.mrb[0].mxu0
        %v2124 = vadd.f32 %v1979, %v2123
        %v2125 = vpop.f32.mrb[0].mxu0
        %2126 = vmatprep.mubr.f32.mxu0 %v1069
        %2127 = vmatmul.mubr.f32.gmra.mrb[0].mxu0 %v1470
        %v2128 = vpop.f32.mrb[0].mxu0
        %v2129 = vadd.f32 %v1984, %v2128
        %v2130 = vpop.f32.mrb[0].mxu0
        %2131 = vmatprep.mubr.f32.mxu0 %v1070
        %2132 = vmatmul.mubr.f32.gmra.mrb[0].mxu0 %v1471
        %v2133 = vpop.f32.mrb[0].mxu0
        %v2134 = vadd.f32 %v1989, %v2133
        %v2135 = vpop.f32.mrb[0].mxu0
        %2136 = vmatprep.mubr.f32.mxu0 %v1071
        %2137 = vmatmul.mubr.f32.gmra.mrb[0].mxu0 %v1472
        %v2138 = vpop.f32.mrb[0].mxu0
        %v2139 = vadd.f32 %v1994, %v2138
        %v2140 = vpop.f32.mrb[0].mxu0
        %2141 = vmatprep.mubr.f32.mxu0 %v1072
        %2142 = vmatmul.mubr.f32.gmra.mrb[0].mxu0 %v1473
        %v2143 = vpop.f32.mrb[0].mxu0
        %v2144 = vadd.f32 %v1999, %v2143
        %v2145 = vpop.f32.mrb[0].mxu0
        %2146 = vmatprep.mubr.f32.mxu0 %v1073
        %2147 = vmatmul.mubr.f32.gmra.mrb[0].mxu0 %v1474
        %v2148 = vpop.f32.mrb[0].mxu0
        %v2149 = vadd.f32 %v2004, %v2148
        %v2150 = vpop.f32.mrb[0].mxu0
        %2151 = vdwg.mxu0
        %2152 = vmatprep.subr.mxu0 0.0
        %2153 = vmatpush1.msra.mxu0 %v1652
        %2154 = vmatprep.subr.mxu0 0.0
        %2155 = vmatpush1.msra.mxu0 %v1653
        %2156 = vmatprep.subr.mxu0 0.0
        %2157 = vmatpush1.msra.mxu0 %v1654
        %2158 = vmatprep.subr.mxu0 0.0
        %2159 = vmatpush1.msra.mxu0 %v1655
        %2160 = vmatprep.subr.mxu0 0.0
        %2161 = vmatpush1.msra.mxu0 %v1656
        %2162 = vmatprep.subr.mxu0 0.0
        %2163 = vmatpush1.msra.mxu0 %v1657
        %2164 = vmatprep.subr.mxu0 0.0
        %2165 = vmatpush1.msra.mxu0 %v1658
        %2166 = vmatprep.subr.mxu0 0.0
        %2167 = vmatpush1.msra.mxu0 %v1659
        %2168 = vmatprep.subr.mxu0 0.0
        %2169 = vmatpush1.msra.mxu0 %v1660
        %2170 = vmatprep.subr.mxu0 0.0
        %2171 = vmatpush1.msra.mxu0 %v1661
        %2172 = vmatprep.subr.mxu0 0.0
        %2173 = vmatpush1.msra.mxu0 %v1662
        %2174 = vmatprep.subr.mxu0 0.0
        %2175 = vmatpush1.msra.mxu0 %v1663
        %2176 = vmatprep.subr.mxu0 0.0
        %2177 = vmatpush1.msra.mxu0 %v1664
        %2178 = vmatprep.subr.mxu0 0.0
        %2179 = vmatpush1.msra.mxu0 %v1665
        %2180 = vmatprep.subr.mxu0 0.0
        %2181 = vmatpush1.msra.mxu0 %v1666
        %2182 = vmatprep.subr.mxu0 0.0
        %2183 = vmatpush1.msra.mxu0 %v1667
        %2184 = vmatprep.subr.mxu0 0.0
        %2185 = vmatpush1.msra.mxu0 0.0
        %2186 = vmatprep.subr.mxu0 0.0
        %2187 = vmatpush1.msra.mxu0 0.0
        %2188 = vmatprep.subr.mxu0 0.0
        %2189 = vmatpush1.msra.mxu0 0.0
        %2190 = vmatprep.subr.mxu0 0.0
        %2191 = vmatpush1.msra.mxu0 0.0
        %2192 = vmatprep.subr.mxu0 0.0
        %2193 = vmatpush1.msra.mxu0 0.0
        %2194 = vmatprep.subr.mxu0 0.0
        %2195 = vmatpush1.msra.mxu0 0.0
        %2196 = vmatprep.subr.mxu0 0.0
        %2197 = vmatpush1.msra.mxu0 0.0
        %2198 = vmatprep.subr.mxu0 0.0
        %2199 = vmatpush1.msra.mxu0 0.0
        %2200 = vmatprep.subr.mxu0 0.0
        %2201 = vmatpush1.msra.mxu0 0.0
        %2202 = vmatprep.subr.mxu0 0.0
        %2203 = vmatpush1.msra.mxu0 0.0
        %2204 = vmatprep.subr.mxu0 0.0
        %2205 = vmatpush1.msra.mxu0 0.0
        %2206 = vmatprep.subr.mxu0 0.0
        %2207 = vmatpush1.msra.mxu0 0.0
        %2208 = vmatprep.subr.mxu0 0.0
        %2209 = vmatpush1.msra.mxu0 0.0
        %2210 = vmatprep.subr.mxu0 0.0
        %2211 = vmatpush1.msra.mxu0 0.0
        %2212 = vmatprep.subr.mxu0 0.0
        %2213 = vmatpush1.msra.mxu0 0.0
        %2214 = vmatprep.subr.mxu0 0.0
        %2215 = vmatpush1.msra.mxu0 0.0
        %2216 = vmatprep.mubr.f32.mxu0 0.0
        %2217 = vmatmul.mubr.f32.gmra.mrb[0].mxu0 %v1600
        %v2218 = vpop.f32.mrb[0].mxu0
        %v2219 = vadd.f32 %v2074, %v2218
        %v2220 = vpop.f32.mrb[0].mxu0
        %2221 = vmatprep.mubr.f32.mxu0 0.0
        %2222 = vmatmul.mubr.f32.gmra.mrb[0].mxu0 %v1601
        %v2223 = vpop.f32.mrb[0].mxu0
        %v2224 = vadd.f32 %v2079, %v2223
        %v2225 = vpop.f32.mrb[0].mxu0
        %2226 = vmatprep.mubr.f32.mxu0 0.0
        %2227 = vmatmul.mubr.f32.gmra.mrb[0].mxu0 %v1602
        %v2228 = vpop.f32.mrb[0].mxu0
        %v2229 = vadd.f32 %v2084, %v2228
        %v2230 = vpop.f32.mrb[0].mxu0
        %2231 = vmatprep.mubr.f32.mxu0 0.0
        %2232 = vmatmul.mubr.f32.gmra.mrb[0].mxu0 %v1603
        %v2233 = vpop.f32.mrb[0].mxu0
        %v2234 = vadd.f32 %v2089, %v2233
        %v2235 = vpop.f32.mrb[0].mxu0
        %2236 = vmatprep.mubr.f32.mxu0 0.0
        %2237 = vmatmul.mubr.f32.gmra.mrb[0].mxu0 %v1604
        %v2238 = vpop.f32.mrb[0].mxu0
        %v2239 = vadd.f32 %v2094, %v2238
        %v2240 = vpop.f32.mrb[0].mxu0
        %2241 = vmatprep.mubr.f32.mxu0 0.0
        %2242 = vmatmul.mubr.f32.gmra.mrb[0].mxu0 %v1605
        %v2243 = vpop.f32.mrb[0].mxu0
        %v2244 = vadd.f32 %v2099, %v2243
        %v2245 = vpop.f32.mrb[0].mxu0
        %2246 = vmatprep.mubr.f32.mxu0 0.0
        %2247 = vmatmul.mubr.f32.gmra.mrb[0].mxu0 %v1606
        %v2248 = vpop.f32.mrb[0].mxu0
        %v2249 = vadd.f32 %v2104, %v2248
        %v2250 = vpop.f32.mrb[0].mxu0
        %2251 = vmatprep.mubr.f32.mxu0 0.0
        %2252 = vmatmul.mubr.f32.gmra.mrb[0].mxu0 %v1607
        %v2253 = vpop.f32.mrb[0].mxu0
        %v2254 = vadd.f32 %v2109, %v2253
        %v2255 = vpop.f32.mrb[0].mxu0
        %2256 = vmatprep.mubr.f32.mxu0 0.0
        %2257 = vmatmul.mubr.f32.gmra.mrb[0].mxu0 %v1608
        %v2258 = vpop.f32.mrb[0].mxu0
        %v2259 = vadd.f32 %v2114, %v2258
        %v2260 = vpop.f32.mrb[0].mxu0
        %2261 = vmatprep.mubr.f32.mxu0 0.0
        %2262 = vmatmul.mubr.f32.gmra.mrb[0].mxu0 %v1609
        %v2263 = vpop.f32.mrb[0].mxu0
        %v2264 = vadd.f32 %v2119, %v2263
        %v2265 = vpop.f32.mrb[0].mxu0
        %2266 = vmatprep.mubr.f32.mxu0 0.0
        %2267 = vmatmul.mubr.f32.gmra.mrb[0].mxu0 %v1610
        %v2268 = vpop.f32.mrb[0].mxu0
        %v2269 = vadd.f32 %v2124, %v2268
        %v2270 = vpop.f32.mrb[0].mxu0
        %2271 = vmatprep.mubr.f32.mxu0 0.0
        %2272 = vmatmul.mubr.f32.gmra.mrb[0].mxu0 %v1611
        %v2273 = vpop.f32.mrb[0].mxu0
        %v2274 = vadd.f32 %v2129, %v2273
        %v2275 = vpop.f32.mrb[0].mxu0
        %2276 = vmatprep.mubr.f32.mxu0 0.0
        %2277 = vmatmul.mubr.f32.gmra.mrb[0].mxu0 %v1612
        %v2278 = vpop.f32.mrb[0].mxu0
        %v2279 = vadd.f32 %v2134, %v2278
        %v2280 = vpop.f32.mrb[0].mxu0
        %2281 = vmatprep.mubr.f32.mxu0 0.0
        %2282 = vmatmul.mubr.f32.gmra.mrb[0].mxu0 %v1613
        %v2283 = vpop.f32.mrb[0].mxu0
        %v2284 = vadd.f32 %v2139, %v2283
        %v2285 = vpop.f32.mrb[0].mxu0
        %2286 = vmatprep.mubr.f32.mxu0 0.0
        %2287 = vmatmul.mubr.f32.gmra.mrb[0].mxu0 %v1614
        %v2288 = vpop.f32.mrb[0].mxu0
        %v2289 = vadd.f32 %v2144, %v2288
        %v2290 = vpop.f32.mrb[0].mxu0
        %2291 = vmatprep.mubr.f32.mxu0 0.0
        %2292 = vmatmul.mubr.f32.gmra.mrb[0].mxu0 %v1615
        %v2293 = vpop.f32.mrb[0].mxu0
        %v2294 = vadd.f32 %v2149, %v2293
        %v2295 = vpop.f32.mrb[0].mxu0
        %2296 = vdwg.mxu0
        %s2297 = scalar_lea.vmem [#allocation10], 768
        %v2298 = vld [vmem:[%s2297] sm:$0xff]
        %v2299 = vld [vmem:[%s2297 + $0x8] sm:$0xff]
        %v2300 = vld [vmem:[%s2297 + $0x10] sm:$0xff]
        %v2301 = vld [vmem:[%s2297 + $0x18] sm:$0xff]
        %v2302 = vld [vmem:[%s2297 + $0x20] sm:$0xff]
        %v2303 = vld [vmem:[%s2297 + $0x28] sm:$0xff]
        %v2304 = vld [vmem:[%s2297 + $0x30] sm:$0xff]
        %v2305 = vld [vmem:[%s2297 + $0x38] sm:$0xff]
        %v2306 = vld [vmem:[%s2297 + $0x40] sm:$0xff]
        %v2307 = vld [vmem:[%s2297 + $0x48] sm:$0xff]
        %v2308 = vld [vmem:[%s2297 + $0x50] sm:$0xff]
        %v2309 = vld [vmem:[%s2297 + $0x58] sm:$0xff]
        %v2310 = vld [vmem:[%s2297 + $0x60] sm:$0xff]
        %v2311 = vld [vmem:[%s2297 + $0x68] sm:$0xff]
        %v2312 = vld [vmem:[%s2297 + $0x70] sm:$0xff]
        %v2313 = vld [vmem:[%s2297 + $0x78] sm:$0xff]
        %v2314 = vld [vmem:[%s2297 + $0x80] sm:$0xff]
        %v2315 = vld [vmem:[%s2297 + $0x88] sm:$0xff]
        %v2316 = vld [vmem:[%s2297 + $0x90] sm:$0xff]
        %v2317 = vld [vmem:[%s2297 + $0x98] sm:$0xff]
        %v2318 = vld [vmem:[%s2297 + $0xa0] sm:$0xff]
        %v2319 = vld [vmem:[%s2297 + $0xa8] sm:$0xff]
        %v2320 = vld [vmem:[%s2297 + $0xb0] sm:$0xff]
        %v2321 = vld [vmem:[%s2297 + $0xb8] sm:$0xff]
        %v2322 = vld [vmem:[%s2297 + $0xc0] sm:$0xff]
        %v2323 = vld [vmem:[%s2297 + $0xc8] sm:$0xff]
        %v2324 = vld [vmem:[%s2297 + $0xd0] sm:$0xff]
        %v2325 = vld [vmem:[%s2297 + $0xd8] sm:$0xff]
        %v2326 = vld [vmem:[%s2297 + $0xe0] sm:$0xff]
        %v2327 = vld [vmem:[%s2297 + $0xe8] sm:$0xff]
        %v2328 = vld [vmem:[%s2297 + $0xf0] sm:$0xff]
        %v2329 = vld [vmem:[%s2297 + $0xf8] sm:$0xff]
        %v2330 = vld [vmem:[%s2297 + $0x100] sm:$0xff]
        %v2331 = vld [vmem:[%s2297 + $0x108] sm:$0xff]
        %v2332 = vld [vmem:[%s2297 + $0x110] sm:$0xff]
        %v2333 = vld [vmem:[%s2297 + $0x118] sm:$0xff]
        %v2334 = vld [vmem:[%s2297 + $0x120] sm:$0xff]
        %v2335 = vld [vmem:[%s2297 + $0x128] sm:$0xff]
        %v2336 = vld [vmem:[%s2297 + $0x130] sm:$0xff]
        %v2337 = vld [vmem:[%s2297 + $0x138] sm:$0xff]
        %v2338 = vld [vmem:[%s2297 + $0x140] sm:$0xff]
        %v2339 = vld [vmem:[%s2297 + $0x148] sm:$0xff]
        %v2340 = vld [vmem:[%s2297 + $0x150] sm:$0xff]
        %v2341 = vld [vmem:[%s2297 + $0x158] sm:$0xff]
        %v2342 = vld [vmem:[%s2297 + $0x160] sm:$0xff]
        %v2343 = vld [vmem:[%s2297 + $0x168] sm:$0xff]
        %v2344 = vld [vmem:[%s2297 + $0x170] sm:$0xff]
        %v2345 = vld [vmem:[%s2297 + $0x178] sm:$0xff]
        %2346 = vmatprep.subr.mxu0 0.0
        %2347 = vmatpush1.msra.mxu0 %v2298
        %2348 = vmatprep.subr.mxu0 0.0
        %2349 = vmatpush1.msra.mxu0 %v2299
        %2350 = vmatprep.subr.mxu0 0.0
        %2351 = vmatpush1.msra.mxu0 %v2300
        %2352 = vmatprep.subr.mxu0 0.0
        %2353 = vmatpush1.msra.mxu0 %v2301
        %2354 = vmatprep.subr.mxu0 0.0
        %2355 = vmatpush1.msra.mxu0 %v2302
        %2356 = vmatprep.subr.mxu0 0.0
        %2357 = vmatpush1.msra.mxu0 %v2303
        %2358 = vmatprep.subr.mxu0 0.0
        %2359 = vmatpush1.msra.mxu0 %v2304
        %2360 = vmatprep.subr.mxu0 0.0
        %2361 = vmatpush1.msra.mxu0 %v2305
        %2362 = vmatprep.subr.mxu0 0.0
        %2363 = vmatpush1.msra.mxu0 %v2306
        %2364 = vmatprep.subr.mxu0 0.0
        %2365 = vmatpush1.msra.mxu0 %v2307
        %2366 = vmatprep.subr.mxu0 0.0
        %2367 = vmatpush1.msra.mxu0 %v2308
        %2368 = vmatprep.subr.mxu0 0.0
        %2369 = vmatpush1.msra.mxu0 %v2309
        %2370 = vmatprep.subr.mxu0 0.0
        %2371 = vmatpush1.msra.mxu0 %v2310
        %2372 = vmatprep.subr.mxu0 0.0
        %2373 = vmatpush1.msra.mxu0 %v2311
        %2374 = vmatprep.subr.mxu0 0.0
        %2375 = vmatpush1.msra.mxu0 %v2312
        %2376 = vmatprep.subr.mxu0 0.0
        %2377 = vmatpush1.msra.mxu0 %v2313
        %2378 = vmatprep.subr.mxu0 0.0
        %2379 = vmatpush1.msra.mxu0 %v2314
        %2380 = vmatprep.subr.mxu0 0.0
        %2381 = vmatpush1.msra.mxu0 %v2315
        %2382 = vmatprep.subr.mxu0 0.0
        %2383 = vmatpush1.msra.mxu0 %v2316
        %2384 = vmatprep.subr.mxu0 0.0
        %2385 = vmatpush1.msra.mxu0 %v2317
        %2386 = vmatprep.subr.mxu0 0.0
        %2387 = vmatpush1.msra.mxu0 %v2318
        %2388 = vmatprep.subr.mxu0 0.0
        %2389 = vmatpush1.msra.mxu0 %v2319
        %2390 = vmatprep.subr.mxu0 0.0
        %2391 = vmatpush1.msra.mxu0 %v2320
        %2392 = vmatprep.subr.mxu0 0.0
        %2393 = vmatpush1.msra.mxu0 %v2321
        %2394 = vmatprep.subr.mxu0 0.0
        %2395 = vmatpush1.msra.mxu0 %v2322
        %2396 = vmatprep.subr.mxu0 0.0
        %2397 = vmatpush1.msra.mxu0 %v2323
        %2398 = vmatprep.subr.mxu0 0.0
        %2399 = vmatpush1.msra.mxu0 %v2324
        %2400 = vmatprep.subr.mxu0 0.0
        %2401 = vmatpush1.msra.mxu0 %v2325
        %2402 = vmatprep.subr.mxu0 0.0
        %2403 = vmatpush1.msra.mxu0 %v2326
        %2404 = vmatprep.subr.mxu0 0.0
        %2405 = vmatpush1.msra.mxu0 %v2327
        %2406 = vmatprep.subr.mxu0 0.0
        %2407 = vmatpush1.msra.mxu0 %v2328
        %2408 = vmatprep.subr.mxu0 0.0
        %2409 = vmatpush1.msra.mxu0 %v2329
        %2410 = vmatprep.mubr.f32.mxu0 %v1062
        %2411 = vmatmul.mubr.f32.gmra.mrb[0].mxu0 %v1463
        %v2412 = vpop.f32.mrb[0].mxu0
        %v2413 = vadd.f32 0.0, %v2412
        %v2414 = vpop.f32.mrb[0].mxu0
        %2415 = vmatprep.mubr.f32.mxu0 %v1063
        %2416 = vmatmul.mubr.f32.gmra.mrb[0].mxu0 %v1464
        %v2417 = vpop.f32.mrb[0].mxu0
        %v2418 = vadd.f32 0.0, %v2417
        %v2419 = vpop.f32.mrb[0].mxu0
        %2420 = vmatprep.mubr.f32.mxu0 %v1064
        %2421 = vmatmul.mubr.f32.gmra.mrb[0].mxu0 %v1465
        %v2422 = vpop.f32.mrb[0].mxu0
        %v2423 = vadd.f32 0.0, %v2422
        %v2424 = vpop.f32.mrb[0].mxu0
        %2425 = vmatprep.mubr.f32.mxu0 %v1065
        %2426 = vmatmul.mubr.f32.gmra.mrb[0].mxu0 %v1466
        %v2427 = vpop.f32.mrb[0].mxu0
        %v2428 = vadd.f32 0.0, %v2427
        %v2429 = vpop.f32.mrb[0].mxu0
        %2430 = vmatprep.mubr.f32.mxu0 %v1066
        %2431 = vmatmul.mubr.f32.gmra.mrb[0].mxu0 %v1467
        %v2432 = vpop.f32.mrb[0].mxu0
        %v2433 = vadd.f32 0.0, %v2432
        %v2434 = vpop.f32.mrb[0].mxu0
        %2435 = vmatprep.mubr.f32.mxu0 %v1067
        %2436 = vmatmul.mubr.f32.gmra.mrb[0].mxu0 %v1468
        %v2437 = vpop.f32.mrb[0].mxu0
        %v2438 = vadd.f32 0.0, %v2437
        %v2439 = vpop.f32.mrb[0].mxu0
        %2440 = vmatprep.mubr.f32.mxu0 %v1068
        %2441 = vmatmul.mubr.f32.gmra.mrb[0].mxu0 %v1469
        %v2442 = vpop.f32.mrb[0].mxu0
        %v2443 = vadd.f32 0.0, %v2442
        %v2444 = vpop.f32.mrb[0].mxu0
        %2445 = vmatprep.mubr.f32.mxu0 %v1069
        %2446 = vmatmul.mubr.f32.gmra.mrb[0].mxu0 %v1470
        %v2447 = vpop.f32.mrb[0].mxu0
        %v2448 = vadd.f32 0.0, %v2447
        %v2449 = vpop.f32.mrb[0].mxu0
        %2450 = vmatprep.mubr.f32.mxu0 %v1070
        %2451 = vmatmul.mubr.f32.gmra.mrb[0].mxu0 %v1471
        %v2452 = vpop.f32.mrb[0].mxu0
        %v2453 = vadd.f32 0.0, %v2452
        %v2454 = vpop.f32.mrb[0].mxu0
        %2455 = vmatprep.mubr.f32.mxu0 %v1071
        %2456 = vmatmul.mubr.f32.gmra.mrb[0].mxu0 %v1472
        %v2457 = vpop.f32.mrb[0].mxu0
        %v2458 = vadd.f32 0.0, %v2457
        %v2459 = vpop.f32.mrb[0].mxu0
        %2460 = vmatprep.mubr.f32.mxu0 %v1072
        %2461 = vmatmul.mubr.f32.gmra.mrb[0].mxu0 %v1473
        %v2462 = vpop.f32.mrb[0].mxu0
        %v2463 = vadd.f32 0.0, %v2462
        %v2464 = vpop.f32.mrb[0].mxu0
        %2465 = vmatprep.mubr.f32.mxu0 %v1073
        %2466 = vmatmul.mubr.f32.gmra.mrb[0].mxu0 %v1474
        %v2467 = vpop.f32.mrb[0].mxu0
        %v2468 = vadd.f32 0.0, %v2467
        %v2469 = vpop.f32.mrb[0].mxu0
        %2470 = vmatprep.mubr.f32.mxu0 %v1074
        %2471 = vmatmul.mubr.f32.gmra.mrb[0].mxu0 %v1475
        %v2472 = vpop.f32.mrb[0].mxu0
        %v2473 = vadd.f32 0.0, %v2472
        %v2474 = vpop.f32.mrb[0].mxu0
        %2475 = vmatprep.mubr.f32.mxu0 %v1075
        %2476 = vmatmul.mubr.f32.gmra.mrb[0].mxu0 %v1476
        %v2477 = vpop.f32.mrb[0].mxu0
        %v2478 = vadd.f32 0.0, %v2477
        %v2479 = vpop.f32.mrb[0].mxu0
        %2480 = vmatprep.mubr.f32.mxu0 %v1076
        %2481 = vmatmul.mubr.f32.gmra.mrb[0].mxu0 %v1477
        %v2482 = vpop.f32.mrb[0].mxu0
        %v2483 = vadd.f32 0.0, %v2482
        %v2484 = vpop.f32.mrb[0].mxu0
        %2485 = vmatprep.mubr.f32.mxu0 %v1077
        %2486 = vmatmul.mubr.f32.gmra.mrb[0].mxu0 %v1478
        %v2487 = vpop.f32.mrb[0].mxu0
        %v2488 = vadd.f32 0.0, %v2487
        %v2489 = vpop.f32.mrb[0].mxu0
        %2490 = vdwg.mxu0
        %2491 = vmatprep.subr.mxu0 0.0
        %2492 = vmatpush1.msra.mxu0 %v2330
        %2493 = vmatprep.subr.mxu0 0.0
        %2494 = vmatpush1.msra.mxu0 %v2331
        %2495 = vmatprep.subr.mxu0 0.0
        %2496 = vmatpush1.msra.mxu0 %v2332
        %2497 = vmatprep.subr.mxu0 0.0
        %2498 = vmatpush1.msra.mxu0 %v2333
        %2499 = vmatprep.subr.mxu0 0.0
        %2500 = vmatpush1.msra.mxu0 %v2334
        %2501 = vmatprep.subr.mxu0 0.0
        %2502 = vmatpush1.msra.mxu0 %v2335
        %2503 = vmatprep.subr.mxu0 0.0
        %2504 = vmatpush1.msra.mxu0 %v2336
        %2505 = vmatprep.subr.mxu0 0.0
        %2506 = vmatpush1.msra.mxu0 %v2337
        %2507 = vmatprep.subr.mxu0 0.0
        %2508 = vmatpush1.msra.mxu0 %v2338
        %2509 = vmatprep.subr.mxu0 0.0
        %2510 = vmatpush1.msra.mxu0 %v2339
        %2511 = vmatprep.subr.mxu0 0.0
        %2512 = vmatpush1.msra.mxu0 %v2340
        %2513 = vmatprep.subr.mxu0 0.0
        %2514 = vmatpush1.msra.mxu0 %v2341
        %2515 = vmatprep.subr.mxu0 0.0
        %2516 = vmatpush1.msra.mxu0 %v2342
        %2517 = vmatprep.subr.mxu0 0.0
        %2518 = vmatpush1.msra.mxu0 %v2343
        %2519 = vmatprep.subr.mxu0 0.0
        %2520 = vmatpush1.msra.mxu0 %v2344
        %2521 = vmatprep.subr.mxu0 0.0
        %2522 = vmatpush1.msra.mxu0 %v2345
        %2523 = vmatprep.subr.mxu0 0.0
        %2524 = vmatpush1.msra.mxu0 0.0
        %2525 = vmatprep.subr.mxu0 0.0
        %2526 = vmatpush1.msra.mxu0 0.0
        %2527 = vmatprep.subr.mxu0 0.0
        %2528 = vmatpush1.msra.mxu0 0.0
        %2529 = vmatprep.subr.mxu0 0.0
        %2530 = vmatpush1.msra.mxu0 0.0
        %2531 = vmatprep.subr.mxu0 0.0
        %2532 = vmatpush1.msra.mxu0 0.0
        %2533 = vmatprep.subr.mxu0 0.0
        %2534 = vmatpush1.msra.mxu0 0.0
        %2535 = vmatprep.subr.mxu0 0.0
        %2536 = vmatpush1.msra.mxu0 0.0
        %2537 = vmatprep.subr.mxu0 0.0
        %2538 = vmatpush1.msra.mxu0 0.0
        %2539 = vmatprep.subr.mxu0 0.0
        %2540 = vmatpush1.msra.mxu0 0.0
        %2541 = vmatprep.subr.mxu0 0.0
        %2542 = vmatpush1.msra.mxu0 0.0
        %2543 = vmatprep.subr.mxu0 0.0
        %2544 = vmatpush1.msra.mxu0 0.0
        %2545 = vmatprep.subr.mxu0 0.0
        %2546 = vmatpush1.msra.mxu0 0.0
        %2547 = vmatprep.subr.mxu0 0.0
        %2548 = vmatpush1.msra.mxu0 0.0
        %2549 = vmatprep.subr.mxu0 0.0
        %2550 = vmatpush1.msra.mxu0 0.0
        %2551 = vmatprep.subr.mxu0 0.0
        %2552 = vmatpush1.msra.mxu0 0.0
        %2553 = vmatprep.subr.mxu0 0.0
        %2554 = vmatpush1.msra.mxu0 0.0
        %2555 = vmatprep.mubr.f32.mxu0 0.0
        %2556 = vmatmul.mubr.f32.gmra.mrb[0].mxu0 %v1604
        %v2557 = vpop.f32.mrb[0].mxu0
        %v2558 = vadd.f32 %v2413, %v2557
        %v2559 = vpop.f32.mrb[0].mxu0
        %2560 = vmatprep.mubr.f32.mxu0 0.0
        %2561 = vmatmul.mubr.f32.gmra.mrb[0].mxu0 %v1605
        %v2562 = vpop.f32.mrb[0].mxu0
        %v2563 = vadd.f32 %v2418, %v2562
        %v2564 = vpop.f32.mrb[0].mxu0
        %2565 = vmatprep.mubr.f32.mxu0 0.0
        %2566 = vmatmul.mubr.f32.gmra.mrb[0].mxu0 %v1606
        %v2567 = vpop.f32.mrb[0].mxu0
        %v2568 = vadd.f32 %v2423, %v2567
        %v2569 = vpop.f32.mrb[0].mxu0
        %2570 = vmatprep.mubr.f32.mxu0 0.0
        %2571 = vmatmul.mubr.f32.gmra.mrb[0].mxu0 %v1607
        %v2572 = vpop.f32.mrb[0].mxu0
        %v2573 = vadd.f32 %v2428, %v2572
        %v2574 = vpop.f32.mrb[0].mxu0
        %2575 = vmatprep.mubr.f32.mxu0 0.0
        %2576 = vmatmul.mubr.f32.gmra.mrb[0].mxu0 %v1608
        %v2577 = vpop.f32.mrb[0].mxu0
        %v2578 = vadd.f32 %v2433, %v2577
        %v2579 = vpop.f32.mrb[0].mxu0
        %2580 = vmatprep.mubr.f32.mxu0 0.0
        %2581 = vmatmul.mubr.f32.gmra.mrb[0].mxu0 %v1609
        %v2582 = vpop.f32.mrb[0].mxu0
        %v2583 = vadd.f32 %v2438, %v2582
        %v2584 = vpop.f32.mrb[0].mxu0
        %2585 = vmatprep.mubr.f32.mxu0 0.0
        %2586 = vmatmul.mubr.f32.gmra.mrb[0].mxu0 %v1610
        %v2587 = vpop.f32.mrb[0].mxu0
        %v2588 = vadd.f32 %v2443, %v2587
        %v2589 = vpop.f32.mrb[0].mxu0
        %2590 = vmatprep.mubr.f32.mxu0 0.0
        %2591 = vmatmul.mubr.f32.gmra.mrb[0].mxu0 %v1611
        %v2592 = vpop.f32.mrb[0].mxu0
        %v2593 = vadd.f32 %v2448, %v2592
        %v2594 = vpop.f32.mrb[0].mxu0
        %2595 = vmatprep.mubr.f32.mxu0 0.0
        %2596 = vmatmul.mubr.f32.gmra.mrb[0].mxu0 %v1612
        %v2597 = vpop.f32.mrb[0].mxu0
        %v2598 = vadd.f32 %v2453, %v2597
        %v2599 = vpop.f32.mrb[0].mxu0
        %2600 = vmatprep.mubr.f32.mxu0 0.0
        %2601 = vmatmul.mubr.f32.gmra.mrb[0].mxu0 %v1613
        %v2602 = vpop.f32.mrb[0].mxu0
        %v2603 = vadd.f32 %v2458, %v2602
        %v2604 = vpop.f32.mrb[0].mxu0
        %2605 = vmatprep.mubr.f32.mxu0 0.0
        %2606 = vmatmul.mubr.f32.gmra.mrb[0].mxu0 %v1614
        %v2607 = vpop.f32.mrb[0].mxu0
        %v2608 = vadd.f32 %v2463, %v2607
        %v2609 = vpop.f32.mrb[0].mxu0
        %2610 = vmatprep.mubr.f32.mxu0 0.0
        %2611 = vmatmul.mubr.f32.gmra.mrb[0].mxu0 %v1615
        %v2612 = vpop.f32.mrb[0].mxu0
        %v2613 = vadd.f32 %v2468, %v2612
        %v2614 = vpop.f32.mrb[0].mxu0
        %2615 = vmatprep.mubr.f32.mxu0 0.0
        %2616 = vmatmul.mubr.f32.gmra.mrb[0].mxu0 %v1616
        %v2617 = vpop.f32.mrb[0].mxu0
        %v2618 = vadd.f32 %v2473, %v2617
        %v2619 = vpop.f32.mrb[0].mxu0
        %2620 = vmatprep.mubr.f32.mxu0 0.0
        %2621 = vmatmul.mubr.f32.gmra.mrb[0].mxu0 %v1617
        %v2622 = vpop.f32.mrb[0].mxu0
        %v2623 = vadd.f32 %v2478, %v2622
        %v2624 = vpop.f32.mrb[0].mxu0
        %2625 = vmatprep.mubr.f32.mxu0 0.0
        %2626 = vmatmul.mubr.f32.gmra.mrb[0].mxu0 %v1618
        %v2627 = vpop.f32.mrb[0].mxu0
        %v2628 = vadd.f32 %v2483, %v2627
        %v2629 = vpop.f32.mrb[0].mxu0
        %2630 = vmatprep.mubr.f32.mxu0 0.0
        %2631 = vmatmul.mubr.f32.gmra.mrb[0].mxu0 %v1619
        %v2632 = vpop.f32.mrb[0].mxu0
        %v2633 = vadd.f32 %v2488, %v2632
        %v2634 = vpop.f32.mrb[0].mxu0
        %2635 = vdwg.mxu0
        %v2636 = vadd.f32 %v2219, %v2558
        %v2637 = vadd.f32 %v2224, %v2563
        %v2638 = vadd.f32 %v2229, %v2568
        %v2639 = vadd.f32 %v2234, %v2573
        %v2640 = vadd.f32 %v2239, %v2578
        %v2641 = vadd.f32 %v2244, %v2583
        %v2642 = vadd.f32 %v2249, %v2588
        %v2643 = vadd.f32 %v2254, %v2593
        %v2644 = vadd.f32 %v2259, %v2598
        %v2645 = vadd.f32 %v2264, %v2603
        %v2646 = vadd.f32 %v2269, %v2608
        %v2647 = vadd.f32 %v2274, %v2613
        %v2648 = vadd.f32 %v2279, %v2618
        %v2649 = vadd.f32 %v2284, %v2623
        %v2650 = vadd.f32 %v2289, %v2628
        %v2651 = vadd.f32 %v2294, %v2633
        %v2652 = vld [vmem:[%s7] sm:$0x1]
        %v2654 = vlaneseq
        %v2655 = vshrl.u32 %v2654, 7
        %v2656 = vsub.s32 0, %v2655
        %v2657 = vrot.slane %v2652, %v2656
        %v2659 = vmul.f32 %v2636, %v2657
        %v2660 = vmul.f32 %v2637, %v2657
        %v2661 = vmul.f32 %v2638, %v2657
        %v2662 = vmul.f32 %v2639, %v2657
        %v2663 = vmul.f32 %v2640, %v2657
        %v2664 = vmul.f32 %v2641, %v2657
        %v2665 = vmul.f32 %v2642, %v2657
        %v2666 = vmul.f32 %v2643, %v2657
        %v2667 = vmul.f32 %v2644, %v2657
        %v2668 = vmul.f32 %v2645, %v2657
        %v2669 = vmul.f32 %v2646, %v2657
        %v2670 = vmul.f32 %v2647, %v2657
        %v2671 = vmul.f32 %v2648, %v2657
        %v2672 = vmul.f32 %v2649, %v2657
        %v2673 = vmul.f32 %v2650, %v2657
        %v2674 = vmul.f32 %v2651, %v2657
        %v2675 = vld [vmem:[%s8] sm:$0x1]
        %v2677 = vlaneseq
        %v2678 = vshrl.u32 %v2677, 7
        %v2679 = vsub.s32 0, %v2678
        %v2680 = vrot.slane %v2675, %v2679
        %v2682 = vadd.f32 %v2659, %v2680
        %v2683 = vadd.f32 %v2660, %v2680
        %v2684 = vadd.f32 %v2661, %v2680
        %v2685 = vadd.f32 %v2662, %v2680
        %v2686 = vadd.f32 %v2663, %v2680
        %v2687 = vadd.f32 %v2664, %v2680
        %v2688 = vadd.f32 %v2665, %v2680
        %v2689 = vadd.f32 %v2666, %v2680
        %v2690 = vadd.f32 %v2667, %v2680
        %v2691 = vadd.f32 %v2668, %v2680
        %v2692 = vadd.f32 %v2669, %v2680
        %v2693 = vadd.f32 %v2670, %v2680
        %v2694 = vadd.f32 %v2671, %v2680
        %v2695 = vadd.f32 %v2672, %v2680
        %v2696 = vadd.f32 %v2673, %v2680
        %v2697 = vadd.f32 %v2674, %v2680
        %v2698 = vmax.f32 %v2682, 0.0
        %v2699 = vmax.f32 %v2683, 0.0
        %v2700 = vmax.f32 %v2684, 0.0
        %v2701 = vmax.f32 %v2685, 0.0
        %v2702 = vmax.f32 %v2686, 0.0
        %v2703 = vmax.f32 %v2687, 0.0
        %v2704 = vmax.f32 %v2688, 0.0
        %v2705 = vmax.f32 %v2689, 0.0
        %v2706 = vmax.f32 %v2690, 0.0
        %v2707 = vmax.f32 %v2691, 0.0
        %v2708 = vmax.f32 %v2692, 0.0
        %v2709 = vmax.f32 %v2693, 0.0
        %v2710 = vmax.f32 %v2694, 0.0
        %v2711 = vmax.f32 %v2695, 0.0
        %v2712 = vmax.f32 %v2696, 0.0
        %v2713 = vmax.f32 %v2697, 0.0
        %v2714 = vld [vmem:[#allocation11] sm:$0xff]
        %v2715 = vld [vmem:[#allocation11 + $0x8] sm:$0xff]
        %v2716 = vld [vmem:[#allocation11 + $0x10] sm:$0xff]
        %v2717 = vld [vmem:[#allocation11 + $0x18] sm:$0xff]
        %v2718 = vld [vmem:[#allocation11 + $0x20] sm:$0xff]
        %v2719 = vld [vmem:[#allocation11 + $0x28] sm:$0xff]
        %v2720 = vld [vmem:[#allocation11 + $0x30] sm:$0xff]
        %v2721 = vld [vmem:[#allocation11 + $0x38] sm:$0xff]
        %v2722 = vld [vmem:[#allocation11 + $0x40] sm:$0xff]
        %v2723 = vld [vmem:[#allocation11 + $0x48] sm:$0xff]
        %v2724 = vld [vmem:[#allocation11 + $0x50] sm:$0xff]
        %v2725 = vld [vmem:[#allocation11 + $0x58] sm:$0xff]
        %v2726 = vld [vmem:[#allocation11 + $0x60] sm:$0xff]
        %v2727 = vld [vmem:[#allocation11 + $0x68] sm:$0xff]
        %v2728 = vld [vmem:[#allocation11 + $0x70] sm:$0xff]
        %v2729 = vld [vmem:[#allocation11 + $0x78] sm:$0xff]
        %2730 = vmatprep.subr.mxu0 0.0
        %2731 = vmatpush1.msra.mxu0 %v2714
        %2732 = vmatprep.subr.mxu0 0.0
        %2733 = vmatpush1.msra.mxu0 %v2715
        %2734 = vmatprep.subr.mxu0 0.0
        %2735 = vmatpush1.msra.mxu0 %v2716
        %2736 = vmatprep.subr.mxu0 0.0
        %2737 = vmatpush1.msra.mxu0 %v2717
        %2738 = vmatprep.subr.mxu0 0.0
        %2739 = vmatpush1.msra.mxu0 %v2718
        %2740 = vmatprep.subr.mxu0 0.0
        %2741 = vmatpush1.msra.mxu0 %v2719
        %2742 = vmatprep.subr.mxu0 0.0
        %2743 = vmatpush1.msra.mxu0 %v2720
        %2744 = vmatprep.subr.mxu0 0.0
        %2745 = vmatpush1.msra.mxu0 %v2721
        %2746 = vmatprep.subr.mxu0 0.0
        %2747 = vmatpush1.msra.mxu0 %v2722
        %2748 = vmatprep.subr.mxu0 0.0
        %2749 = vmatpush1.msra.mxu0 %v2723
        %2750 = vmatprep.subr.mxu0 0.0
        %2751 = vmatpush1.msra.mxu0 %v2724
        %2752 = vmatprep.subr.mxu0 0.0
        %2753 = vmatpush1.msra.mxu0 %v2725
        %2754 = vmatprep.subr.mxu0 0.0
        %2755 = vmatpush1.msra.mxu0 %v2726
        %2756 = vmatprep.subr.mxu0 0.0
        %2757 = vmatpush1.msra.mxu0 %v2727
        %2758 = vmatprep.subr.mxu0 0.0
        %2759 = vmatpush1.msra.mxu0 %v2728
        %2760 = vmatprep.subr.mxu0 0.0
        %2761 = vmatpush1.msra.mxu0 %v2729
        %2762 = vmatprep.subr.mxu0 0.0
        %2763 = vmatpush1.msra.mxu0 0.0
        %2764 = vmatprep.subr.mxu0 0.0
        %2765 = vmatpush1.msra.mxu0 0.0
        %2766 = vmatprep.subr.mxu0 0.0
        %2767 = vmatpush1.msra.mxu0 0.0
        %2768 = vmatprep.subr.mxu0 0.0
        %2769 = vmatpush1.msra.mxu0 0.0
        %2770 = vmatprep.subr.mxu0 0.0
        %2771 = vmatpush1.msra.mxu0 0.0
        %2772 = vmatprep.subr.mxu0 0.0
        %2773 = vmatpush1.msra.mxu0 0.0
        %2774 = vmatprep.subr.mxu0 0.0
        %2775 = vmatpush1.msra.mxu0 0.0
        %2776 = vmatprep.subr.mxu0 0.0
        %2777 = vmatpush1.msra.mxu0 0.0
        %2778 = vmatprep.subr.mxu0 0.0
        %2779 = vmatpush1.msra.mxu0 0.0
        %2780 = vmatprep.subr.mxu0 0.0
        %2781 = vmatpush1.msra.mxu0 0.0
        %2782 = vmatprep.subr.mxu0 0.0
        %2783 = vmatpush1.msra.mxu0 0.0
        %2784 = vmatprep.subr.mxu0 0.0
        %2785 = vmatpush1.msra.mxu0 0.0
        %2786 = vmatprep.subr.mxu0 0.0
        %2787 = vmatpush1.msra.mxu0 0.0
        %2788 = vmatprep.subr.mxu0 0.0
        %2789 = vmatpush1.msra.mxu0 0.0
        %2790 = vmatprep.subr.mxu0 0.0
        %2791 = vmatpush1.msra.mxu0 0.0
        %2792 = vmatprep.subr.mxu0 0.0
        %2793 = vmatpush1.msra.mxu0 0.0
        %2794 = vmatprep.mubr.f32.mxu0 0.0
        %2795 = vmatmul.mubr.f32.gmra.mrb[0].mxu0 %v2698
        %v2796 = vpop.f32.mrb[0].mxu0
        %v2797 = vadd.f32 0.0, %v2796
        %v2798 = vpop.f32.mrb[0].mxu0
        %2799 = vmatprep.mubr.f32.mxu0 0.0
        %2800 = vmatmul.mubr.f32.gmra.mrb[0].mxu0 %v2699
        %v2801 = vpop.f32.mrb[0].mxu0
        %v2802 = vadd.f32 0.0, %v2801
        %v2803 = vpop.f32.mrb[0].mxu0
        %2804 = vmatprep.mubr.f32.mxu0 0.0
        %2805 = vmatmul.mubr.f32.gmra.mrb[0].mxu0 %v2700
        %v2806 = vpop.f32.mrb[0].mxu0
        %v2807 = vadd.f32 0.0, %v2806
        %v2808 = vpop.f32.mrb[0].mxu0
        %2809 = vmatprep.mubr.f32.mxu0 0.0
        %2810 = vmatmul.mubr.f32.gmra.mrb[0].mxu0 %v2701
        %v2811 = vpop.f32.mrb[0].mxu0
        %v2812 = vadd.f32 0.0, %v2811
        %v2813 = vpop.f32.mrb[0].mxu0
        %2814 = vmatprep.mubr.f32.mxu0 0.0
        %2815 = vmatmul.mubr.f32.gmra.mrb[0].mxu0 %v2702
        %v2816 = vpop.f32.mrb[0].mxu0
        %v2817 = vadd.f32 0.0, %v2816
        %v2818 = vpop.f32.mrb[0].mxu0
        %2819 = vmatprep.mubr.f32.mxu0 0.0
        %2820 = vmatmul.mubr.f32.gmra.mrb[0].mxu0 %v2703
        %v2821 = vpop.f32.mrb[0].mxu0
        %v2822 = vadd.f32 0.0, %v2821
        %v2823 = vpop.f32.mrb[0].mxu0
        %2824 = vmatprep.mubr.f32.mxu0 0.0
        %2825 = vmatmul.mubr.f32.gmra.mrb[0].mxu0 %v2704
        %v2826 = vpop.f32.mrb[0].mxu0
        %v2827 = vadd.f32 0.0, %v2826
        %v2828 = vpop.f32.mrb[0].mxu0
        %2829 = vmatprep.mubr.f32.mxu0 0.0
        %2830 = vmatmul.mubr.f32.gmra.mrb[0].mxu0 %v2705
        %v2831 = vpop.f32.mrb[0].mxu0
        %v2832 = vadd.f32 0.0, %v2831
        %v2833 = vpop.f32.mrb[0].mxu0
        %2834 = vmatprep.mubr.f32.mxu0 0.0
        %2835 = vmatmul.mubr.f32.gmra.mrb[0].mxu0 %v2706
        %v2836 = vpop.f32.mrb[0].mxu0
        %v2837 = vadd.f32 0.0, %v2836
        %v2838 = vpop.f32.mrb[0].mxu0
        %2839 = vmatprep.mubr.f32.mxu0 0.0
        %2840 = vmatmul.mubr.f32.gmra.mrb[0].mxu0 %v2707
        %v2841 = vpop.f32.mrb[0].mxu0
        %v2842 = vadd.f32 0.0, %v2841
        %v2843 = vpop.f32.mrb[0].mxu0
        %2844 = vmatprep.mubr.f32.mxu0 0.0
        %2845 = vmatmul.mubr.f32.gmra.mrb[0].mxu0 %v2708
        %v2846 = vpop.f32.mrb[0].mxu0
        %v2847 = vadd.f32 0.0, %v2846
        %v2848 = vpop.f32.mrb[0].mxu0
        %2849 = vmatprep.mubr.f32.mxu0 0.0
        %2850 = vmatmul.mubr.f32.gmra.mrb[0].mxu0 %v2709
        %v2851 = vpop.f32.mrb[0].mxu0
        %v2852 = vadd.f32 0.0, %v2851
        %v2853 = vpop.f32.mrb[0].mxu0
        %2854 = vmatprep.mubr.f32.mxu0 0.0
        %2855 = vmatmul.mubr.f32.gmra.mrb[0].mxu0 %v2710
        %v2856 = vpop.f32.mrb[0].mxu0
        %v2857 = vadd.f32 0.0, %v2856
        %v2858 = vpop.f32.mrb[0].mxu0
        %2859 = vmatprep.mubr.f32.mxu0 0.0
        %2860 = vmatmul.mubr.f32.gmra.mrb[0].mxu0 %v2711
        %v2861 = vpop.f32.mrb[0].mxu0
        %v2862 = vadd.f32 0.0, %v2861
        %v2863 = vpop.f32.mrb[0].mxu0
        %2864 = vmatprep.mubr.f32.mxu0 0.0
        %2865 = vmatmul.mubr.f32.gmra.mrb[0].mxu0 %v2712
        %v2866 = vpop.f32.mrb[0].mxu0
        %v2867 = vadd.f32 0.0, %v2866
        %v2868 = vpop.f32.mrb[0].mxu0
        %2869 = vmatprep.mubr.f32.mxu0 0.0
        %2870 = vmatmul.mubr.f32.gmra.mrb[0].mxu0 %v2713
        %v2871 = vpop.f32.mrb[0].mxu0
        %v2872 = vadd.f32 0.0, %v2871
        %v2873 = vpop.f32.mrb[0].mxu0
        %2874 = vdwg.mxu0
        %v2875 = vld [vmem:[%s10] sm:$0x1]
        %v2877 = vlaneseq
        %v2878 = vshrl.u32 %v2877, 7
        %v2879 = vsub.s32 0, %v2878
        %v2880 = vrot.slane %v2875, %v2879
        %v2882 = vmul.f32 %v2797, %v2880
        %v2883 = vmul.f32 %v2802, %v2880
        %v2884 = vmul.f32 %v2807, %v2880
        %v2885 = vmul.f32 %v2812, %v2880
        %v2886 = vmul.f32 %v2817, %v2880
        %v2887 = vmul.f32 %v2822, %v2880
        %v2888 = vmul.f32 %v2827, %v2880
        %v2889 = vmul.f32 %v2832, %v2880
        %v2890 = vmul.f32 %v2837, %v2880
        %v2891 = vmul.f32 %v2842, %v2880
        %v2892 = vmul.f32 %v2847, %v2880
        %v2893 = vmul.f32 %v2852, %v2880
        %v2894 = vmul.f32 %v2857, %v2880
        %v2895 = vmul.f32 %v2862, %v2880
        %v2896 = vmul.f32 %v2867, %v2880
        %v2897 = vmul.f32 %v2872, %v2880
        %v2898 = vld [vmem:[%s11] sm:$0x1]
        %v2900 = vlaneseq
        %v2901 = vshrl.u32 %v2900, 7
        %v2902 = vsub.s32 0, %v2901
        %v2903 = vrot.slane %v2898, %v2902
        %v2905 = vadd.f32 %v2882, %v2903
        %v2906 = vadd.f32 %v2883, %v2903
        %v2907 = vadd.f32 %v2884, %v2903
        %v2908 = vadd.f32 %v2885, %v2903
        %v2909 = vadd.f32 %v2886, %v2903
        %v2910 = vadd.f32 %v2887, %v2903
        %v2911 = vadd.f32 %v2888, %v2903
        %v2912 = vadd.f32 %v2889, %v2903
        %v2913 = vadd.f32 %v2890, %v2903
        %v2914 = vadd.f32 %v2891, %v2903
        %v2915 = vadd.f32 %v2892, %v2903
        %v2916 = vadd.f32 %v2893, %v2903
        %v2917 = vadd.f32 %v2894, %v2903
        %v2918 = vadd.f32 %v2895, %v2903
        %v2919 = vadd.f32 %v2896, %v2903
        %v2920 = vadd.f32 %v2897, %v2903
        %v2921 = vadd.f32 %v2905, %v616
        %v2922 = vadd.f32 %v2906, %v617
        %v2923 = vadd.f32 %v2907, %v618
        %v2924 = vadd.f32 %v2908, %v619
        %v2925 = vadd.f32 %v2909, %v620
        %v2926 = vadd.f32 %v2910, %v621
        %v2927 = vadd.f32 %v2911, %v622
        %v2928 = vadd.f32 %v2912, %v623
        %v2929 = vadd.f32 %v2913, %v624
        %v2930 = vadd.f32 %v2914, %v625
        %v2931 = vadd.f32 %v2915, %v626
        %v2932 = vadd.f32 %v2916, %v627
        %v2933 = vadd.f32 %v2917, %v628
        %v2934 = vadd.f32 %v2918, %v629
        %v2935 = vadd.f32 %v2919, %v630
        %v2936 = vadd.f32 %v2920, %v631
        %v2937 = vmax.f32 %v2921, 0.0
        %v2938 = vmax.f32 %v2922, 0.0
        %v2939 = vmax.f32 %v2923, 0.0
        %v2940 = vmax.f32 %v2924, 0.0
        %v2941 = vmax.f32 %v2925, 0.0
        %v2942 = vmax.f32 %v2926, 0.0
        %v2943 = vmax.f32 %v2927, 0.0
        %v2944 = vmax.f32 %v2928, 0.0
        %v2945 = vmax.f32 %v2929, 0.0
        %v2946 = vmax.f32 %v2930, 0.0
        %v2947 = vmax.f32 %v2931, 0.0
        %v2948 = vmax.f32 %v2932, 0.0
        %v2949 = vmax.f32 %v2933, 0.0
        %v2950 = vmax.f32 %v2934, 0.0
        %v2951 = vmax.f32 %v2935, 0.0
        %v2952 = vmax.f32 %v2936, 0.0
        %2953 = vst [vmem:[%s603] sm:$0xff] %v2937
        %2954 = vst [vmem:[%s603 + $0x8] sm:$0xff] %v2938
        %2955 = vst [vmem:[%s603 + $0x10] sm:$0xff] %v2939
        %2956 = vst [vmem:[%s603 + $0x18] sm:$0xff] %v2940
        %2957 = vst [vmem:[%s603 + $0x20] sm:$0xff] %v2941
        %2958 = vst [vmem:[%s603 + $0x28] sm:$0xff] %v2942
        %2959 = vst [vmem:[%s603 + $0x30] sm:$0xff] %v2943
        %2960 = vst [vmem:[%s603 + $0x38] sm:$0xff] %v2944
        %2961 = vst [vmem:[%s603 + $0x40] sm:$0xff] %v2945
        %2962 = vst [vmem:[%s603 + $0x48] sm:$0xff] %v2946
        %2963 = vst [vmem:[%s603 + $0x50] sm:$0xff] %v2947
        %2964 = vst [vmem:[%s603 + $0x58] sm:$0xff] %v2948
        %2965 = vst [vmem:[%s603 + $0x60] sm:$0xff] %v2949
        %2966 = vst [vmem:[%s603 + $0x68] sm:$0xff] %v2950
        %2967 = vst [vmem:[%s603 + $0x70] sm:$0xff] %v2951
        %2968 = vst [vmem:[%s603 + $0x78] sm:$0xff] %v2952
        %s2969 = sand.u32 %s345, 1
        %s2970 = scalar_lea.sflag [#allocation4], %s2969
        %s2971 = sand.u32 %s345, 1
        %s2972 = smul.addr %s2971, 128
        %s2973 = scalar_lea.vmem [#allocation13], %s2972
        // Predicated region
        $region93: #{tpu_custom_call.1} parent=67 // pred_check
          %p2974 = pneg %p355
        $region94: #{tpu_custom_call.1} parent=67 // pred_check_branch
          %2976 = sbr.rel (%p2974) target = $region96
        $region95: #{tpu_custom_call.1} parent=67 // pred_region
          %s2977 = smul.u32 8, %s39
          %s2979 = ssub.s32 2048, 2048
          %2980 = vsyncadd %s2970, %s2979
          %s2981 = smul.addr %s2977, 2
          %s2982 = smul.addr %s38, 32
          %s2983 = sadd.s32 %s2981, %s2982
          %s2984 = smul.addr %s2983, 128
          %s2985 = scalar_lea.hbm %s12, %s2984
          %s2986 = sshll.u32 %s2973, 4
          %s2987 = int_to_ptr.vmem [resolvable:$true] %s2986
          %2992 = dma.vmem_to_hbm [thread:$0]  %s2987, 2048, %s2985, %s2970, 128, 128, 8
        $region96: #{tpu_custom_call.1} parent=67 // pred_fallthru
          _
      $region68: #{tpu_custom_call.1} parent=5 // pred_fallthru
        _
      %p2993 = scmp.le.s32.totalorder 2, %s29
      // Predicated region
      $region97: #{tpu_custom_call.1} parent=5 // pred_check
        %p2994 = pneg %p2993
      $region98: #{tpu_custom_call.1} parent=5 // pred_check_branch
        %2996 = sbr.rel (%p2994) target = $region100
      $region99: #{tpu_custom_call.1} parent=5 // pred_region
        %s2997 = ssub.s32 %s29, 2
        // Predicated region
        $region101: #{tpu_custom_call.1} parent=99 // pred_check
          %p2998 = pneg %p361
        $region102: #{tpu_custom_call.1} parent=99 // pred_check_branch
          %3000 = sbr.rel (%p2998) target = $region104
        $region103: #{tpu_custom_call.1} parent=99 // pred_region
          %s3001 = sand.u32 %s346, 1
          %s3002 = scalar_lea.sflag [#allocation4], %s3001
          %s3003 = sand.u32 %s346, 1
          %s3004 = smul.addr %s3003, 128
          %s3005 = scalar_lea.vmem [#allocation13], %s3004
          %3006 = dma.done %s3002, 2048
        $region104: #{tpu_custom_call.1} parent=99 // pred_fallthru
          _
      $region100: #{tpu_custom_call.1} parent=5 // pred_fallthru
        _
    $region6: #{tpu_custom_call.1} parent=1 // loop_footer
      %s33 = sadd.s32 1, %s29
    $region7: #{tpu_custom_call.1} parent=1 // loop_footer_branch
      %28 = sbr.rel target = $region3
    $region8: #{tpu_custom_call.1} parent=1 // loop_exit
      _
    %3007 = vsyncpa [#allocation3], 1
    %s3008 = scalar_lea.sflag [#allocation3], 1
    %3009 = vsyncpa %s3008, 1
    %3010 = vsyncpa [#allocation6], 1
    %s3011 = scalar_lea.sflag [#allocation6], 1
    %3012 = vsyncpa %s3011, 1
    %3013 = vsyncpa [#allocation9], 1
    %3014 = vsyncpa [#allocation12], 1
    %3015 = vsyncpa [#allocation4], 1
    %s3016 = scalar_lea.sflag [#allocation4], 1
    %3017 = vsyncpa %s3016, 1

</llo_original>
